<compile_context>
chip_gen: v6e
topology: v6e:2x2x1
jax: 0.10.0
libtpu: 0.0.40
codegen_flags: <defaults>
</compile_context>

<pallas_src>
import functools

import jax
import jax.numpy as jnp
import numpy as np
from jax.experimental import pallas as pl
from jax.experimental.pallas import tpu as pltpu


def _round_up(x, m):
    return ((x + m - 1) // m) * m


# ---------------------------------------------------------------------------
# Pallas kernel: fused act(x @ w + b), single full-K block, bf16 in / f32 acc.
# ---------------------------------------------------------------------------
def _gemm_bias_act_kernel(x_ref, w_ref, b_ref, o_ref, *, activation):
    y = jnp.dot(x_ref[...], w_ref[...], preferred_element_type=jnp.float32)
    y = y + b_ref[...]
    if activation == "relu":
        y = jnp.maximum(y, 0.0)
    elif activation == "tanh":
        y = jnp.tanh(y)
    o_ref[...] = y.astype(o_ref.dtype)


def gemm_bias_act(x, w, b, activation="none", out_dtype=jnp.float32,
                  tm_max=1024, tn_max=512):
    """act(x @ w + b).

    x: (M, K)  any float dtype (cast to bf16 here).
    w: (Kp, Np) pre-padded bf16 weight (Kp >= K, Kp/Np multiples of 128).
    b: (1, Np)  float32 bias.
    Returns (M, Np) in `out_dtype`; caller crops the valid N columns.
    """
    M, K = x.shape
    Kp, Np = w.shape

    xp = x.astype(jnp.bfloat16)
    Mp = _round_up(max(M, 16), 16)          # bf16 sublane packing
    if Mp > tm_max:
        tm = tm_max
        Mp = _round_up(Mp, tm)
    else:
        tm = Mp                             # single full-M block
    if (Mp, Kp) != (M, K):
        xp = jnp.pad(xp, ((0, Mp - M), (0, Kp - K)))

    tn = Np if Np <= tn_max else (tn_max if Np % tn_max == 0 else 128)

    out = pl.pallas_call(
        functools.partial(_gemm_bias_act_kernel, activation=activation),
        out_shape=jax.ShapeDtypeStruct((Mp, Np), out_dtype),
        grid_spec=pltpu.PrefetchScalarGridSpec(
            num_scalar_prefetch=0,
            grid=(Mp // tm, Np // tn),
            in_specs=[
                pl.BlockSpec((tm, Kp), lambda i, j: (i, 0)),   # full-K
                pl.BlockSpec((Kp, tn), lambda i, j: (0, j)),
                pl.BlockSpec((1, tn), lambda i, j: (0, j)),
            ],
            out_specs=pl.BlockSpec((tm, tn), lambda i, j: (i, j)),
        ),
        compiler_params=pltpu.CompilerParams(
            dimension_semantics=("parallel", "parallel")),
    )(xp, w, b)
    return out[:M]


# ---------------------------------------------------------------------------
# One-time weight preprocessing (hoisted out of the forward path).
# ---------------------------------------------------------------------------
def _prep_gemm_weights(wmat_np, b_np):
    """Pad a (K, N) weight + (N,) bias to lane/sublane friendly shapes."""
    K, N = wmat_np.shape
    Kp = _round_up(K, 128)
    Np = _round_up(N, 128)
    wp = np.zeros((Kp, Np), np.float32)
    wp[:K, :N] = wmat_np
    bp = np.zeros((1, Np), np.float32)
    bp[0, :N] = np.asarray(b_np)
    return jnp.asarray(wp, jnp.bfloat16), jnp.asarray(bp, jnp.float32)


def _prep_deconv(w_np, b_np, stride):
    """Fold a ConvTranspose2d weight (Cin, Cout, k, k) into the phase-fused
    sub-pixel GEMM matrix of shape (pt*pt*Cin, s*s*Cout) (then pad/bf16)."""
    Cin, Cout, k, _ = w_np.shape
    s = stride
    pt = -(-k // s)                         # taps per phase per dim
    wfull = np.zeros((pt, pt, Cin, s, s, Cout), np.float32)
    for a in range(pt):
        for bb in range(pt):
            for ry in range(s):
                for rx in range(s):
                    ky = ry + s * (pt - 1 - a)
                    kx = rx + s * (pt - 1 - bb)
                    if ky < k and kx < k:
                        wfull[a, bb, :, ry, rx, :] = w_np[:, :, ky, kx]
    wmat = wfull.reshape(pt * pt * Cin, s * s * Cout)
    bvec = np.tile(np.asarray(b_np), s * s)
    return _prep_gemm_weights(wmat, bvec)


def preprocess_params(params, image_size):
    """Hoist all flip/fold/pad/bf16-cast work; done exactly once."""
    p = {k: np.asarray(v) for k, v in params.items()}
    arrs = {}
    arrs["fc_w"], arrs["fc_b"] = _prep_gemm_weights(p["fc_w"].T, p["fc_b"])
    cfg = []
    for i, (k, s) in enumerate(((3, 2), (4, 2), (4, 2), (4, 2)), start=1):
        w, b = p[f"w{i}"], p[f"b{i}"]
        arrs[f"w{i}"], arrs[f"b{i}"] = _prep_deconv(w, b, s)
        cfg.append((k, s, int(w.shape[1])))   # (kernel, stride, Cout) — static
    return arrs, tuple(cfg)


# ---------------------------------------------------------------------------
# ConvTranspose2d(stride=s, padding=0) as a phase-fused sub-pixel GEMM.
# ---------------------------------------------------------------------------
def _deconv_subpixel(h, wmat, bvec, k, s, cout, activation, out_dtype):
    """h: (B, H, W, Cin) channel-last  ->  (B, Ho, Wo, cout) channel-last."""
    B, H, W, Cin = h.shape
    pt = -(-k // s)
    Ho = (H - 1) * s + k
    Wo = (W - 1) * s + k
    U = -(-Ho // s)
    V = -(-Wo // s)
    hp = jnp.pad(h, ((0, 0), (pt - 1, U - H), (pt - 1, V - W), (0, 0)))
    # im2col over the UN-dilated input: only pt x pt taps, no stride zeros.
    cols = [hp[:, a:a + U, bb:bb + V, :] for a in range(pt) for bb in range(pt)]
    patches = jnp.concatenate(cols, axis=-1).reshape(B * U * V, pt * pt * Cin)

    y = gemm_bias_act(patches, wmat, bvec, activation=activation,
                      out_dtype=out_dtype)
    y = y[:, :s * s * cout].reshape(B, U, V, s, s, cout)
    # interleave the s*s output phases (depth-to-space) and crop.
    y = y.transpose(0, 1, 3, 2, 4, 5).reshape(B, U * s, V * s, cout)
    return y[:, :Ho, :Wo, :]


# ---------------------------------------------------------------------------
# Generator forward (Pallas) and pure-JAX reference.
# ---------------------------------------------------------------------------
def generator_forward(arrs, x, *, cfg, image_size):
    B = x.shape[0]
    s0 = image_size // 16
    fc_out = 256 * s0 * s0
    h = gemm_bias_act(x, arrs["fc_w"], arrs["fc_b"], activation="none",
                      out_dtype=jnp.bfloat16)[:, :fc_out]
    # PyTorch .view(B, 256, s, s); then work channel-last from here on.
    h = h.reshape(B, 256, s0, s0).transpose(0, 2, 3, 1)
    acts = ("relu", "relu", "relu", "tanh")
    n_layers = len(cfg)
    for i, ((k, s, cout), act) in enumerate(zip(cfg, acts), start=1):
        is_last = i == n_layers
        out_dtype = jnp.float32 if is_last else jnp.bfloat16
        h = _deconv_subpixel(h, arrs[f"w{i}"], arrs[f"b{i}"], k, s, cout,
                             act, out_dtype)
    return h.transpose(0, 3, 1, 2)          # back to NCHW like the module


def _ref_conv_transpose(x, w, b, stride):
    k = w.shape[2]
    wc = jnp.flip(w, (2, 3)).transpose(1, 0, 2, 3)
    out = jax.lax.conv_general_dilated(
        x, wc, window_strides=(1, 1),
        padding=[(k - 1, k - 1), (k - 1, k - 1)],
        lhs_dilation=(stride, stride),
        dimension_numbers=("NCHW", "OIHW", "NCHW"))
    return out + b[None, :, None, None]


def generator_reference(params, x, image_size):
    h = x @ params["fc_w"].T + params["fc_b"]
    B = x.shape[0]
    s = image_size // 16
    h = h.reshape(B, 256, s, s)
    h = jax.nn.relu(_ref_conv_transpose(h, params["w1"], params["b1"], 2))
    h = jax.nn.relu(_ref_conv_transpose(h, params["w2"], params["b2"], 2))
    h = jax.nn.relu(_ref_conv_transpose(h, params["w3"], params["b3"], 2))
    h = jnp.tanh(_ref_conv_transpose(h, params["w4"], params["b4"], 2))
    return h


def init_params(key, input_dim, output_channels, image_size):
    s = image_size // 16
    fc_out = 256 * s * s

    def uni(k, shape, fan_in):
        bound = 1.0 / np.sqrt(fan_in)
        return jax.random.uniform(k, shape, jnp.float32, -bound, bound)

    ks = jax.random.split(key, 10)
    return {
        "fc_w": uni(ks[0], (fc_out, input_dim), input_dim),
        "fc_b": uni(ks[1], (fc_out,), input_dim),
        "w1": uni(ks[2], (256, 128, 3, 3), 256 * 9),
        "b1": uni(ks[3], (128,), 256 * 9),
        "w2": uni(ks[4], (128, 64, 4, 4), 128 * 16),
        "b2": uni(ks[5], (64,), 128 * 16),
        "w3": uni(ks[6], (64, 32, 4, 4), 64 * 16),
        "b3": uni(ks[7], (32,), 64 * 16),
        "w4": uni(ks[8], (32, output_channels, 4, 4), 32 * 16),
        "b4": uni(ks[9], (output_channels,), 32 * 16),
    }


if __name__ == "__main__":
    input_dim = 32
    output_channels = 3
    image_size = 16
    batch = 2

    key = jax.random.PRNGKey(0)
    pkey, xkey = jax.random.split(key)
    params = init_params(pkey, input_dim, output_channels, image_size)
    x = jax.random.normal(xkey, (batch, input_dim), dtype=jnp.float32)

    # One-time weight preprocessing, then a fully-jitted forward.
    arrs, cfg = preprocess_params(params, image_size)
    fwd = jax.jit(functools.partial(generator_forward, cfg=cfg,
                                    image_size=image_size))

    out = jax.block_until_ready(fwd(arrs, x))
    ref = jax.block_until_ready(generator_reference(params, x, image_size))

    assert out.shape == (batch, output_channels, 38, 38), out.shape
    np.testing.assert_allclose(np.asarray(out), np.asarray(ref),
                               rtol=2e-2, atol=2e-2)
    print("KERNEL_OK")
</pallas_src>

<mosaic_0001>
module attributes {stable_mosaic.version = 11 : i64} {
  func.func @_gemm_bias_act_kernel(%arg0: i32, %arg1: i32, %arg2: memref<16x128xbf16, #tpu.memory_space<vmem>>, %arg3: memref<128x256xbf16, #tpu.memory_space<vmem>>, %arg4: memref<1x256xf32, #tpu.memory_space<vmem>>, %arg5: memref<16x256xbf16, #tpu.memory_space<vmem>>) attributes {dimension_semantics = [#tpu.dimension_semantics<parallel>, #tpu.dimension_semantics<parallel>], iteration_bounds = array<i64: 1, 1>, scalar_prefetch = 0 : i64, scratch_operands = 0 : i64, tpu.core_type = #tpu.core_type<tc>, window_params = [{transform_indices = @transform_0, window_bounds = array<i64: 16, 128>}, {transform_indices = @transform_1, window_bounds = array<i64: 128, 256>}, {transform_indices = @transform_2, window_bounds = array<i64: 1, 256>}, {transform_indices = @transform_3, window_bounds = array<i64: 16, 256>}]} {
    %c0 = arith.constant 0 : index
    %c0_0 = arith.constant 0 : index
    %0 = vector.load %arg2[%c0, %c0_0] : memref<16x128xbf16, #tpu.memory_space<vmem>>, vector<16x128xbf16>
    %c0_1 = arith.constant 0 : index
    %c0_2 = arith.constant 0 : index
    %1 = vector.load %arg3[%c0_1, %c0_2] : memref<128x256xbf16, #tpu.memory_space<vmem>>, vector<128x256xbf16>
    %cst = arith.constant dense<0.000000e+00> : vector<16x256xf32>
    %2 = tpu.matmul %0, %1, %cst {dimension_numbers = #tpu.dot_dimension_numbers<[1], [0], [0], [1], [0, 0, 1, 1], [], []>} : vector<16x128xbf16>, vector<128x256xbf16>, vector<16x256xf32> -> vector<16x256xf32>
    %c0_3 = arith.constant 0 : index
    %c0_4 = arith.constant 0 : index
    %3 = vector.load %arg4[%c0_3, %c0_4] : memref<1x256xf32, #tpu.memory_space<vmem>>, vector<1x256xf32>
    %4 = vector.broadcast %3 : vector<1x256xf32> to vector<16x256xf32>
    %5 = arith.addf %2, %4 : vector<16x256xf32>
    %6 = arith.truncf %5 : vector<16x256xf32> to vector<16x256xbf16>
    %c0_5 = arith.constant 0 : index
    %c0_6 = arith.constant 0 : index
    %7 = vector.load %arg5[%c0_5, %c0_6] : memref<16x256xbf16, #tpu.memory_space<vmem>>, vector<16x256xbf16>
    tpu.vector_store %arg5[%c0_5, %c0_6], %6 {strides = array<i32>} : memref<16x256xbf16, #tpu.memory_space<vmem>>, vector<16x256xbf16>,
    return
  }
  func.func @transform_0(%arg0: i32, %arg1: i32) -> (i32, i32) {
    %c0_i32 = arith.constant 0 : i32
    %c0_i32_0 = arith.constant 0 : i32
    return %arg0, %c0_i32 : i32, i32
  }
  func.func @transform_1(%arg0: i32, %arg1: i32) -> (i32, i32) {
    %c0_i32 = arith.constant 0 : i32
    %c0_i32_0 = arith.constant 0 : i32
    return %c0_i32, %arg1 : i32, i32
  }
  func.func @transform_2(%arg0: i32, %arg1: i32) -> (i32, i32) {
    %c0_i32 = arith.constant 0 : i32
    %c0_i32_0 = arith.constant 0 : i32
    return %c0_i32, %arg1 : i32, i32
  }
  func.func @transform_3(%arg0: i32, %arg1: i32) -> (i32, i32) {
    %c0_i32 = arith.constant 0 : i32
    return %arg0, %arg1 : i32, i32
  }
}

module attributes {stable_mosaic.version = 11 : i64} {
  func.func @_gemm_bias_act_kernel(%arg0: i32, %arg1: i32, %arg2: memref<16x1024xbf16, #tpu.memory_space<vmem>>, %arg3: memref<1024x512xbf16, #tpu.memory_space<vmem>>, %arg4: memref<1x512xf32, #tpu.memory_space<vmem>>, %arg5: memref<16x512xbf16, #tpu.memory_space<vmem>>) attributes {dimension_semantics = [#tpu.dimension_semantics<parallel>, #tpu.dimension_semantics<parallel>], iteration_bounds = array<i64: 1, 1>, scalar_prefetch = 0 : i64, scratch_operands = 0 : i64, tpu.core_type = #tpu.core_type<tc>, window_params = [{transform_indices = @transform_0, window_bounds = array<i64: 16, 1024>}, {transform_indices = @transform_1, window_bounds = array<i64: 1024, 512>}, {transform_indices = @transform_2, window_bounds = array<i64: 1, 512>}, {transform_indices = @transform_3, window_bounds = array<i64: 16, 512>}]} {
    %c0 = arith.constant 0 : index
    %c0_0 = arith.constant 0 : index
    %0 = vector.load %arg2[%c0, %c0_0] : memref<16x1024xbf16, #tpu.memory_space<vmem>>, vector<16x1024xbf16>
    %c0_1 = arith.constant 0 : index
    %c0_2 = arith.constant 0 : index
    %1 = vector.load %arg3[%c0_1, %c0_2] : memref<1024x512xbf16, #tpu.memory_space<vmem>>, vector<1024x512xbf16>
    %cst = arith.constant dense<0.000000e+00> : vector<16x512xf32>
    %2 = tpu.matmul %0, %1, %cst {dimension_numbers = #tpu.dot_dimension_numbers<[1], [0], [0], [1], [0, 0, 1, 1], [], []>} : vector<16x1024xbf16>, vector<1024x512xbf16>, vector<16x512xf32> -> vector<16x512xf32>
    %c0_3 = arith.constant 0 : index
    %c0_4 = arith.constant 0 : index
    %3 = vector.load %arg4[%c0_3, %c0_4] : memref<1x512xf32, #tpu.memory_space<vmem>>, vector<1x512xf32>
    %4 = vector.broadcast %3 : vector<1x512xf32> to vector<16x512xf32>
    %5 = arith.addf %2, %4 : vector<16x512xf32>
    %cst_5 = arith.constant 0.000000e+00 : f32
    %6 = vector.broadcast %cst_5 : f32 to vector<16x512xf32>
    %7 = arith.maximumf %5, %6 : vector<16x512xf32>
    %8 = arith.truncf %7 : vector<16x512xf32> to vector<16x512xbf16>
    %c0_6 = arith.constant 0 : index
    %c0_7 = arith.constant 0 : index
    %9 = vector.load %arg5[%c0_6, %c0_7] : memref<16x512xbf16, #tpu.memory_space<vmem>>, vector<16x512xbf16>
    tpu.vector_store %arg5[%c0_6, %c0_7], %8 {strides = array<i32>} : memref<16x512xbf16, #tpu.memory_space<vmem>>, vector<16x512xbf16>,
    return
  }
  func.func @transform_0(%arg0: i32, %arg1: i32) -> (i32, i32) {
    %c0_i32 = arith.constant 0 : i32
    %c0_i32_0 = arith.constant 0 : i32
    return %arg0, %c0_i32 : i32, i32
  }
  func.func @transform_1(%arg0: i32, %arg1: i32) -> (i32, i32) {
    %c0_i32 = arith.constant 0 : i32
    %c0_i32_0 = arith.constant 0 : i32
    return %c0_i32, %arg1 : i32, i32
  }
  func.func @transform_2(%arg0: i32, %arg1: i32) -> (i32, i32) {
    %c0_i32 = arith.constant 0 : i32
    %c0_i32_0 = arith.constant 0 : i32
    return %c0_i32, %arg1 : i32, i32
  }
  func.func @transform_3(%arg0: i32, %arg1: i32) -> (i32, i32) {
    %c0_i32 = arith.constant 0 : i32
    return %arg0, %arg1 : i32, i32
  }
}

module attributes {stable_mosaic.version = 11 : i64} {
  func.func @_gemm_bias_act_kernel(%arg0: i32, %arg1: i32, %arg2: memref<32x512xbf16, #tpu.memory_space<vmem>>, %arg3: memref<512x256xbf16, #tpu.memory_space<vmem>>, %arg4: memref<1x256xf32, #tpu.memory_space<vmem>>, %arg5: memref<32x256xbf16, #tpu.memory_space<vmem>>) attributes {dimension_semantics = [#tpu.dimension_semantics<parallel>, #tpu.dimension_semantics<parallel>], iteration_bounds = array<i64: 1, 1>, scalar_prefetch = 0 : i64, scratch_operands = 0 : i64, tpu.core_type = #tpu.core_type<tc>, window_params = [{transform_indices = @transform_0, window_bounds = array<i64: 32, 512>}, {transform_indices = @transform_1, window_bounds = array<i64: 512, 256>}, {transform_indices = @transform_2, window_bounds = array<i64: 1, 256>}, {transform_indices = @transform_3, window_bounds = array<i64: 32, 256>}]} {
    %c0 = arith.constant 0 : index
    %c0_0 = arith.constant 0 : index
    %0 = vector.load %arg2[%c0, %c0_0] : memref<32x512xbf16, #tpu.memory_space<vmem>>, vector<32x512xbf16>
    %c0_1 = arith.constant 0 : index
    %c0_2 = arith.constant 0 : index
    %1 = vector.load %arg3[%c0_1, %c0_2] : memref<512x256xbf16, #tpu.memory_space<vmem>>, vector<512x256xbf16>
    %cst = arith.constant dense<0.000000e+00> : vector<32x256xf32>
    %2 = tpu.matmul %0, %1, %cst {dimension_numbers = #tpu.dot_dimension_numbers<[1], [0], [0], [1], [0, 0, 1, 1], [], []>} : vector<32x512xbf16>, vector<512x256xbf16>, vector<32x256xf32> -> vector<32x256xf32>
    %c0_3 = arith.constant 0 : index
    %c0_4 = arith.constant 0 : index
    %3 = vector.load %arg4[%c0_3, %c0_4] : memref<1x256xf32, #tpu.memory_space<vmem>>, vector<1x256xf32>
    %4 = vector.broadcast %3 : vector<1x256xf32> to vector<32x256xf32>
    %5 = arith.addf %2, %4 : vector<32x256xf32>
    %cst_5 = arith.constant 0.000000e+00 : f32
    %6 = vector.broadcast %cst_5 : f32 to vector<32x256xf32>
    %7 = arith.maximumf %5, %6 : vector<32x256xf32>
    %8 = arith.truncf %7 : vector<32x256xf32> to vector<32x256xbf16>
    %c0_6 = arith.constant 0 : index
    %c0_7 = arith.constant 0 : index
    %9 = vector.load %arg5[%c0_6, %c0_7] : memref<32x256xbf16, #tpu.memory_space<vmem>>, vector<32x256xbf16>
    tpu.vector_store %arg5[%c0_6, %c0_7], %8 {strides = array<i32>} : memref<32x256xbf16, #tpu.memory_space<vmem>>, vector<32x256xbf16>,
    return
  }
  func.func @transform_0(%arg0: i32, %arg1: i32) -> (i32, i32) {
    %c0_i32 = arith.constant 0 : i32
    %c0_i32_0 = arith.constant 0 : i32
    return %arg0, %c0_i32 : i32, i32
  }
  func.func @transform_1(%arg0: i32, %arg1: i32) -> (i32, i32) {
    %c0_i32 = arith.constant 0 : i32
    %c0_i32_0 = arith.constant 0 : i32
    return %c0_i32, %arg1 : i32, i32
  }
  func.func @transform_2(%arg0: i32, %arg1: i32) -> (i32, i32) {
    %c0_i32 = arith.constant 0 : i32
    %c0_i32_0 = arith.constant 0 : i32
    return %c0_i32, %arg1 : i32, i32
  }
  func.func @transform_3(%arg0: i32, %arg1: i32) -> (i32, i32) {
    %c0_i32 = arith.constant 0 : i32
    return %arg0, %arg1 : i32, i32
  }
}

module attributes {stable_mosaic.version = 11 : i64} {
  func.func @_gemm_bias_act_kernel(%arg0: i32, %arg1: i32, %arg2: memref<176x256xbf16, #tpu.memory_space<vmem>>, %arg3: memref<256x128xbf16, #tpu.memory_space<vmem>>, %arg4: memref<1x128xf32, #tpu.memory_space<vmem>>, %arg5: memref<176x128xbf16, #tpu.memory_space<vmem>>) attributes {dimension_semantics = [#tpu.dimension_semantics<parallel>, #tpu.dimension_semantics<parallel>], iteration_bounds = array<i64: 1, 1>, scalar_prefetch = 0 : i64, scratch_operands = 0 : i64, tpu.core_type = #tpu.core_type<tc>, window_params = [{transform_indices = @transform_0, window_bounds = array<i64: 176, 256>}, {transform_indices = @transform_1, window_bounds = array<i64: 256, 128>}, {transform_indices = @transform_2, window_bounds = array<i64: 1, 128>}, {transform_indices = @transform_3, window_bounds = array<i64: 176, 128>}]} {
    %c0 = arith.constant 0 : index
    %c0_0 = arith.constant 0 : index
    %0 = vector.load %arg2[%c0, %c0_0] : memref<176x256xbf16, #tpu.memory_space<vmem>>, vector<176x256xbf16>
    %c0_1 = arith.constant 0 : index
    %c0_2 = arith.constant 0 : index
    %1 = vector.load %arg3[%c0_1, %c0_2] : memref<256x128xbf16, #tpu.memory_space<vmem>>, vector<256x128xbf16>
    %cst = arith.constant dense<0.000000e+00> : vector<176x128xf32>
    %2 = tpu.matmul %0, %1, %cst {dimension_numbers = #tpu.dot_dimension_numbers<[1], [0], [0], [1], [0, 0, 1, 1], [], []>} : vector<176x256xbf16>, vector<256x128xbf16>, vector<176x128xf32> -> vector<176x128xf32>
    %c0_3 = arith.constant 0 : index
    %c0_4 = arith.constant 0 : index
    %3 = vector.load %arg4[%c0_3, %c0_4] : memref<1x128xf32, #tpu.memory_space<vmem>>, vector<1x128xf32>
    %4 = vector.broadcast %3 : vector<1x128xf32> to vector<176x128xf32>
    %5 = arith.addf %2, %4 : vector<176x128xf32>
    %cst_5 = arith.constant 0.000000e+00 : f32
    %6 = vector.broadcast %cst_5 : f32 to vector<176x128xf32>
    %7 = arith.maximumf %5, %6 : vector<176x128xf32>
    %8 = arith.truncf %7 : vector<176x128xf32> to vector<176x128xbf16>
    %c0_6 = arith.constant 0 : index
    %c0_7 = arith.constant 0 : index
    %9 = vector.load %arg5[%c0_6, %c0_7] : memref<176x128xbf16, #tpu.memory_space<vmem>>, vector<176x128xbf16>
    tpu.vector_store %arg5[%c0_6, %c0_7], %8 {strides = array<i32>} : memref<176x128xbf16, #tpu.memory_space<vmem>>, vector<176x128xbf16>,
    return
  }
  func.func @transform_0(%arg0: i32, %arg1: i32) -> (i32, i32) {
    %c0_i32 = arith.constant 0 : i32
    %c0_i32_0 = arith.constant 0 : i32
    return %arg0, %c0_i32 : i32, i32
  }
  func.func @transform_1(%arg0: i32, %arg1: i32) -> (i32, i32) {
    %c0_i32 = arith.constant 0 : i32
    %c0_i32_0 = arith.constant 0 : i32
    return %c0_i32, %arg1 : i32, i32
  }
  func.func @transform_2(%arg0: i32, %arg1: i32) -> (i32, i32) {
    %c0_i32 = arith.constant 0 : i32
    %c0_i32_0 = arith.constant 0 : i32
    return %c0_i32, %arg1 : i32, i32
  }
  func.func @transform_3(%arg0: i32, %arg1: i32) -> (i32, i32) {
    %c0_i32 = arith.constant 0 : i32
    return %arg0, %arg1 : i32, i32
  }
}

module attributes {stable_mosaic.version = 11 : i64} {
  func.func @_gemm_bias_act_kernel(%arg0: i32, %arg1: i32, %arg2: memref<736x128xbf16, #tpu.memory_space<vmem>>, %arg3: memref<128x128xbf16, #tpu.memory_space<vmem>>, %arg4: memref<1x128xf32, #tpu.memory_space<vmem>>, %arg5: memref<736x128xf32, #tpu.memory_space<vmem>>) attributes {dimension_semantics = [#tpu.dimension_semantics<parallel>, #tpu.dimension_semantics<parallel>], iteration_bounds = array<i64: 1, 1>, scalar_prefetch = 0 : i64, scratch_operands = 0 : i64, tpu.core_type = #tpu.core_type<tc>, window_params = [{transform_indices = @transform_0, window_bounds = array<i64: 736, 128>}, {transform_indices = @transform_1, window_bounds = array<i64: 128, 128>}, {transform_indices = @transform_2, window_bounds = array<i64: 1, 128>}, {transform_indices = @transform_3, window_bounds = array<i64: 736, 128>}]} {
    %c0 = arith.constant 0 : index
    %c0_0 = arith.constant 0 : index
    %0 = vector.load %arg2[%c0, %c0_0] : memref<736x128xbf16, #tpu.memory_space<vmem>>, vector<736x128xbf16>
    %c0_1 = arith.constant 0 : index
    %c0_2 = arith.constant 0 : index
    %1 = vector.load %arg3[%c0_1, %c0_2] : memref<128x128xbf16, #tpu.memory_space<vmem>>, vector<128x128xbf16>
    %cst = arith.constant dense<0.000000e+00> : vector<736x128xf32>
    %2 = tpu.matmul %0, %1, %cst {dimension_numbers = #tpu.dot_dimension_numbers<[1], [0], [0], [1], [0, 0, 1, 1], [], []>} : vector<736x128xbf16>, vector<128x128xbf16>, vector<736x128xf32> -> vector<736x128xf32>
    %c0_3 = arith.constant 0 : index
    %c0_4 = arith.constant 0 : index
    %3 = vector.load %arg4[%c0_3, %c0_4] : memref<1x128xf32, #tpu.memory_space<vmem>>, vector<1x128xf32>
    %4 = vector.broadcast %3 : vector<1x128xf32> to vector<736x128xf32>
    %5 = arith.addf %2, %4 : vector<736x128xf32>
    %6 = math.tanh %5 : vector<736x128xf32>
    %c0_5 = arith.constant 0 : index
    %c0_6 = arith.constant 0 : index
    %7 = vector.load %arg5[%c0_5, %c0_6] : memref<736x128xf32, #tpu.memory_space<vmem>>, vector<736x128xf32>
    tpu.vector_store %arg5[%c0_5, %c0_6], %6 {strides = array<i32>} : memref<736x128xf32, #tpu.memory_space<vmem>>, vector<736x128xf32>,
    return
  }
  func.func @transform_0(%arg0: i32, %arg1: i32) -> (i32, i32) {
    %c0_i32 = arith.constant 0 : i32
    %c0_i32_0 = arith.constant 0 : i32
    return %arg0, %c0_i32 : i32, i32
  }
  func.func @transform_1(%arg0: i32, %arg1: i32) -> (i32, i32) {
    %c0_i32 = arith.constant 0 : i32
    %c0_i32_0 = arith.constant 0 : i32
    return %c0_i32, %arg1 : i32, i32
  }
  func.func @transform_2(%arg0: i32, %arg1: i32) -> (i32, i32) {
    %c0_i32 = arith.constant 0 : i32
    %c0_i32_0 = arith.constant 0 : i32
    return %c0_i32, %arg1 : i32, i32
  }
  func.func @transform_3(%arg0: i32, %arg1: i32) -> (i32, i32) {
    %c0_i32 = arith.constant 0 : i32
    return %arg0, %arg1 : i32, i32
  }
}

</mosaic_0001>

<llo_original>
// kernel: generator_forward.5
$region0: #{generator_forward.5}
  #allocation0 [shape = 'u32[]', space=smem, size = 0x4, offset = 0x4, fixed_abs, tag = 'smem constant byte address 0x4 - core index']
  #allocation1 [shape = 'u32[144,128]{1,0:T(1,128)}', space=vmem, size = 0x12000, scoped, tag = 'internal scratch']
  %s0 = inlined_call_operand.vmem [shape: bf16[16,128], index: 0, kind: input, shape index: {}]
  %s1 = inlined_call_operand.hbm [shape: bf16[128,256], index: 1, kind: input, shape index: {}]
  %s2 = inlined_call_operand.hbm [shape: f32[1,256], index: 2, kind: input, shape index: {}]
  %s3 = inlined_call_operand.vmem [shape: bf16[16,256], index: 3, kind: output, shape index: {}]
  %s4 = sld [smem:[#allocation0]]
  $region30: #{generator_forward.5} parent=0
    _
  %s6 = ssub.s32 1, %s4
  %s7 = scalar_select 0, %s6, %s4
  $region1: #{generator_forward.5} parent=0
    #allocation2 [shape = 'u8[65536]{0}', space=vmem, size = 0x10000, scoped, tag = 'input window, operand 1, single buffered']
    #allocation3 [shape = 's32[1]{0}', space=sflag, size = 0x4, scoped, tag = 'scoped memory for generator_forward.5']
    #allocation4 [shape = 'u8[1024]{0}', space=vmem, size = 0x400, scoped, tag = 'input window, operand 2, single buffered']
    #allocation5 [shape = 's32[1]{0}', space=sflag, size = 0x4, scoped, tag = 'scoped memory for generator_forward.5']
    %8 = vsyncpa [#allocation3], 0
    %9 = vsyncpa [#allocation5], 0
    // Predicated region
    $region2: #{generator_forward.5} parent=1 // pred_check
      _
    $region3: #{generator_forward.5} parent=1 // pred_check_branch
      %11 = sbr.rel (0) target = $region5
    $region4: #{generator_forward.5} parent=1 // pred_region
      _
    $region5: #{generator_forward.5} parent=1 // pred_fallthru
      _
    // Predicated region
    $region6: #{generator_forward.5} parent=1 // pred_check
      _
    $region7: #{generator_forward.5} parent=1 // pred_check_branch
      %13 = sbr.rel (0) target = $region9
    $region8: #{generator_forward.5} parent=1 // pred_region
      %s15 = ssub.s32 2048, 2048
      %16 = vsyncadd [#allocation3], %s15
      %s17 = sshll.u32 [#allocation2], 4
      %s18 = int_to_ptr.vmem [resolvable:$true] %s17
      %23 = dma.hbm_to_vmem [thread:$0]  %s1, 2048, %s18, [#allocation3], 128, 128, 8
    $region9: #{generator_forward.5} parent=1 // pred_fallthru
      _
    // Predicated region
    $region10: #{generator_forward.5} parent=1 // pred_check
      _
    $region11: #{generator_forward.5} parent=1 // pred_check_branch
      %25 = sbr.rel (0) target = $region13
    $region12: #{generator_forward.5} parent=1 // pred_region
      %s27 = ssub.s32 32, 32
      %28 = vsyncadd [#allocation5], %s27
      %s30 = sshll.u32 [#allocation4], 4
      %s31 = int_to_ptr.vmem [resolvable:$true] %s30
      %33 = dma.hbm_to_vmem [thread:$0]  %s2, 32, %s31, [#allocation5]
    $region13: #{generator_forward.5} parent=1 // pred_fallthru
      _
    // Predicated region
    $region14: #{generator_forward.5} parent=1 // pred_check
      _
    $region15: #{generator_forward.5} parent=1 // pred_check_branch
      %35 = sbr.rel (0) target = $region17
    $region16: #{generator_forward.5} parent=1 // pred_region
      %36 = dma.done [#allocation3], 2048
    $region17: #{generator_forward.5} parent=1 // pred_fallthru
      _
    // Predicated region
    $region18: #{generator_forward.5} parent=1 // pred_check
      _
    $region19: #{generator_forward.5} parent=1 // pred_check_branch
      %38 = sbr.rel (0) target = $region21
    $region20: #{generator_forward.5} parent=1 // pred_region
      %39 = dma.done [#allocation5], 32
    $region21: #{generator_forward.5} parent=1 // pred_fallthru
      _
    %v41 = vld [vmem:[%s0] sm:$0xf]
    %v42 = vld [vmem:[%s0 + $0x4] sm:$0xf]
    %v43 = vld [vmem:[#allocation2] sm:$0xff]
    %v44 = vld [vmem:[#allocation2 + $0x8] sm:$0xff]
    %v45 = vld [vmem:[#allocation2 + $0x10] sm:$0xff]
    %v46 = vld [vmem:[#allocation2 + $0x18] sm:$0xff]
    %v47 = vld [vmem:[#allocation2 + $0x20] sm:$0xff]
    %v48 = vld [vmem:[#allocation2 + $0x28] sm:$0xff]
    %v49 = vld [vmem:[#allocation2 + $0x30] sm:$0xff]
    %v50 = vld [vmem:[#allocation2 + $0x38] sm:$0xff]
    %v51 = vld [vmem:[#allocation2 + $0x40] sm:$0xff]
    %v52 = vld [vmem:[#allocation2 + $0x48] sm:$0xff]
    %v53 = vld [vmem:[#allocation2 + $0x50] sm:$0xff]
    %v54 = vld [vmem:[#allocation2 + $0x58] sm:$0xff]
    %v55 = vld [vmem:[#allocation2 + $0x60] sm:$0xff]
    %v56 = vld [vmem:[#allocation2 + $0x68] sm:$0xff]
    %v57 = vld [vmem:[#allocation2 + $0x70] sm:$0xff]
    %v58 = vld [vmem:[#allocation2 + $0x78] sm:$0xff]
    %v59 = vld [vmem:[#allocation4] sm:$0x3]
    %v61 = vlaneseq
    %v62 = vshrl.u32 %v61, 7
    %v63 = vsub.s32 0, %v62
    %v64 = vrot.slane %v59, %v63
    %v65 = vlaneseq
    %v66 = vshrl.u32 %v65, 7
    %v67 = vsub.s32 1, %v66
    %v68 = vrot.slane %v59, %v67
    %v73 = vunpack.c.l.b16 %v41
    %v74 = vunpack.c.l.b16 %v42
    %v75 = vpack.c.b16 %v74, %v73
    %v93 = vunpack.c.l.b16 %v43
    %v94 = vunpack.c.h.b16 %v43
    %v95 = vunpack.c.l.b16 %v44
    %v96 = vunpack.c.h.b16 %v44
    %v97 = vunpack.c.l.b16 %v45
    %v98 = vunpack.c.h.b16 %v45
    %v99 = vunpack.c.l.b16 %v46
    %v100 = vunpack.c.h.b16 %v46
    %v101 = vunpack.c.l.b16 %v47
    %v102 = vunpack.c.h.b16 %v47
    %v103 = vunpack.c.l.b16 %v48
    %v104 = vunpack.c.h.b16 %v48
    %v105 = vunpack.c.l.b16 %v49
    %v106 = vunpack.c.h.b16 %v49
    %v107 = vunpack.c.l.b16 %v50
    %v108 = vunpack.c.h.b16 %v50
    %v109 = vunpack.c.l.b16 %v51
    %v110 = vunpack.c.h.b16 %v51
    %v111 = vunpack.c.l.b16 %v52
    %v112 = vunpack.c.h.b16 %v52
    %v113 = vunpack.c.l.b16 %v53
    %v114 = vunpack.c.h.b16 %v53
    %v115 = vunpack.c.l.b16 %v54
    %v116 = vunpack.c.h.b16 %v54
    %v117 = vunpack.c.l.b16 %v55
    %v118 = vunpack.c.h.b16 %v55
    %v119 = vunpack.c.l.b16 %v56
    %v120 = vunpack.c.h.b16 %v56
    %v121 = vunpack.c.l.b16 %v57
    %v122 = vunpack.c.h.b16 %v57
    %v123 = vunpack.c.l.b16 %v58
    %v124 = vunpack.c.h.b16 %v58
    %v125 = vpack.c.b16 %v95, %v93
    %v126 = vpack.c.b16 %v96, %v94
    %v127 = vpack.c.b16 %v99, %v97
    %v128 = vpack.c.b16 %v100, %v98
    %v129 = vpack.c.b16 %v103, %v101
    %v130 = vpack.c.b16 %v104, %v102
    %v131 = vpack.c.b16 %v107, %v105
    %v132 = vpack.c.b16 %v108, %v106
    %v133 = vpack.c.b16 %v111, %v109
    %v134 = vpack.c.b16 %v112, %v110
    %v135 = vpack.c.b16 %v115, %v113
    %v136 = vpack.c.b16 %v116, %v114
    %v137 = vpack.c.b16 %v119, %v117
    %v138 = vpack.c.b16 %v120, %v118
    %v139 = vpack.c.b16 %v123, %v121
    %v140 = vpack.c.b16 %v124, %v122
    %157 = vmatprep.subr.bf16.mxu0 %v140
    %158 = vmatpush1.bf16.msra.mxu0 %v139
    %159 = vmatprep.subr.bf16.mxu0 %v138
    %160 = vmatpush1.bf16.msra.mxu0 %v137
    %161 = vmatprep.subr.bf16.mxu0 %v136
    %162 = vmatpush1.bf16.msra.mxu0 %v135
    %163 = vmatprep.subr.bf16.mxu0 %v134
    %164 = vmatpush1.bf16.msra.mxu0 %v133
    %165 = vmatprep.subr.bf16.mxu0 %v132
    %166 = vmatpush1.bf16.msra.mxu0 %v131
    %167 = vmatprep.subr.bf16.mxu0 %v130
    %168 = vmatpush1.bf16.msra.mxu0 %v129
    %169 = vmatprep.subr.bf16.mxu0 %v128
    %170 = vmatpush1.bf16.msra.mxu0 %v127
    %171 = vmatprep.subr.bf16.mxu0 %v126
    %172 = vmatpush1.bf16.msra.mxu0 %v125
    %173 = vmatprep.subr.bf16.mxu0 0
    %174 = vmatpush2.bf16.msra.mxu0 0
    %175 = vmatprep.subr.bf16.mxu0 0
    %176 = vmatpush2.bf16.msra.mxu0 0
    %177 = vmatprep.subr.bf16.mxu0 0
    %178 = vmatpush2.bf16.msra.mxu0 0
    %179 = vmatprep.subr.bf16.mxu0 0
    %180 = vmatpush2.bf16.msra.mxu0 0
    %181 = vmatprep.subr.bf16.mxu0 0
    %182 = vmatpush2.bf16.msra.mxu0 0
    %183 = vmatprep.subr.bf16.mxu0 0
    %184 = vmatpush2.bf16.msra.mxu0 0
    %185 = vmatprep.subr.bf16.mxu0 0
    %186 = vmatpush2.bf16.msra.mxu0 0
    %187 = vmatprep.subr.bf16.mxu0 0
    %188 = vmatpush2.bf16.msra.mxu0 0
    %189 = vmatprep.mubr.bf16.mxu0 0
    %190 = vmatmul.mubr.bf16.gmra.mxu0 %v75
    %v191 = vpop.f32.mrf.mxu0
    %v192 = vadd.f32 %v64, %v191
    %v193 = vpop.f32.mrf.mxu0
    %v194 = vadd.f32 %v68, %v193
    %v195 = vpop.f32.mrf.mxu0
    %v196 = vadd.f32 %v64, %v195
    %v197 = vpop.f32.mrf.mxu0
    %v198 = vadd.f32 %v68, %v197
    %199 = vdwg.mxu0
    %v200 = vpack.c.bf16 %v196, %v192
    %v201 = vpack.c.bf16 %v198, %v194
    %v204 = vunpack.c.l.b16 %v200
    %v205 = vunpack.c.l.b16 %v201
    %v206 = vunpack.c.h.b16 %v200
    %v207 = vunpack.c.h.b16 %v201
    %v208 = vpack.c.b16 %v205, %v204
    %v209 = vpack.c.b16 %v207, %v206
    %212 = vst [vmem:[%s3] sm:$0xff] %v208
    %213 = vst [vmem:[%s3 + $0x8] sm:$0xff] %v209
    // Predicated region
    $region22: #{generator_forward.5} parent=1 // pred_check
      _
    $region23: #{generator_forward.5} parent=1 // pred_check_branch
      %215 = sbr.rel (0) target = $region25
    $region24: #{generator_forward.5} parent=1 // pred_region
      _
    $region25: #{generator_forward.5} parent=1 // pred_fallthru
      _
    // Predicated region
    $region26: #{generator_forward.5} parent=1 // pred_check
      _
    $region27: #{generator_forward.5} parent=1 // pred_check_branch
      %217 = sbr.rel (0) target = $region29
    $region28: #{generator_forward.5} parent=1 // pred_region
      _
    $region29: #{generator_forward.5} parent=1 // pred_fallthru
      _
    %218 = vsyncpa [#allocation3], 1
    %219 = vsyncpa [#allocation5], 1

// kernel: generator_forward.7
$region0: #{generator_forward.7}
  #allocation0 [shape = 'u32[]', space=smem, size = 0x4, offset = 0x4, fixed_abs, tag = 'smem constant byte address 0x4 - core index']
  #allocation1 [shape = 'u32[144,128]{1,0:T(1,128)}', space=vmem, size = 0x12000, scoped, tag = 'internal scratch']
  %s0 = inlined_call_operand.vmem [shape: bf16[32,512], index: 0, kind: input, shape index: {}]
  %s1 = inlined_call_operand.hbm [shape: bf16[512,256], index: 1, kind: input, shape index: {}]
  %s2 = inlined_call_operand.hbm [shape: f32[1,256], index: 2, kind: input, shape index: {}]
  %s3 = inlined_call_operand.vmem [shape: bf16[32,256], index: 3, kind: output, shape index: {}]
  %s4 = sld [smem:[#allocation0]]
  $region30: #{generator_forward.7} parent=0
    _
  %s6 = ssub.s32 1, %s4
  %s7 = scalar_select 0, %s6, %s4
  $region1: #{generator_forward.7} parent=0
    #allocation2 [shape = 'u8[262144]{0}', space=vmem, size = 0x40000, scoped, tag = 'input window, operand 1, single buffered']
    #allocation3 [shape = 's32[1]{0}', space=sflag, size = 0x4, scoped, tag = 'scoped memory for generator_forward.7']
    #allocation4 [shape = 'u8[1024]{0}', space=vmem, size = 0x400, scoped, tag = 'input window, operand 2, single buffered']
    #allocation5 [shape = 's32[1]{0}', space=sflag, size = 0x4, scoped, tag = 'scoped memory for generator_forward.7']
    %8 = vsyncpa [#allocation3], 0
    %9 = vsyncpa [#allocation5], 0
    // Predicated region
    $region2: #{generator_forward.7} parent=1 // pred_check
      _
    $region3: #{generator_forward.7} parent=1 // pred_check_branch
      %11 = sbr.rel (0) target = $region5
    $region4: #{generator_forward.7} parent=1 // pred_region
      _
    $region5: #{generator_forward.7} parent=1 // pred_fallthru
      _
    // Predicated region
    $region6: #{generator_forward.7} parent=1 // pred_check
      _
    $region7: #{generator_forward.7} parent=1 // pred_check_branch
      %13 = sbr.rel (0) target = $region9
    $region8: #{generator_forward.7} parent=1 // pred_region
      %s15 = ssub.s32 8192, 8192
      %16 = vsyncadd [#allocation3], %s15
      %s17 = sshll.u32 [#allocation2], 4
      %s18 = int_to_ptr.vmem [resolvable:$true] %s17
      %23 = dma.hbm_to_vmem [thread:$0]  %s1, 8192, %s18, [#allocation3], 128, 128, 8
    $region9: #{generator_forward.7} parent=1 // pred_fallthru
      _
    // Predicated region
    $region10: #{generator_forward.7} parent=1 // pred_check
      _
    $region11: #{generator_forward.7} parent=1 // pred_check_branch
      %25 = sbr.rel (0) target = $region13
    $region12: #{generator_forward.7} parent=1 // pred_region
      %s27 = ssub.s32 32, 32
      %28 = vsyncadd [#allocation5], %s27
      %s30 = sshll.u32 [#allocation4], 4
      %s31 = int_to_ptr.vmem [resolvable:$true] %s30
      %33 = dma.hbm_to_vmem [thread:$0]  %s2, 32, %s31, [#allocation5]
    $region13: #{generator_forward.7} parent=1 // pred_fallthru
      _
    // Predicated region
    $region14: #{generator_forward.7} parent=1 // pred_check
      _
    $region15: #{generator_forward.7} parent=1 // pred_check_branch
      %35 = sbr.rel (0) target = $region17
    $region16: #{generator_forward.7} parent=1 // pred_region
      %36 = dma.done [#allocation3], 8192
    $region17: #{generator_forward.7} parent=1 // pred_fallthru
      _
    // Predicated region
    $region18: #{generator_forward.7} parent=1 // pred_check
      _
    $region19: #{generator_forward.7} parent=1 // pred_check_branch
      %38 = sbr.rel (0) target = $region21
    $region20: #{generator_forward.7} parent=1 // pred_region
      %39 = dma.done [#allocation5], 32
    $region21: #{generator_forward.7} parent=1 // pred_fallthru
      _
    %v40 = vld [vmem:[%s0] sm:$0xff]
    %v41 = vld [vmem:[%s0 + $0x8] sm:$0xff]
    %v42 = vld [vmem:[%s0 + $0x10] sm:$0xff]
    %v43 = vld [vmem:[%s0 + $0x18] sm:$0xff]
    %v44 = vld [vmem:[%s0 + $0x20] sm:$0xff]
    %v45 = vld [vmem:[%s0 + $0x28] sm:$0xff]
    %v46 = vld [vmem:[%s0 + $0x30] sm:$0xff]
    %v47 = vld [vmem:[%s0 + $0x38] sm:$0xff]
    %v48 = vld [vmem:[#allocation2] sm:$0xff]
    %v49 = vld [vmem:[#allocation2 + $0x8] sm:$0xff]
    %v50 = vld [vmem:[#allocation2 + $0x10] sm:$0xff]
    %v51 = vld [vmem:[#allocation2 + $0x18] sm:$0xff]
    %v52 = vld [vmem:[#allocation2 + $0x20] sm:$0xff]
    %v53 = vld [vmem:[#allocation2 + $0x28] sm:$0xff]
    %v54 = vld [vmem:[#allocation2 + $0x30] sm:$0xff]
    %v55 = vld [vmem:[#allocation2 + $0x38] sm:$0xff]
    %v56 = vld [vmem:[#allocation2 + $0x40] sm:$0xff]
    %v57 = vld [vmem:[#allocation2 + $0x48] sm:$0xff]
    %v58 = vld [vmem:[#allocation2 + $0x50] sm:$0xff]
    %v59 = vld [vmem:[#allocation2 + $0x58] sm:$0xff]
    %v60 = vld [vmem:[#allocation2 + $0x60] sm:$0xff]
    %v61 = vld [vmem:[#allocation2 + $0x68] sm:$0xff]
    %v62 = vld [vmem:[#allocation2 + $0x70] sm:$0xff]
    %v63 = vld [vmem:[#allocation2 + $0x78] sm:$0xff]
    %v64 = vld [vmem:[#allocation2 + $0x80] sm:$0xff]
    %v65 = vld [vmem:[#allocation2 + $0x88] sm:$0xff]
    %v66 = vld [vmem:[#allocation2 + $0x90] sm:$0xff]
    %v67 = vld [vmem:[#allocation2 + $0x98] sm:$0xff]
    %v68 = vld [vmem:[#allocation2 + $0xa0] sm:$0xff]
    %v69 = vld [vmem:[#allocation2 + $0xa8] sm:$0xff]
    %v70 = vld [vmem:[#allocation2 + $0xb0] sm:$0xff]
    %v71 = vld [vmem:[#allocation2 + $0xb8] sm:$0xff]
    %v72 = vld [vmem:[#allocation2 + $0xc0] sm:$0xff]
    %v73 = vld [vmem:[#allocation2 + $0xc8] sm:$0xff]
    %v74 = vld [vmem:[#allocation2 + $0xd0] sm:$0xff]
    %v75 = vld [vmem:[#allocation2 + $0xd8] sm:$0xff]
    %v76 = vld [vmem:[#allocation2 + $0xe0] sm:$0xff]
    %v77 = vld [vmem:[#allocation2 + $0xe8] sm:$0xff]
    %v78 = vld [vmem:[#allocation2 + $0xf0] sm:$0xff]
    %v79 = vld [vmem:[#allocation2 + $0xf8] sm:$0xff]
    %v80 = vld [vmem:[#allocation2 + $0x100] sm:$0xff]
    %v81 = vld [vmem:[#allocation2 + $0x108] sm:$0xff]
    %v82 = vld [vmem:[#allocation2 + $0x110] sm:$0xff]
    %v83 = vld [vmem:[#allocation2 + $0x118] sm:$0xff]
    %v84 = vld [vmem:[#allocation2 + $0x120] sm:$0xff]
    %v85 = vld [vmem:[#allocation2 + $0x128] sm:$0xff]
    %v86 = vld [vmem:[#allocation2 + $0x130] sm:$0xff]
    %v87 = vld [vmem:[#allocation2 + $0x138] sm:$0xff]
    %v88 = vld [vmem:[#allocation2 + $0x140] sm:$0xff]
    %v89 = vld [vmem:[#allocation2 + $0x148] sm:$0xff]
    %v90 = vld [vmem:[#allocation2 + $0x150] sm:$0xff]
    %v91 = vld [vmem:[#allocation2 + $0x158] sm:$0xff]
    %v92 = vld [vmem:[#allocation2 + $0x160] sm:$0xff]
    %v93 = vld [vmem:[#allocation2 + $0x168] sm:$0xff]
    %v94 = vld [vmem:[#allocation2 + $0x170] sm:$0xff]
    %v95 = vld [vmem:[#allocation2 + $0x178] sm:$0xff]
    %v96 = vld [vmem:[#allocation2 + $0x180] sm:$0xff]
    %v97 = vld [vmem:[#allocation2 + $0x188] sm:$0xff]
    %v98 = vld [vmem:[#allocation2 + $0x190] sm:$0xff]
    %v99 = vld [vmem:[#allocation2 + $0x198] sm:$0xff]
    %v100 = vld [vmem:[#allocation2 + $0x1a0] sm:$0xff]
    %v101 = vld [vmem:[#allocation2 + $0x1a8] sm:$0xff]
    %v102 = vld [vmem:[#allocation2 + $0x1b0] sm:$0xff]
    %v103 = vld [vmem:[#allocation2 + $0x1b8] sm:$0xff]
    %v104 = vld [vmem:[#allocation2 + $0x1c0] sm:$0xff]
    %v105 = vld [vmem:[#allocation2 + $0x1c8] sm:$0xff]
    %v106 = vld [vmem:[#allocation2 + $0x1d0] sm:$0xff]
    %v107 = vld [vmem:[#allocation2 + $0x1d8] sm:$0xff]
    %v108 = vld [vmem:[#allocation2 + $0x1e0] sm:$0xff]
    %v109 = vld [vmem:[#allocation2 + $0x1e8] sm:$0xff]
    %v110 = vld [vmem:[#allocation2 + $0x1f0] sm:$0xff]
    %v111 = vld [vmem:[#allocation2 + $0x1f8] sm:$0xff]
    %v112 = vld [vmem:[#allocation4] sm:$0x3]
    %v114 = vlaneseq
    %v115 = vshrl.u32 %v114, 7
    %v116 = vsub.s32 0, %v115
    %v117 = vrot.slane %v112, %v116
    %v118 = vlaneseq
    %v119 = vshrl.u32 %v118, 7
    %v120 = vsub.s32 1, %v119
    %v121 = vrot.slane %v112, %v120
    %v132 = vunpack.c.l.b16 %v40
    %v133 = vunpack.c.h.b16 %v40
    %v134 = vunpack.c.l.b16 %v41
    %v135 = vunpack.c.h.b16 %v41
    %v136 = vunpack.c.l.b16 %v42
    %v137 = vunpack.c.h.b16 %v42
    %v138 = vunpack.c.l.b16 %v43
    %v139 = vunpack.c.h.b16 %v43
    %v140 = vunpack.c.l.b16 %v44
    %v141 = vunpack.c.h.b16 %v44
    %v142 = vunpack.c.l.b16 %v45
    %v143 = vunpack.c.h.b16 %v45
    %v144 = vunpack.c.l.b16 %v46
    %v145 = vunpack.c.h.b16 %v46
    %v146 = vunpack.c.l.b16 %v47
    %v147 = vunpack.c.h.b16 %v47
    %v148 = vpack.c.b16 %v136, %v132
    %v149 = vpack.c.b16 %v137, %v133
    %v150 = vpack.c.b16 %v138, %v134
    %v151 = vpack.c.b16 %v139, %v135
    %v152 = vpack.c.b16 %v144, %v140
    %v153 = vpack.c.b16 %v145, %v141
    %v154 = vpack.c.b16 %v146, %v142
    %v155 = vpack.c.b16 %v147, %v143
    %v228 = vunpack.c.l.b16 %v48
    %v229 = vunpack.c.h.b16 %v48
    %v230 = vunpack.c.l.b16 %v49
    %v231 = vunpack.c.h.b16 %v49
    %v232 = vunpack.c.l.b16 %v50
    %v233 = vunpack.c.h.b16 %v50
    %v234 = vunpack.c.l.b16 %v51
    %v235 = vunpack.c.h.b16 %v51
    %v236 = vunpack.c.l.b16 %v52
    %v237 = vunpack.c.h.b16 %v52
    %v238 = vunpack.c.l.b16 %v53
    %v239 = vunpack.c.h.b16 %v53
    %v240 = vunpack.c.l.b16 %v54
    %v241 = vunpack.c.h.b16 %v54
    %v242 = vunpack.c.l.b16 %v55
    %v243 = vunpack.c.h.b16 %v55
    %v244 = vunpack.c.l.b16 %v56
    %v245 = vunpack.c.h.b16 %v56
    %v246 = vunpack.c.l.b16 %v57
    %v247 = vunpack.c.h.b16 %v57
    %v248 = vunpack.c.l.b16 %v58
    %v249 = vunpack.c.h.b16 %v58
    %v250 = vunpack.c.l.b16 %v59
    %v251 = vunpack.c.h.b16 %v59
    %v252 = vunpack.c.l.b16 %v60
    %v253 = vunpack.c.h.b16 %v60
    %v254 = vunpack.c.l.b16 %v61
    %v255 = vunpack.c.h.b16 %v61
    %v256 = vunpack.c.l.b16 %v62
    %v257 = vunpack.c.h.b16 %v62
    %v258 = vunpack.c.l.b16 %v63
    %v259 = vunpack.c.h.b16 %v63
    %v260 = vunpack.c.l.b16 %v64
    %v261 = vunpack.c.h.b16 %v64
    %v262 = vunpack.c.l.b16 %v65
    %v263 = vunpack.c.h.b16 %v65
    %v264 = vunpack.c.l.b16 %v66
    %v265 = vunpack.c.h.b16 %v66
    %v266 = vunpack.c.l.b16 %v67
    %v267 = vunpack.c.h.b16 %v67
    %v268 = vunpack.c.l.b16 %v68
    %v269 = vunpack.c.h.b16 %v68
    %v270 = vunpack.c.l.b16 %v69
    %v271 = vunpack.c.h.b16 %v69
    %v272 = vunpack.c.l.b16 %v70
    %v273 = vunpack.c.h.b16 %v70
    %v274 = vunpack.c.l.b16 %v71
    %v275 = vunpack.c.h.b16 %v71
    %v276 = vunpack.c.l.b16 %v72
    %v277 = vunpack.c.h.b16 %v72
    %v278 = vunpack.c.l.b16 %v73
    %v279 = vunpack.c.h.b16 %v73
    %v280 = vunpack.c.l.b16 %v74
    %v281 = vunpack.c.h.b16 %v74
    %v282 = vunpack.c.l.b16 %v75
    %v283 = vunpack.c.h.b16 %v75
    %v284 = vunpack.c.l.b16 %v76
    %v285 = vunpack.c.h.b16 %v76
    %v286 = vunpack.c.l.b16 %v77
    %v287 = vunpack.c.h.b16 %v77
    %v288 = vunpack.c.l.b16 %v78
    %v289 = vunpack.c.h.b16 %v78
    %v290 = vunpack.c.l.b16 %v79
    %v291 = vunpack.c.h.b16 %v79
    %v292 = vunpack.c.l.b16 %v80
    %v293 = vunpack.c.h.b16 %v80
    %v294 = vunpack.c.l.b16 %v81
    %v295 = vunpack.c.h.b16 %v81
    %v296 = vunpack.c.l.b16 %v82
    %v297 = vunpack.c.h.b16 %v82
    %v298 = vunpack.c.l.b16 %v83
    %v299 = vunpack.c.h.b16 %v83
    %v300 = vunpack.c.l.b16 %v84
    %v301 = vunpack.c.h.b16 %v84
    %v302 = vunpack.c.l.b16 %v85
    %v303 = vunpack.c.h.b16 %v85
    %v304 = vunpack.c.l.b16 %v86
    %v305 = vunpack.c.h.b16 %v86
    %v306 = vunpack.c.l.b16 %v87
    %v307 = vunpack.c.h.b16 %v87
    %v308 = vunpack.c.l.b16 %v88
    %v309 = vunpack.c.h.b16 %v88
    %v310 = vunpack.c.l.b16 %v89
    %v311 = vunpack.c.h.b16 %v89
    %v312 = vunpack.c.l.b16 %v90
    %v313 = vunpack.c.h.b16 %v90
    %v314 = vunpack.c.l.b16 %v91
    %v315 = vunpack.c.h.b16 %v91
    %v316 = vunpack.c.l.b16 %v92
    %v317 = vunpack.c.h.b16 %v92
    %v318 = vunpack.c.l.b16 %v93
    %v319 = vunpack.c.h.b16 %v93
    %v320 = vunpack.c.l.b16 %v94
    %v321 = vunpack.c.h.b16 %v94
    %v322 = vunpack.c.l.b16 %v95
    %v323 = vunpack.c.h.b16 %v95
    %v324 = vunpack.c.l.b16 %v96
    %v325 = vunpack.c.h.b16 %v96
    %v326 = vunpack.c.l.b16 %v97
    %v327 = vunpack.c.h.b16 %v97
    %v328 = vunpack.c.l.b16 %v98
    %v329 = vunpack.c.h.b16 %v98
    %v330 = vunpack.c.l.b16 %v99
    %v331 = vunpack.c.h.b16 %v99
    %v332 = vunpack.c.l.b16 %v100
    %v333 = vunpack.c.h.b16 %v100
    %v334 = vunpack.c.l.b16 %v101
    %v335 = vunpack.c.h.b16 %v101
    %v336 = vunpack.c.l.b16 %v102
    %v337 = vunpack.c.h.b16 %v102
    %v338 = vunpack.c.l.b16 %v103
    %v339 = vunpack.c.h.b16 %v103
    %v340 = vunpack.c.l.b16 %v104
    %v341 = vunpack.c.h.b16 %v104
    %v342 = vunpack.c.l.b16 %v105
    %v343 = vunpack.c.h.b16 %v105
    %v344 = vunpack.c.l.b16 %v106
    %v345 = vunpack.c.h.b16 %v106
    %v346 = vunpack.c.l.b16 %v107
    %v347 = vunpack.c.h.b16 %v107
    %v348 = vunpack.c.l.b16 %v108
    %v349 = vunpack.c.h.b16 %v108
    %v350 = vunpack.c.l.b16 %v109
    %v351 = vunpack.c.h.b16 %v109
    %v352 = vunpack.c.l.b16 %v110
    %v353 = vunpack.c.h.b16 %v110
    %v354 = vunpack.c.l.b16 %v111
    %v355 = vunpack.c.h.b16 %v111
    %v356 = vpack.c.b16 %v230, %v228
    %v357 = vpack.c.b16 %v231, %v229
    %v358 = vpack.c.b16 %v234, %v232
    %v359 = vpack.c.b16 %v235, %v233
    %v360 = vpack.c.b16 %v238, %v236
    %v361 = vpack.c.b16 %v239, %v237
    %v362 = vpack.c.b16 %v242, %v240
    %v363 = vpack.c.b16 %v243, %v241
    %v364 = vpack.c.b16 %v246, %v244
    %v365 = vpack.c.b16 %v247, %v245
    %v366 = vpack.c.b16 %v250, %v248
    %v367 = vpack.c.b16 %v251, %v249
    %v368 = vpack.c.b16 %v254, %v252
    %v369 = vpack.c.b16 %v255, %v253
    %v370 = vpack.c.b16 %v258, %v256
    %v371 = vpack.c.b16 %v259, %v257
    %v372 = vpack.c.b16 %v262, %v260
    %v373 = vpack.c.b16 %v263, %v261
    %v374 = vpack.c.b16 %v266, %v264
    %v375 = vpack.c.b16 %v267, %v265
    %v376 = vpack.c.b16 %v270, %v268
    %v377 = vpack.c.b16 %v271, %v269
    %v378 = vpack.c.b16 %v274, %v272
    %v379 = vpack.c.b16 %v275, %v273
    %v380 = vpack.c.b16 %v278, %v276
    %v381 = vpack.c.b16 %v279, %v277
    %v382 = vpack.c.b16 %v282, %v280
    %v383 = vpack.c.b16 %v283, %v281
    %v384 = vpack.c.b16 %v286, %v284
    %v385 = vpack.c.b16 %v287, %v285
    %v386 = vpack.c.b16 %v290, %v288
    %v387 = vpack.c.b16 %v291, %v289
    %v388 = vpack.c.b16 %v294, %v292
    %v389 = vpack.c.b16 %v295, %v293
    %v390 = vpack.c.b16 %v298, %v296
    %v391 = vpack.c.b16 %v299, %v297
    %v392 = vpack.c.b16 %v302, %v300
    %v393 = vpack.c.b16 %v303, %v301
    %v394 = vpack.c.b16 %v306, %v304
    %v395 = vpack.c.b16 %v307, %v305
    %v396 = vpack.c.b16 %v310, %v308
    %v397 = vpack.c.b16 %v311, %v309
    %v398 = vpack.c.b16 %v314, %v312
    %v399 = vpack.c.b16 %v315, %v313
    %v400 = vpack.c.b16 %v318, %v316
    %v401 = vpack.c.b16 %v319, %v317
    %v402 = vpack.c.b16 %v322, %v320
    %v403 = vpack.c.b16 %v323, %v321
    %v404 = vpack.c.b16 %v326, %v324
    %v405 = vpack.c.b16 %v327, %v325
    %v406 = vpack.c.b16 %v330, %v328
    %v407 = vpack.c.b16 %v331, %v329
    %v408 = vpack.c.b16 %v334, %v332
    %v409 = vpack.c.b16 %v335, %v333
    %v410 = vpack.c.b16 %v338, %v336
    %v411 = vpack.c.b16 %v339, %v337
    %v412 = vpack.c.b16 %v342, %v340
    %v413 = vpack.c.b16 %v343, %v341
    %v414 = vpack.c.b16 %v346, %v344
    %v415 = vpack.c.b16 %v347, %v345
    %v416 = vpack.c.b16 %v350, %v348
    %v417 = vpack.c.b16 %v351, %v349
    %v418 = vpack.c.b16 %v354, %v352
    %v419 = vpack.c.b16 %v355, %v353
    %484 = vmatprep.subr.bf16.mxu0 %v371
    %485 = vmatpush1.bf16.msra.mxu0 %v370
    %486 = vmatprep.subr.bf16.mxu0 %v369
    %487 = vmatpush1.bf16.msra.mxu0 %v368
    %488 = vmatprep.subr.bf16.mxu0 %v367
    %489 = vmatpush1.bf16.msra.mxu0 %v366
    %490 = vmatprep.subr.bf16.mxu0 %v365
    %491 = vmatpush1.bf16.msra.mxu0 %v364
    %492 = vmatprep.subr.bf16.mxu0 %v363
    %493 = vmatpush1.bf16.msra.mxu0 %v362
    %494 = vmatprep.subr.bf16.mxu0 %v361
    %495 = vmatpush1.bf16.msra.mxu0 %v360
    %496 = vmatprep.subr.bf16.mxu0 %v359
    %497 = vmatpush1.bf16.msra.mxu0 %v358
    %498 = vmatprep.subr.bf16.mxu0 %v357
    %499 = vmatpush1.bf16.msra.mxu0 %v356
    %500 = vmatprep.subr.bf16.mxu0 %v387
    %501 = vmatpush2.bf16.msra.mxu0 %v386
    %502 = vmatprep.subr.bf16.mxu0 %v385
    %503 = vmatpush2.bf16.msra.mxu0 %v384
    %504 = vmatprep.subr.bf16.mxu0 %v383
    %505 = vmatpush2.bf16.msra.mxu0 %v382
    %506 = vmatprep.subr.bf16.mxu0 %v381
    %507 = vmatpush2.bf16.msra.mxu0 %v380
    %508 = vmatprep.subr.bf16.mxu0 %v379
    %509 = vmatpush2.bf16.msra.mxu0 %v378
    %510 = vmatprep.subr.bf16.mxu0 %v377
    %511 = vmatpush2.bf16.msra.mxu0 %v376
    %512 = vmatprep.subr.bf16.mxu0 %v375
    %513 = vmatpush2.bf16.msra.mxu0 %v374
    %514 = vmatprep.subr.bf16.mxu0 %v373
    %515 = vmatpush2.bf16.msra.mxu0 %v372
    %516 = vmatprep.mubr.bf16.mxu0 %v149
    %517 = vmatmul.mubr.bf16.gmra.mxu0 %v148
    %v518 = vpop.f32.mrf.mxu0
    %v519 = vadd.f32 %v117, %v518
    %v520 = vpop.f32.mrf.mxu0
    %v521 = vadd.f32 %v121, %v520
    %v522 = vpop.f32.mrf.mxu0
    %v523 = vadd.f32 %v117, %v522
    %v524 = vpop.f32.mrf.mxu0
    %v525 = vadd.f32 %v121, %v524
    %526 = vmatprep.mubr.bf16.mxu0 %v153
    %527 = vmatmul.mubr.bf16.gmra.mxu0 %v152
    %v528 = vpop.f32.mrf.mxu0
    %v529 = vadd.f32 %v117, %v528
    %v530 = vpop.f32.mrf.mxu0
    %v531 = vadd.f32 %v121, %v530
    %v532 = vpop.f32.mrf.mxu0
    %v533 = vadd.f32 %v117, %v532
    %v534 = vpop.f32.mrf.mxu0
    %v535 = vadd.f32 %v121, %v534
    %536 = vdwg.mxu0
    %537 = vmatprep.subr.bf16.mxu0 %v403
    %538 = vmatpush1.bf16.msra.mxu0 %v402
    %539 = vmatprep.subr.bf16.mxu0 %v401
    %540 = vmatpush1.bf16.msra.mxu0 %v400
    %541 = vmatprep.subr.bf16.mxu0 %v399
    %542 = vmatpush1.bf16.msra.mxu0 %v398
    %543 = vmatprep.subr.bf16.mxu0 %v397
    %544 = vmatpush1.bf16.msra.mxu0 %v396
    %545 = vmatprep.subr.bf16.mxu0 %v395
    %546 = vmatpush1.bf16.msra.mxu0 %v394
    %547 = vmatprep.subr.bf16.mxu0 %v393
    %548 = vmatpush1.bf16.msra.mxu0 %v392
    %549 = vmatprep.subr.bf16.mxu0 %v391
    %550 = vmatpush1.bf16.msra.mxu0 %v390
    %551 = vmatprep.subr.bf16.mxu0 %v389
    %552 = vmatpush1.bf16.msra.mxu0 %v388
    %553 = vmatprep.subr.bf16.mxu0 %v419
    %554 = vmatpush2.bf16.msra.mxu0 %v418
    %555 = vmatprep.subr.bf16.mxu0 %v417
    %556 = vmatpush2.bf16.msra.mxu0 %v416
    %557 = vmatprep.subr.bf16.mxu0 %v415
    %558 = vmatpush2.bf16.msra.mxu0 %v414
    %559 = vmatprep.subr.bf16.mxu0 %v413
    %560 = vmatpush2.bf16.msra.mxu0 %v412
    %561 = vmatprep.subr.bf16.mxu0 %v411
    %562 = vmatpush2.bf16.msra.mxu0 %v410
    %563 = vmatprep.subr.bf16.mxu0 %v409
    %564 = vmatpush2.bf16.msra.mxu0 %v408
    %565 = vmatprep.subr.bf16.mxu0 %v407
    %566 = vmatpush2.bf16.msra.mxu0 %v406
    %567 = vmatprep.subr.bf16.mxu0 %v405
    %568 = vmatpush2.bf16.msra.mxu0 %v404
    %569 = vmatprep.mubr.bf16.mxu0 %v151
    %570 = vmatmul.mubr.bf16.gmra.mxu0 %v150
    %v571 = vpop.f32.mrf.mxu0
    %v572 = vadd.f32 %v519, %v571
    %v573 = vpop.f32.mrf.mxu0
    %v574 = vadd.f32 %v521, %v573
    %v575 = vpop.f32.mrf.mxu0
    %v576 = vadd.f32 %v523, %v575
    %v577 = vpop.f32.mrf.mxu0
    %v578 = vadd.f32 %v525, %v577
    %579 = vmatprep.mubr.bf16.mxu0 %v155
    %580 = vmatmul.mubr.bf16.gmra.mxu0 %v154
    %v581 = vpop.f32.mrf.mxu0
    %v582 = vadd.f32 %v529, %v581
    %v583 = vpop.f32.mrf.mxu0
    %v584 = vadd.f32 %v531, %v583
    %v585 = vpop.f32.mrf.mxu0
    %v586 = vadd.f32 %v533, %v585
    %v587 = vpop.f32.mrf.mxu0
    %v588 = vadd.f32 %v535, %v587
    %589 = vdwg.mxu0
    %v590 = vmax.f32 %v572, 0.0
    %v591 = vmax.f32 %v574, 0.0
    %v592 = vmax.f32 %v576, 0.0
    %v593 = vmax.f32 %v578, 0.0
    %v594 = vmax.f32 %v582, 0.0
    %v595 = vmax.f32 %v584, 0.0
    %v596 = vmax.f32 %v586, 0.0
    %v597 = vmax.f32 %v588, 0.0
    %v598 = vpack.c.bf16 %v592, %v590
    %v599 = vpack.c.bf16 %v593, %v591
    %v600 = vpack.c.bf16 %v596, %v594
    %v601 = vpack.c.bf16 %v597, %v595
    %v606 = vunpack.c.l.b16 %v598
    %v607 = vunpack.c.l.b16 %v599
    %v608 = vunpack.c.h.b16 %v598
    %v609 = vunpack.c.h.b16 %v599
    %v610 = vunpack.c.l.b16 %v600
    %v611 = vunpack.c.l.b16 %v601
    %v612 = vunpack.c.h.b16 %v600
    %v613 = vunpack.c.h.b16 %v601
    %v614 = vpack.c.b16 %v607, %v606
    %v615 = vpack.c.b16 %v609, %v608
    %v616 = vpack.c.b16 %v611, %v610
    %v617 = vpack.c.b16 %v613, %v612
    %622 = vst [vmem:[%s3] sm:$0xff] %v614
    %623 = vst [vmem:[%s3 + $0x8] sm:$0xff] %v615
    %624 = vst [vmem:[%s3 + $0x10] sm:$0xff] %v616
    %625 = vst [vmem:[%s3 + $0x18] sm:$0xff] %v617
    // Predicated region
    $region22: #{generator_forward.7} parent=1 // pred_check
      _
    $region23: #{generator_forward.7} parent=1 // pred_check_branch
      %627 = sbr.rel (0) target = $region25
    $region24: #{generator_forward.7} parent=1 // pred_region
      _
    $region25: #{generator_forward.7} parent=1 // pred_fallthru
      _
    // Predicated region
    $region26: #{generator_forward.7} parent=1 // pred_check
      _
    $region27: #{generator_forward.7} parent=1 // pred_check_branch
      %629 = sbr.rel (0) target = $region29
    $region28: #{generator_forward.7} parent=1 // pred_region
      _
    $region29: #{generator_forward.7} parent=1 // pred_fallthru
      _
    %630 = vsyncpa [#allocation3], 1
    %631 = vsyncpa [#allocation5], 1

// kernel: generator_forward.6
$region0: #{generator_forward.6}
  #allocation0 [shape = 'u32[]', space=smem, size = 0x4, offset = 0x4, fixed_abs, tag = 'smem constant byte address 0x4 - core index']
  #allocation1 [shape = 'u32[144,128]{1,0:T(1,128)}', space=vmem, size = 0x12000, scoped, tag = 'internal scratch']
  %s0 = inlined_call_operand.vmem [shape: bf16[16,1024], index: 0, kind: input, shape index: {}]
  %s1 = inlined_call_operand.hbm [shape: bf16[1024,512], index: 1, kind: input, shape index: {}]
  %s2 = inlined_call_operand.hbm [shape: f32[1,512], index: 2, kind: input, shape index: {}]
  %s3 = inlined_call_operand.vmem [shape: bf16[16,512], index: 3, kind: output, shape index: {}]
  %s4 = sld [smem:[#allocation0]]
  $region30: #{generator_forward.6} parent=0
    _
  %s6 = ssub.s32 1, %s4
  %s7 = scalar_select 0, %s6, %s4
  $region1: #{generator_forward.6} parent=0
    #allocation2 [shape = 'u8[1048576]{0}', space=vmem, size = 0x100000, scoped, tag = 'input window, operand 1, single buffered']
    #allocation3 [shape = 's32[1]{0}', space=sflag, size = 0x4, scoped, tag = 'scoped memory for generator_forward.6']
    #allocation4 [shape = 'u8[2048]{0}', space=vmem, size = 0x800, scoped, tag = 'input window, operand 2, single buffered']
    #allocation5 [shape = 's32[1]{0}', space=sflag, size = 0x4, scoped, tag = 'scoped memory for generator_forward.6']
    %8 = vsyncpa [#allocation3], 0
    %9 = vsyncpa [#allocation5], 0
    // Predicated region
    $region2: #{generator_forward.6} parent=1 // pred_check
      _
    $region3: #{generator_forward.6} parent=1 // pred_check_branch
      %11 = sbr.rel (0) target = $region5
    $region4: #{generator_forward.6} parent=1 // pred_region
      _
    $region5: #{generator_forward.6} parent=1 // pred_fallthru
      _
    // Predicated region
    $region6: #{generator_forward.6} parent=1 // pred_check
      _
    $region7: #{generator_forward.6} parent=1 // pred_check_branch
      %13 = sbr.rel (0) target = $region9
    $region8: #{generator_forward.6} parent=1 // pred_region
      %s15 = ssub.s32 32768, 32768
      %16 = vsyncadd [#allocation3], %s15
      %s17 = sshll.u32 [#allocation2], 4
      %s18 = int_to_ptr.vmem [resolvable:$true] %s17
      %23 = dma.hbm_to_vmem [thread:$0]  %s1, 32768, %s18, [#allocation3], 256, 256, 16
    $region9: #{generator_forward.6} parent=1 // pred_fallthru
      _
    // Predicated region
    $region10: #{generator_forward.6} parent=1 // pred_check
      _
    $region11: #{generator_forward.6} parent=1 // pred_check_branch
      %25 = sbr.rel (0) target = $region13
    $region12: #{generator_forward.6} parent=1 // pred_region
      %s27 = ssub.s32 64, 64
      %28 = vsyncadd [#allocation5], %s27
      %s30 = sshll.u32 [#allocation4], 4
      %s31 = int_to_ptr.vmem [resolvable:$true] %s30
      %33 = dma.hbm_to_vmem [thread:$0]  %s2, 64, %s31, [#allocation5]
    $region13: #{generator_forward.6} parent=1 // pred_fallthru
      _
    // Predicated region
    $region14: #{generator_forward.6} parent=1 // pred_check
      _
    $region15: #{generator_forward.6} parent=1 // pred_check_branch
      %35 = sbr.rel (0) target = $region17
    $region16: #{generator_forward.6} parent=1 // pred_region
      %36 = dma.done [#allocation3], 32768
    $region17: #{generator_forward.6} parent=1 // pred_fallthru
      _
    // Predicated region
    $region18: #{generator_forward.6} parent=1 // pred_check
      _
    $region19: #{generator_forward.6} parent=1 // pred_check_branch
      %38 = sbr.rel (0) target = $region21
    $region20: #{generator_forward.6} parent=1 // pred_region
      %39 = dma.done [#allocation5], 64
    $region21: #{generator_forward.6} parent=1 // pred_fallthru
      _
    %v40 = vld [vmem:[%s0] sm:$0xff]
    %v41 = vld [vmem:[%s0 + $0x8] sm:$0xff]
    %v42 = vld [vmem:[%s0 + $0x10] sm:$0xff]
    %v43 = vld [vmem:[%s0 + $0x18] sm:$0xff]
    %v44 = vld [vmem:[%s0 + $0x20] sm:$0xff]
    %v45 = vld [vmem:[%s0 + $0x28] sm:$0xff]
    %v46 = vld [vmem:[%s0 + $0x30] sm:$0xff]
    %v47 = vld [vmem:[%s0 + $0x38] sm:$0xff]
    %v48 = vld [vmem:[#allocation2] sm:$0xff]
    %v49 = vld [vmem:[#allocation2 + $0x8] sm:$0xff]
    %v50 = vld [vmem:[#allocation2 + $0x10] sm:$0xff]
    %v51 = vld [vmem:[#allocation2 + $0x18] sm:$0xff]
    %v52 = vld [vmem:[#allocation2 + $0x20] sm:$0xff]
    %v53 = vld [vmem:[#allocation2 + $0x28] sm:$0xff]
    %v54 = vld [vmem:[#allocation2 + $0x30] sm:$0xff]
    %v55 = vld [vmem:[#allocation2 + $0x38] sm:$0xff]
    %v56 = vld [vmem:[#allocation2 + $0x40] sm:$0xff]
    %v57 = vld [vmem:[#allocation2 + $0x48] sm:$0xff]
    %v58 = vld [vmem:[#allocation2 + $0x50] sm:$0xff]
    %v59 = vld [vmem:[#allocation2 + $0x58] sm:$0xff]
    %v60 = vld [vmem:[#allocation2 + $0x60] sm:$0xff]
    %v61 = vld [vmem:[#allocation2 + $0x68] sm:$0xff]
    %v62 = vld [vmem:[#allocation2 + $0x70] sm:$0xff]
    %v63 = vld [vmem:[#allocation2 + $0x78] sm:$0xff]
    %v64 = vld [vmem:[#allocation2 + $0x80] sm:$0xff]
    %v65 = vld [vmem:[#allocation2 + $0x88] sm:$0xff]
    %v66 = vld [vmem:[#allocation2 + $0x90] sm:$0xff]
    %v67 = vld [vmem:[#allocation2 + $0x98] sm:$0xff]
    %v68 = vld [vmem:[#allocation2 + $0xa0] sm:$0xff]
    %v69 = vld [vmem:[#allocation2 + $0xa8] sm:$0xff]
    %v70 = vld [vmem:[#allocation2 + $0xb0] sm:$0xff]
    %v71 = vld [vmem:[#allocation2 + $0xb8] sm:$0xff]
    %v72 = vld [vmem:[#allocation2 + $0xc0] sm:$0xff]
    %v73 = vld [vmem:[#allocation2 + $0xc8] sm:$0xff]
    %v74 = vld [vmem:[#allocation2 + $0xd0] sm:$0xff]
    %v75 = vld [vmem:[#allocation2 + $0xd8] sm:$0xff]
    %v76 = vld [vmem:[#allocation2 + $0xe0] sm:$0xff]
    %v77 = vld [vmem:[#allocation2 + $0xe8] sm:$0xff]
    %v78 = vld [vmem:[#allocation2 + $0xf0] sm:$0xff]
    %v79 = vld [vmem:[#allocation2 + $0xf8] sm:$0xff]
    %v80 = vld [vmem:[#allocation2 + $0x100] sm:$0xff]
    %v81 = vld [vmem:[#allocation2 + $0x108] sm:$0xff]
    %v82 = vld [vmem:[#allocation2 + $0x110] sm:$0xff]
    %v83 = vld [vmem:[#allocation2 + $0x118] sm:$0xff]
    %v84 = vld [vmem:[#allocation2 + $0x120] sm:$0xff]
    %v85 = vld [vmem:[#allocation2 + $0x128] sm:$0xff]
    %v86 = vld [vmem:[#allocation2 + $0x130] sm:$0xff]
    %v87 = vld [vmem:[#allocation2 + $0x138] sm:$0xff]
    %v88 = vld [vmem:[#allocation2 + $0x140] sm:$0xff]
    %v89 = vld [vmem:[#allocation2 + $0x148] sm:$0xff]
    %v90 = vld [vmem:[#allocation2 + $0x150] sm:$0xff]
    %v91 = vld [vmem:[#allocation2 + $0x158] sm:$0xff]
    %v92 = vld [vmem:[#allocation2 + $0x160] sm:$0xff]
    %v93 = vld [vmem:[#allocation2 + $0x168] sm:$0xff]
    %v94 = vld [vmem:[#allocation2 + $0x170] sm:$0xff]
    %v95 = vld [vmem:[#allocation2 + $0x178] sm:$0xff]
    %v96 = vld [vmem:[#allocation2 + $0x180] sm:$0xff]
    %v97 = vld [vmem:[#allocation2 + $0x188] sm:$0xff]
    %v98 = vld [vmem:[#allocation2 + $0x190] sm:$0xff]
    %v99 = vld [vmem:[#allocation2 + $0x198] sm:$0xff]
    %v100 = vld [vmem:[#allocation2 + $0x1a0] sm:$0xff]
    %v101 = vld [vmem:[#allocation2 + $0x1a8] sm:$0xff]
    %v102 = vld [vmem:[#allocation2 + $0x1b0] sm:$0xff]
    %v103 = vld [vmem:[#allocation2 + $0x1b8] sm:$0xff]
    %v104 = vld [vmem:[#allocation2 + $0x1c0] sm:$0xff]
    %v105 = vld [vmem:[#allocation2 + $0x1c8] sm:$0xff]
    %v106 = vld [vmem:[#allocation2 + $0x1d0] sm:$0xff]
    %v107 = vld [vmem:[#allocation2 + $0x1d8] sm:$0xff]
    %v108 = vld [vmem:[#allocation2 + $0x1e0] sm:$0xff]
    %v109 = vld [vmem:[#allocation2 + $0x1e8] sm:$0xff]
    %v110 = vld [vmem:[#allocation2 + $0x1f0] sm:$0xff]
    %v111 = vld [vmem:[#allocation2 + $0x1f8] sm:$0xff]
    %v112 = vld [vmem:[#allocation2 + $0x200] sm:$0xff]
    %v113 = vld [vmem:[#allocation2 + $0x208] sm:$0xff]
    %v114 = vld [vmem:[#allocation2 + $0x210] sm:$0xff]
    %v115 = vld [vmem:[#allocation2 + $0x218] sm:$0xff]
    %v116 = vld [vmem:[#allocation2 + $0x220] sm:$0xff]
    %v117 = vld [vmem:[#allocation2 + $0x228] sm:$0xff]
    %v118 = vld [vmem:[#allocation2 + $0x230] sm:$0xff]
    %v119 = vld [vmem:[#allocation2 + $0x238] sm:$0xff]
    %v120 = vld [vmem:[#allocation2 + $0x240] sm:$0xff]
    %v121 = vld [vmem:[#allocation2 + $0x248] sm:$0xff]
    %v122 = vld [vmem:[#allocation2 + $0x250] sm:$0xff]
    %v123 = vld [vmem:[#allocation2 + $0x258] sm:$0xff]
    %v124 = vld [vmem:[#allocation2 + $0x260] sm:$0xff]
    %v125 = vld [vmem:[#allocation2 + $0x268] sm:$0xff]
    %v126 = vld [vmem:[#allocation2 + $0x270] sm:$0xff]
    %v127 = vld [vmem:[#allocation2 + $0x278] sm:$0xff]
    %v128 = vld [vmem:[#allocation2 + $0x280] sm:$0xff]
    %v129 = vld [vmem:[#allocation2 + $0x288] sm:$0xff]
    %v130 = vld [vmem:[#allocation2 + $0x290] sm:$0xff]
    %v131 = vld [vmem:[#allocation2 + $0x298] sm:$0xff]
    %v132 = vld [vmem:[#allocation2 + $0x2a0] sm:$0xff]
    %v133 = vld [vmem:[#allocation2 + $0x2a8] sm:$0xff]
    %v134 = vld [vmem:[#allocation2 + $0x2b0] sm:$0xff]
    %v135 = vld [vmem:[#allocation2 + $0x2b8] sm:$0xff]
    %v136 = vld [vmem:[#allocation2 + $0x2c0] sm:$0xff]
    %v137 = vld [vmem:[#allocation2 + $0x2c8] sm:$0xff]
    %v138 = vld [vmem:[#allocation2 + $0x2d0] sm:$0xff]
    %v139 = vld [vmem:[#allocation2 + $0x2d8] sm:$0xff]
    %v140 = vld [vmem:[#allocation2 + $0x2e0] sm:$0xff]
    %v141 = vld [vmem:[#allocation2 + $0x2e8] sm:$0xff]
    %v142 = vld [vmem:[#allocation2 + $0x2f0] sm:$0xff]
    %v143 = vld [vmem:[#allocation2 + $0x2f8] sm:$0xff]
    %v144 = vld [vmem:[#allocation2 + $0x300] sm:$0xff]
    %v145 = vld [vmem:[#allocation2 + $0x308] sm:$0xff]
    %v146 = vld [vmem:[#allocation2 + $0x310] sm:$0xff]
    %v147 = vld [vmem:[#allocation2 + $0x318] sm:$0xff]
    %v148 = vld [vmem:[#allocation2 + $0x320] sm:$0xff]
    %v149 = vld [vmem:[#allocation2 + $0x328] sm:$0xff]
    %v150 = vld [vmem:[#allocation2 + $0x330] sm:$0xff]
    %v151 = vld [vmem:[#allocation2 + $0x338] sm:$0xff]
    %v152 = vld [vmem:[#allocation2 + $0x340] sm:$0xff]
    %v153 = vld [vmem:[#allocation2 + $0x348] sm:$0xff]
    %v154 = vld [vmem:[#allocation2 + $0x350] sm:$0xff]
    %v155 = vld [vmem:[#allocation2 + $0x358] sm:$0xff]
    %v156 = vld [vmem:[#allocation2 + $0x360] sm:$0xff]
    %v157 = vld [vmem:[#allocation2 + $0x368] sm:$0xff]
    %v158 = vld [vmem:[#allocation2 + $0x370] sm:$0xff]
    %v159 = vld [vmem:[#allocation2 + $0x378] sm:$0xff]
    %v160 = vld [vmem:[#allocation2 + $0x380] sm:$0xff]
    %v161 = vld [vmem:[#allocation2 + $0x388] sm:$0xff]
    %v162 = vld [vmem:[#allocation2 + $0x390] sm:$0xff]
    %v163 = vld [vmem:[#allocation2 + $0x398] sm:$0xff]
    %v164 = vld [vmem:[#allocation2 + $0x3a0] sm:$0xff]
    %v165 = vld [vmem:[#allocation2 + $0x3a8] sm:$0xff]
    %v166 = vld [vmem:[#allocation2 + $0x3b0] sm:$0xff]
    %v167 = vld [vmem:[#allocation2 + $0x3b8] sm:$0xff]
    %v168 = vld [vmem:[#allocation2 + $0x3c0] sm:$0xff]
    %v169 = vld [vmem:[#allocation2 + $0x3c8] sm:$0xff]
    %v170 = vld [vmem:[#allocation2 + $0x3d0] sm:$0xff]
    %v171 = vld [vmem:[#allocation2 + $0x3d8] sm:$0xff]
    %v172 = vld [vmem:[#allocation2 + $0x3e0] sm:$0xff]
    %v173 = vld [vmem:[#allocation2 + $0x3e8] sm:$0xff]
    %v174 = vld [vmem:[#allocation2 + $0x3f0] sm:$0xff]
    %v175 = vld [vmem:[#allocation2 + $0x3f8] sm:$0xff]
    %v176 = vld [vmem:[#allocation2 + $0x400] sm:$0xff]
    %v177 = vld [vmem:[#allocation2 + $0x408] sm:$0xff]
    %v178 = vld [vmem:[#allocation2 + $0x410] sm:$0xff]
    %v179 = vld [vmem:[#allocation2 + $0x418] sm:$0xff]
    %v180 = vld [vmem:[#allocation2 + $0x420] sm:$0xff]
    %v181 = vld [vmem:[#allocation2 + $0x428] sm:$0xff]
    %v182 = vld [vmem:[#allocation2 + $0x430] sm:$0xff]
    %v183 = vld [vmem:[#allocation2 + $0x438] sm:$0xff]
    %v184 = vld [vmem:[#allocation2 + $0x440] sm:$0xff]
    %v185 = vld [vmem:[#allocation2 + $0x448] sm:$0xff]
    %v186 = vld [vmem:[#allocation2 + $0x450] sm:$0xff]
    %v187 = vld [vmem:[#allocation2 + $0x458] sm:$0xff]
    %v188 = vld [vmem:[#allocation2 + $0x460] sm:$0xff]
    %v189 = vld [vmem:[#allocation2 + $0x468] sm:$0xff]
    %v190 = vld [vmem:[#allocation2 + $0x470] sm:$0xff]
    %v191 = vld [vmem:[#allocation2 + $0x478] sm:$0xff]
    %v192 = vld [vmem:[#allocation2 + $0x480] sm:$0xff]
    %v193 = vld [vmem:[#allocation2 + $0x488] sm:$0xff]
    %v194 = vld [vmem:[#allocation2 + $0x490] sm:$0xff]
    %v195 = vld [vmem:[#allocation2 + $0x498] sm:$0xff]
    %v196 = vld [vmem:[#allocation2 + $0x4a0] sm:$0xff]
    %v197 = vld [vmem:[#allocation2 + $0x4a8] sm:$0xff]
    %v198 = vld [vmem:[#allocation2 + $0x4b0] sm:$0xff]
    %v199 = vld [vmem:[#allocation2 + $0x4b8] sm:$0xff]
    %v200 = vld [vmem:[#allocation2 + $0x4c0] sm:$0xff]
    %v201 = vld [vmem:[#allocation2 + $0x4c8] sm:$0xff]
    %v202 = vld [vmem:[#allocation2 + $0x4d0] sm:$0xff]
    %v203 = vld [vmem:[#allocation2 + $0x4d8] sm:$0xff]
    %v204 = vld [vmem:[#allocation2 + $0x4e0] sm:$0xff]
    %v205 = vld [vmem:[#allocation2 + $0x4e8] sm:$0xff]
    %v206 = vld [vmem:[#allocation2 + $0x4f0] sm:$0xff]
    %v207 = vld [vmem:[#allocation2 + $0x4f8] sm:$0xff]
    %v208 = vld [vmem:[#allocation2 + $0x500] sm:$0xff]
    %v209 = vld [vmem:[#allocation2 + $0x508] sm:$0xff]
    %v210 = vld [vmem:[#allocation2 + $0x510] sm:$0xff]
    %v211 = vld [vmem:[#allocation2 + $0x518] sm:$0xff]
    %v212 = vld [vmem:[#allocation2 + $0x520] sm:$0xff]
    %v213 = vld [vmem:[#allocation2 + $0x528] sm:$0xff]
    %v214 = vld [vmem:[#allocation2 + $0x530] sm:$0xff]
    %v215 = vld [vmem:[#allocation2 + $0x538] sm:$0xff]
    %v216 = vld [vmem:[#allocation2 + $0x540] sm:$0xff]
    %v217 = vld [vmem:[#allocation2 + $0x548] sm:$0xff]
    %v218 = vld [vmem:[#allocation2 + $0x550] sm:$0xff]
    %v219 = vld [vmem:[#allocation2 + $0x558] sm:$0xff]
    %v220 = vld [vmem:[#allocation2 + $0x560] sm:$0xff]
    %v221 = vld [vmem:[#allocation2 + $0x568] sm:$0xff]
    %v222 = vld [vmem:[#allocation2 + $0x570] sm:$0xff]
    %v223 = vld [vmem:[#allocation2 + $0x578] sm:$0xff]
    %v224 = vld [vmem:[#allocation2 + $0x580] sm:$0xff]
    %v225 = vld [vmem:[#allocation2 + $0x588] sm:$0xff]
    %v226 = vld [vmem:[#allocation2 + $0x590] sm:$0xff]
    %v227 = vld [vmem:[#allocation2 + $0x598] sm:$0xff]
    %v228 = vld [vmem:[#allocation2 + $0x5a0] sm:$0xff]
    %v229 = vld [vmem:[#allocation2 + $0x5a8] sm:$0xff]
    %v230 = vld [vmem:[#allocation2 + $0x5b0] sm:$0xff]
    %v231 = vld [vmem:[#allocation2 + $0x5b8] sm:$0xff]
    %v232 = vld [vmem:[#allocation2 + $0x5c0] sm:$0xff]
    %v233 = vld [vmem:[#allocation2 + $0x5c8] sm:$0xff]
    %v234 = vld [vmem:[#allocation2 + $0x5d0] sm:$0xff]
    %v235 = vld [vmem:[#allocation2 + $0x5d8] sm:$0xff]
    %v236 = vld [vmem:[#allocation2 + $0x5e0] sm:$0xff]
    %v237 = vld [vmem:[#allocation2 + $0x5e8] sm:$0xff]
    %v238 = vld [vmem:[#allocation2 + $0x5f0] sm:$0xff]
    %v239 = vld [vmem:[#allocation2 + $0x5f8] sm:$0xff]
    %v240 = vld [vmem:[#allocation2 + $0x600] sm:$0xff]
    %v241 = vld [vmem:[#allocation2 + $0x608] sm:$0xff]
    %v242 = vld [vmem:[#allocation2 + $0x610] sm:$0xff]
    %v243 = vld [vmem:[#allocation2 + $0x618] sm:$0xff]
    %v244 = vld [vmem:[#allocation2 + $0x620] sm:$0xff]
    %v245 = vld [vmem:[#allocation2 + $0x628] sm:$0xff]
    %v246 = vld [vmem:[#allocation2 + $0x630] sm:$0xff]
    %v247 = vld [vmem:[#allocation2 + $0x638] sm:$0xff]
    %v248 = vld [vmem:[#allocation2 + $0x640] sm:$0xff]
    %v249 = vld [vmem:[#allocation2 + $0x648] sm:$0xff]
    %v250 = vld [vmem:[#allocation2 + $0x650] sm:$0xff]
    %v251 = vld [vmem:[#allocation2 + $0x658] sm:$0xff]
    %v252 = vld [vmem:[#allocation2 + $0x660] sm:$0xff]
    %v253 = vld [vmem:[#allocation2 + $0x668] sm:$0xff]
    %v254 = vld [vmem:[#allocation2 + $0x670] sm:$0xff]
    %v255 = vld [vmem:[#allocation2 + $0x678] sm:$0xff]
    %v256 = vld [vmem:[#allocation2 + $0x680] sm:$0xff]
    %v257 = vld [vmem:[#allocation2 + $0x688] sm:$0xff]
    %v258 = vld [vmem:[#allocation2 + $0x690] sm:$0xff]
    %v259 = vld [vmem:[#allocation2 + $0x698] sm:$0xff]
    %v260 = vld [vmem:[#allocation2 + $0x6a0] sm:$0xff]
    %v261 = vld [vmem:[#allocation2 + $0x6a8] sm:$0xff]
    %v262 = vld [vmem:[#allocation2 + $0x6b0] sm:$0xff]
    %v263 = vld [vmem:[#allocation2 + $0x6b8] sm:$0xff]
    %v264 = vld [vmem:[#allocation2 + $0x6c0] sm:$0xff]
    %v265 = vld [vmem:[#allocation2 + $0x6c8] sm:$0xff]
    %v266 = vld [vmem:[#allocation2 + $0x6d0] sm:$0xff]
    %v267 = vld [vmem:[#allocation2 + $0x6d8] sm:$0xff]
    %v268 = vld [vmem:[#allocation2 + $0x6e0] sm:$0xff]
    %v269 = vld [vmem:[#allocation2 + $0x6e8] sm:$0xff]
    %v270 = vld [vmem:[#allocation2 + $0x6f0] sm:$0xff]
    %v271 = vld [vmem:[#allocation2 + $0x6f8] sm:$0xff]
    %v272 = vld [vmem:[#allocation2 + $0x700] sm:$0xff]
    %v273 = vld [vmem:[#allocation2 + $0x708] sm:$0xff]
    %v274 = vld [vmem:[#allocation2 + $0x710] sm:$0xff]
    %v275 = vld [vmem:[#allocation2 + $0x718] sm:$0xff]
    %v276 = vld [vmem:[#allocation2 + $0x720] sm:$0xff]
    %v277 = vld [vmem:[#allocation2 + $0x728] sm:$0xff]
    %v278 = vld [vmem:[#allocation2 + $0x730] sm:$0xff]
    %v279 = vld [vmem:[#allocation2 + $0x738] sm:$0xff]
    %v280 = vld [vmem:[#allocation2 + $0x740] sm:$0xff]
    %v281 = vld [vmem:[#allocation2 + $0x748] sm:$0xff]
    %v282 = vld [vmem:[#allocation2 + $0x750] sm:$0xff]
    %v283 = vld [vmem:[#allocation2 + $0x758] sm:$0xff]
    %v284 = vld [vmem:[#allocation2 + $0x760] sm:$0xff]
    %v285 = vld [vmem:[#allocation2 + $0x768] sm:$0xff]
    %v286 = vld [vmem:[#allocation2 + $0x770] sm:$0xff]
    %v287 = vld [vmem:[#allocation2 + $0x778] sm:$0xff]
    %v288 = vld [vmem:[#allocation2 + $0x780] sm:$0xff]
    %v289 = vld [vmem:[#allocation2 + $0x788] sm:$0xff]
    %v290 = vld [vmem:[#allocation2 + $0x790] sm:$0xff]
    %v291 = vld [vmem:[#allocation2 + $0x798] sm:$0xff]
    %v292 = vld [vmem:[#allocation2 + $0x7a0] sm:$0xff]
    %v293 = vld [vmem:[#allocation2 + $0x7a8] sm:$0xff]
    %v294 = vld [vmem:[#allocation2 + $0x7b0] sm:$0xff]
    %v295 = vld [vmem:[#allocation2 + $0x7b8] sm:$0xff]
    %v296 = vld [vmem:[#allocation2 + $0x7c0] sm:$0xff]
    %v297 = vld [vmem:[#allocation2 + $0x7c8] sm:$0xff]
    %v298 = vld [vmem:[#allocation2 + $0x7d0] sm:$0xff]
    %v299 = vld [vmem:[#allocation2 + $0x7d8] sm:$0xff]
    %v300 = vld [vmem:[#allocation2 + $0x7e0] sm:$0xff]
    %v301 = vld [vmem:[#allocation2 + $0x7e8] sm:$0xff]
    %v302 = vld [vmem:[#allocation2 + $0x7f0] sm:$0xff]
    %v303 = vld [vmem:[#allocation2 + $0x7f8] sm:$0xff]
    %v304 = vld [vmem:[#allocation4] sm:$0xf]
    %v306 = vlaneseq
    %v307 = vshrl.u32 %v306, 7
    %v308 = vsub.s32 0, %v307
    %v309 = vrot.slane %v304, %v308
    %v310 = vlaneseq
    %v311 = vshrl.u32 %v310, 7
    %v312 = vsub.s32 1, %v311
    %v313 = vrot.slane %v304, %v312
    %v314 = vlaneseq
    %v315 = vshrl.u32 %v314, 7
    %v316 = vsub.s32 2, %v315
    %v317 = vrot.slane %v304, %v316
    %v318 = vlaneseq
    %v319 = vshrl.u32 %v318, 7
    %v320 = vsub.s32 3, %v319
    %v321 = vrot.slane %v304, %v320
    %v334 = vunpack.c.l.b16 %v40
    %v335 = vunpack.c.h.b16 %v40
    %v336 = vunpack.c.l.b16 %v41
    %v337 = vunpack.c.h.b16 %v41
    %v338 = vunpack.c.l.b16 %v42
    %v339 = vunpack.c.h.b16 %v42
    %v340 = vunpack.c.l.b16 %v43
    %v341 = vunpack.c.h.b16 %v43
    %v342 = vunpack.c.l.b16 %v44
    %v343 = vunpack.c.h.b16 %v44
    %v344 = vunpack.c.l.b16 %v45
    %v345 = vunpack.c.h.b16 %v45
    %v346 = vunpack.c.l.b16 %v46
    %v347 = vunpack.c.h.b16 %v46
    %v348 = vunpack.c.l.b16 %v47
    %v349 = vunpack.c.h.b16 %v47
    %v350 = vpack.c.b16 %v342, %v334
    %v351 = vpack.c.b16 %v343, %v335
    %v352 = vpack.c.b16 %v344, %v336
    %v353 = vpack.c.b16 %v345, %v337
    %v354 = vpack.c.b16 %v346, %v338
    %v355 = vpack.c.b16 %v347, %v339
    %v356 = vpack.c.b16 %v348, %v340
    %v357 = vpack.c.b16 %v349, %v341
    %v622 = vunpack.c.l.b16 %v48
    %v623 = vunpack.c.h.b16 %v48
    %v624 = vunpack.c.l.b16 %v49
    %v625 = vunpack.c.h.b16 %v49
    %v626 = vunpack.c.l.b16 %v50
    %v627 = vunpack.c.h.b16 %v50
    %v628 = vunpack.c.l.b16 %v51
    %v629 = vunpack.c.h.b16 %v51
    %v630 = vunpack.c.l.b16 %v52
    %v631 = vunpack.c.h.b16 %v52
    %v632 = vunpack.c.l.b16 %v53
    %v633 = vunpack.c.h.b16 %v53
    %v634 = vunpack.c.l.b16 %v54
    %v635 = vunpack.c.h.b16 %v54
    %v636 = vunpack.c.l.b16 %v55
    %v637 = vunpack.c.h.b16 %v55
    %v638 = vunpack.c.l.b16 %v56
    %v639 = vunpack.c.h.b16 %v56
    %v640 = vunpack.c.l.b16 %v57
    %v641 = vunpack.c.h.b16 %v57
    %v642 = vunpack.c.l.b16 %v58
    %v643 = vunpack.c.h.b16 %v58
    %v644 = vunpack.c.l.b16 %v59
    %v645 = vunpack.c.h.b16 %v59
    %v646 = vunpack.c.l.b16 %v60
    %v647 = vunpack.c.h.b16 %v60
    %v648 = vunpack.c.l.b16 %v61
    %v649 = vunpack.c.h.b16 %v61
    %v650 = vunpack.c.l.b16 %v62
    %v651 = vunpack.c.h.b16 %v62
    %v652 = vunpack.c.l.b16 %v63
    %v653 = vunpack.c.h.b16 %v63
    %v654 = vunpack.c.l.b16 %v64
    %v655 = vunpack.c.h.b16 %v64
    %v656 = vunpack.c.l.b16 %v65
    %v657 = vunpack.c.h.b16 %v65
    %v658 = vunpack.c.l.b16 %v66
    %v659 = vunpack.c.h.b16 %v66
    %v660 = vunpack.c.l.b16 %v67
    %v661 = vunpack.c.h.b16 %v67
    %v662 = vunpack.c.l.b16 %v68
    %v663 = vunpack.c.h.b16 %v68
    %v664 = vunpack.c.l.b16 %v69
    %v665 = vunpack.c.h.b16 %v69
    %v666 = vunpack.c.l.b16 %v70
    %v667 = vunpack.c.h.b16 %v70
    %v668 = vunpack.c.l.b16 %v71
    %v669 = vunpack.c.h.b16 %v71
    %v670 = vunpack.c.l.b16 %v72
    %v671 = vunpack.c.h.b16 %v72
    %v672 = vunpack.c.l.b16 %v73
    %v673 = vunpack.c.h.b16 %v73
    %v674 = vunpack.c.l.b16 %v74
    %v675 = vunpack.c.h.b16 %v74
    %v676 = vunpack.c.l.b16 %v75
    %v677 = vunpack.c.h.b16 %v75
    %v678 = vunpack.c.l.b16 %v76
    %v679 = vunpack.c.h.b16 %v76
    %v680 = vunpack.c.l.b16 %v77
    %v681 = vunpack.c.h.b16 %v77
    %v682 = vunpack.c.l.b16 %v78
    %v683 = vunpack.c.h.b16 %v78
    %v684 = vunpack.c.l.b16 %v79
    %v685 = vunpack.c.h.b16 %v79
    %v686 = vunpack.c.l.b16 %v80
    %v687 = vunpack.c.h.b16 %v80
    %v688 = vunpack.c.l.b16 %v81
    %v689 = vunpack.c.h.b16 %v81
    %v690 = vunpack.c.l.b16 %v82
    %v691 = vunpack.c.h.b16 %v82
    %v692 = vunpack.c.l.b16 %v83
    %v693 = vunpack.c.h.b16 %v83
    %v694 = vunpack.c.l.b16 %v84
    %v695 = vunpack.c.h.b16 %v84
    %v696 = vunpack.c.l.b16 %v85
    %v697 = vunpack.c.h.b16 %v85
    %v698 = vunpack.c.l.b16 %v86
    %v699 = vunpack.c.h.b16 %v86
    %v700 = vunpack.c.l.b16 %v87
    %v701 = vunpack.c.h.b16 %v87
    %v702 = vunpack.c.l.b16 %v88
    %v703 = vunpack.c.h.b16 %v88
    %v704 = vunpack.c.l.b16 %v89
    %v705 = vunpack.c.h.b16 %v89
    %v706 = vunpack.c.l.b16 %v90
    %v707 = vunpack.c.h.b16 %v90
    %v708 = vunpack.c.l.b16 %v91
    %v709 = vunpack.c.h.b16 %v91
    %v710 = vunpack.c.l.b16 %v92
    %v711 = vunpack.c.h.b16 %v92
    %v712 = vunpack.c.l.b16 %v93
    %v713 = vunpack.c.h.b16 %v93
    %v714 = vunpack.c.l.b16 %v94
    %v715 = vunpack.c.h.b16 %v94
    %v716 = vunpack.c.l.b16 %v95
    %v717 = vunpack.c.h.b16 %v95
    %v718 = vunpack.c.l.b16 %v96
    %v719 = vunpack.c.h.b16 %v96
    %v720 = vunpack.c.l.b16 %v97
    %v721 = vunpack.c.h.b16 %v97
    %v722 = vunpack.c.l.b16 %v98
    %v723 = vunpack.c.h.b16 %v98
    %v724 = vunpack.c.l.b16 %v99
    %v725 = vunpack.c.h.b16 %v99
    %v726 = vunpack.c.l.b16 %v100
    %v727 = vunpack.c.h.b16 %v100
    %v728 = vunpack.c.l.b16 %v101
    %v729 = vunpack.c.h.b16 %v101
    %v730 = vunpack.c.l.b16 %v102
    %v731 = vunpack.c.h.b16 %v102
    %v732 = vunpack.c.l.b16 %v103
    %v733 = vunpack.c.h.b16 %v103
    %v734 = vunpack.c.l.b16 %v104
    %v735 = vunpack.c.h.b16 %v104
    %v736 = vunpack.c.l.b16 %v105
    %v737 = vunpack.c.h.b16 %v105
    %v738 = vunpack.c.l.b16 %v106
    %v739 = vunpack.c.h.b16 %v106
    %v740 = vunpack.c.l.b16 %v107
    %v741 = vunpack.c.h.b16 %v107
    %v742 = vunpack.c.l.b16 %v108
    %v743 = vunpack.c.h.b16 %v108
    %v744 = vunpack.c.l.b16 %v109
    %v745 = vunpack.c.h.b16 %v109
    %v746 = vunpack.c.l.b16 %v110
    %v747 = vunpack.c.h.b16 %v110
    %v748 = vunpack.c.l.b16 %v111
    %v749 = vunpack.c.h.b16 %v111
    %v750 = vunpack.c.l.b16 %v112
    %v751 = vunpack.c.h.b16 %v112
    %v752 = vunpack.c.l.b16 %v113
    %v753 = vunpack.c.h.b16 %v113
    %v754 = vunpack.c.l.b16 %v114
    %v755 = vunpack.c.h.b16 %v114
    %v756 = vunpack.c.l.b16 %v115
    %v757 = vunpack.c.h.b16 %v115
    %v758 = vunpack.c.l.b16 %v116
    %v759 = vunpack.c.h.b16 %v116
    %v760 = vunpack.c.l.b16 %v117
    %v761 = vunpack.c.h.b16 %v117
    %v762 = vunpack.c.l.b16 %v118
    %v763 = vunpack.c.h.b16 %v118
    %v764 = vunpack.c.l.b16 %v119
    %v765 = vunpack.c.h.b16 %v119
    %v766 = vunpack.c.l.b16 %v120
    %v767 = vunpack.c.h.b16 %v120
    %v768 = vunpack.c.l.b16 %v121
    %v769 = vunpack.c.h.b16 %v121
    %v770 = vunpack.c.l.b16 %v122
    %v771 = vunpack.c.h.b16 %v122
    %v772 = vunpack.c.l.b16 %v123
    %v773 = vunpack.c.h.b16 %v123
    %v774 = vunpack.c.l.b16 %v124
    %v775 = vunpack.c.h.b16 %v124
    %v776 = vunpack.c.l.b16 %v125
    %v777 = vunpack.c.h.b16 %v125
    %v778 = vunpack.c.l.b16 %v126
    %v779 = vunpack.c.h.b16 %v126
    %v780 = vunpack.c.l.b16 %v127
    %v781 = vunpack.c.h.b16 %v127
    %v782 = vunpack.c.l.b16 %v128
    %v783 = vunpack.c.h.b16 %v128
    %v784 = vunpack.c.l.b16 %v129
    %v785 = vunpack.c.h.b16 %v129
    %v786 = vunpack.c.l.b16 %v130
    %v787 = vunpack.c.h.b16 %v130
    %v788 = vunpack.c.l.b16 %v131
    %v789 = vunpack.c.h.b16 %v131
    %v790 = vunpack.c.l.b16 %v132
    %v791 = vunpack.c.h.b16 %v132
    %v792 = vunpack.c.l.b16 %v133
    %v793 = vunpack.c.h.b16 %v133
    %v794 = vunpack.c.l.b16 %v134
    %v795 = vunpack.c.h.b16 %v134
    %v796 = vunpack.c.l.b16 %v135
    %v797 = vunpack.c.h.b16 %v135
    %v798 = vunpack.c.l.b16 %v136
    %v799 = vunpack.c.h.b16 %v136
    %v800 = vunpack.c.l.b16 %v137
    %v801 = vunpack.c.h.b16 %v137
    %v802 = vunpack.c.l.b16 %v138
    %v803 = vunpack.c.h.b16 %v138
    %v804 = vunpack.c.l.b16 %v139
    %v805 = vunpack.c.h.b16 %v139
    %v806 = vunpack.c.l.b16 %v140
    %v807 = vunpack.c.h.b16 %v140
    %v808 = vunpack.c.l.b16 %v141
    %v809 = vunpack.c.h.b16 %v141
    %v810 = vunpack.c.l.b16 %v142
    %v811 = vunpack.c.h.b16 %v142
    %v812 = vunpack.c.l.b16 %v143
    %v813 = vunpack.c.h.b16 %v143
    %v814 = vunpack.c.l.b16 %v144
    %v815 = vunpack.c.h.b16 %v144
    %v816 = vunpack.c.l.b16 %v145
    %v817 = vunpack.c.h.b16 %v145
    %v818 = vunpack.c.l.b16 %v146
    %v819 = vunpack.c.h.b16 %v146
    %v820 = vunpack.c.l.b16 %v147
    %v821 = vunpack.c.h.b16 %v147
    %v822 = vunpack.c.l.b16 %v148
    %v823 = vunpack.c.h.b16 %v148
    %v824 = vunpack.c.l.b16 %v149
    %v825 = vunpack.c.h.b16 %v149
    %v826 = vunpack.c.l.b16 %v150
    %v827 = vunpack.c.h.b16 %v150
    %v828 = vunpack.c.l.b16 %v151
    %v829 = vunpack.c.h.b16 %v151
    %v830 = vunpack.c.l.b16 %v152
    %v831 = vunpack.c.h.b16 %v152
    %v832 = vunpack.c.l.b16 %v153
    %v833 = vunpack.c.h.b16 %v153
    %v834 = vunpack.c.l.b16 %v154
    %v835 = vunpack.c.h.b16 %v154
    %v836 = vunpack.c.l.b16 %v155
    %v837 = vunpack.c.h.b16 %v155
    %v838 = vunpack.c.l.b16 %v156
    %v839 = vunpack.c.h.b16 %v156
    %v840 = vunpack.c.l.b16 %v157
    %v841 = vunpack.c.h.b16 %v157
    %v842 = vunpack.c.l.b16 %v158
    %v843 = vunpack.c.h.b16 %v158
    %v844 = vunpack.c.l.b16 %v159
    %v845 = vunpack.c.h.b16 %v159
    %v846 = vunpack.c.l.b16 %v160
    %v847 = vunpack.c.h.b16 %v160
    %v848 = vunpack.c.l.b16 %v161
    %v849 = vunpack.c.h.b16 %v161
    %v850 = vunpack.c.l.b16 %v162
    %v851 = vunpack.c.h.b16 %v162
    %v852 = vunpack.c.l.b16 %v163
    %v853 = vunpack.c.h.b16 %v163
    %v854 = vunpack.c.l.b16 %v164
    %v855 = vunpack.c.h.b16 %v164
    %v856 = vunpack.c.l.b16 %v165
    %v857 = vunpack.c.h.b16 %v165
    %v858 = vunpack.c.l.b16 %v166
    %v859 = vunpack.c.h.b16 %v166
    %v860 = vunpack.c.l.b16 %v167
    %v861 = vunpack.c.h.b16 %v167
    %v862 = vunpack.c.l.b16 %v168
    %v863 = vunpack.c.h.b16 %v168
    %v864 = vunpack.c.l.b16 %v169
    %v865 = vunpack.c.h.b16 %v169
    %v866 = vunpack.c.l.b16 %v170
    %v867 = vunpack.c.h.b16 %v170
    %v868 = vunpack.c.l.b16 %v171
    %v869 = vunpack.c.h.b16 %v171
    %v870 = vunpack.c.l.b16 %v172
    %v871 = vunpack.c.h.b16 %v172
    %v872 = vunpack.c.l.b16 %v173
    %v873 = vunpack.c.h.b16 %v173
    %v874 = vunpack.c.l.b16 %v174
    %v875 = vunpack.c.h.b16 %v174
    %v876 = vunpack.c.l.b16 %v175
    %v877 = vunpack.c.h.b16 %v175
    %v878 = vunpack.c.l.b16 %v176
    %v879 = vunpack.c.h.b16 %v176
    %v880 = vunpack.c.l.b16 %v177
    %v881 = vunpack.c.h.b16 %v177
    %v882 = vunpack.c.l.b16 %v178
    %v883 = vunpack.c.h.b16 %v178
    %v884 = vunpack.c.l.b16 %v179
    %v885 = vunpack.c.h.b16 %v179
    %v886 = vunpack.c.l.b16 %v180
    %v887 = vunpack.c.h.b16 %v180
    %v888 = vunpack.c.l.b16 %v181
    %v889 = vunpack.c.h.b16 %v181
    %v890 = vunpack.c.l.b16 %v182
    %v891 = vunpack.c.h.b16 %v182
    %v892 = vunpack.c.l.b16 %v183
    %v893 = vunpack.c.h.b16 %v183
    %v894 = vunpack.c.l.b16 %v184
    %v895 = vunpack.c.h.b16 %v184
    %v896 = vunpack.c.l.b16 %v185
    %v897 = vunpack.c.h.b16 %v185
    %v898 = vunpack.c.l.b16 %v186
    %v899 = vunpack.c.h.b16 %v186
    %v900 = vunpack.c.l.b16 %v187
    %v901 = vunpack.c.h.b16 %v187
    %v902 = vunpack.c.l.b16 %v188
    %v903 = vunpack.c.h.b16 %v188
    %v904 = vunpack.c.l.b16 %v189
    %v905 = vunpack.c.h.b16 %v189
    %v906 = vunpack.c.l.b16 %v190
    %v907 = vunpack.c.h.b16 %v190
    %v908 = vunpack.c.l.b16 %v191
    %v909 = vunpack.c.h.b16 %v191
    %v910 = vunpack.c.l.b16 %v192
    %v911 = vunpack.c.h.b16 %v192
    %v912 = vunpack.c.l.b16 %v193
    %v913 = vunpack.c.h.b16 %v193
    %v914 = vunpack.c.l.b16 %v194
    %v915 = vunpack.c.h.b16 %v194
    %v916 = vunpack.c.l.b16 %v195
    %v917 = vunpack.c.h.b16 %v195
    %v918 = vunpack.c.l.b16 %v196
    %v919 = vunpack.c.h.b16 %v196
    %v920 = vunpack.c.l.b16 %v197
    %v921 = vunpack.c.h.b16 %v197
    %v922 = vunpack.c.l.b16 %v198
    %v923 = vunpack.c.h.b16 %v198
    %v924 = vunpack.c.l.b16 %v199
    %v925 = vunpack.c.h.b16 %v199
    %v926 = vunpack.c.l.b16 %v200
    %v927 = vunpack.c.h.b16 %v200
    %v928 = vunpack.c.l.b16 %v201
    %v929 = vunpack.c.h.b16 %v201
    %v930 = vunpack.c.l.b16 %v202
    %v931 = vunpack.c.h.b16 %v202
    %v932 = vunpack.c.l.b16 %v203
    %v933 = vunpack.c.h.b16 %v203
    %v934 = vunpack.c.l.b16 %v204
    %v935 = vunpack.c.h.b16 %v204
    %v936 = vunpack.c.l.b16 %v205
    %v937 = vunpack.c.h.b16 %v205
    %v938 = vunpack.c.l.b16 %v206
    %v939 = vunpack.c.h.b16 %v206
    %v940 = vunpack.c.l.b16 %v207
    %v941 = vunpack.c.h.b16 %v207
    %v942 = vunpack.c.l.b16 %v208
    %v943 = vunpack.c.h.b16 %v208
    %v944 = vunpack.c.l.b16 %v209
    %v945 = vunpack.c.h.b16 %v209
    %v946 = vunpack.c.l.b16 %v210
    %v947 = vunpack.c.h.b16 %v210
    %v948 = vunpack.c.l.b16 %v211
    %v949 = vunpack.c.h.b16 %v211
    %v950 = vunpack.c.l.b16 %v212
    %v951 = vunpack.c.h.b16 %v212
    %v952 = vunpack.c.l.b16 %v213
    %v953 = vunpack.c.h.b16 %v213
    %v954 = vunpack.c.l.b16 %v214
    %v955 = vunpack.c.h.b16 %v214
    %v956 = vunpack.c.l.b16 %v215
    %v957 = vunpack.c.h.b16 %v215
    %v958 = vunpack.c.l.b16 %v216
    %v959 = vunpack.c.h.b16 %v216
    %v960 = vunpack.c.l.b16 %v217
    %v961 = vunpack.c.h.b16 %v217
    %v962 = vunpack.c.l.b16 %v218
    %v963 = vunpack.c.h.b16 %v218
    %v964 = vunpack.c.l.b16 %v219
    %v965 = vunpack.c.h.b16 %v219
    %v966 = vunpack.c.l.b16 %v220
    %v967 = vunpack.c.h.b16 %v220
    %v968 = vunpack.c.l.b16 %v221
    %v969 = vunpack.c.h.b16 %v221
    %v970 = vunpack.c.l.b16 %v222
    %v971 = vunpack.c.h.b16 %v222
    %v972 = vunpack.c.l.b16 %v223
    %v973 = vunpack.c.h.b16 %v223
    %v974 = vunpack.c.l.b16 %v224
    %v975 = vunpack.c.h.b16 %v224
    %v976 = vunpack.c.l.b16 %v225
    %v977 = vunpack.c.h.b16 %v225
    %v978 = vunpack.c.l.b16 %v226
    %v979 = vunpack.c.h.b16 %v226
    %v980 = vunpack.c.l.b16 %v227
    %v981 = vunpack.c.h.b16 %v227
    %v982 = vunpack.c.l.b16 %v228
    %v983 = vunpack.c.h.b16 %v228
    %v984 = vunpack.c.l.b16 %v229
    %v985 = vunpack.c.h.b16 %v229
    %v986 = vunpack.c.l.b16 %v230
    %v987 = vunpack.c.h.b16 %v230
    %v988 = vunpack.c.l.b16 %v231
    %v989 = vunpack.c.h.b16 %v231
    %v990 = vunpack.c.l.b16 %v232
    %v991 = vunpack.c.h.b16 %v232
    %v992 = vunpack.c.l.b16 %v233
    %v993 = vunpack.c.h.b16 %v233
    %v994 = vunpack.c.l.b16 %v234
    %v995 = vunpack.c.h.b16 %v234
    %v996 = vunpack.c.l.b16 %v235
    %v997 = vunpack.c.h.b16 %v235
    %v998 = vunpack.c.l.b16 %v236
    %v999 = vunpack.c.h.b16 %v236
    %v1000 = vunpack.c.l.b16 %v237
    %v1001 = vunpack.c.h.b16 %v237
    %v1002 = vunpack.c.l.b16 %v238
    %v1003 = vunpack.c.h.b16 %v238
    %v1004 = vunpack.c.l.b16 %v239
    %v1005 = vunpack.c.h.b16 %v239
    %v1006 = vunpack.c.l.b16 %v240
    %v1007 = vunpack.c.h.b16 %v240
    %v1008 = vunpack.c.l.b16 %v241
    %v1009 = vunpack.c.h.b16 %v241
    %v1010 = vunpack.c.l.b16 %v242
    %v1011 = vunpack.c.h.b16 %v242
    %v1012 = vunpack.c.l.b16 %v243
    %v1013 = vunpack.c.h.b16 %v243
    %v1014 = vunpack.c.l.b16 %v244
    %v1015 = vunpack.c.h.b16 %v244
    %v1016 = vunpack.c.l.b16 %v245
    %v1017 = vunpack.c.h.b16 %v245
    %v1018 = vunpack.c.l.b16 %v246
    %v1019 = vunpack.c.h.b16 %v246
    %v1020 = vunpack.c.l.b16 %v247
    %v1021 = vunpack.c.h.b16 %v247
    %v1022 = vunpack.c.l.b16 %v248
    %v1023 = vunpack.c.h.b16 %v248
    %v1024 = vunpack.c.l.b16 %v249
    %v1025 = vunpack.c.h.b16 %v249
    %v1026 = vunpack.c.l.b16 %v250
    %v1027 = vunpack.c.h.b16 %v250
    %v1028 = vunpack.c.l.b16 %v251
    %v1029 = vunpack.c.h.b16 %v251
    %v1030 = vunpack.c.l.b16 %v252
    %v1031 = vunpack.c.h.b16 %v252
    %v1032 = vunpack.c.l.b16 %v253
    %v1033 = vunpack.c.h.b16 %v253
    %v1034 = vunpack.c.l.b16 %v254
    %v1035 = vunpack.c.h.b16 %v254
    %v1036 = vunpack.c.l.b16 %v255
    %v1037 = vunpack.c.h.b16 %v255
    %v1038 = vunpack.c.l.b16 %v256
    %v1039 = vunpack.c.h.b16 %v256
    %v1040 = vunpack.c.l.b16 %v257
    %v1041 = vunpack.c.h.b16 %v257
    %v1042 = vunpack.c.l.b16 %v258
    %v1043 = vunpack.c.h.b16 %v258
    %v1044 = vunpack.c.l.b16 %v259
    %v1045 = vunpack.c.h.b16 %v259
    %v1046 = vunpack.c.l.b16 %v260
    %v1047 = vunpack.c.h.b16 %v260
    %v1048 = vunpack.c.l.b16 %v261
    %v1049 = vunpack.c.h.b16 %v261
    %v1050 = vunpack.c.l.b16 %v262
    %v1051 = vunpack.c.h.b16 %v262
    %v1052 = vunpack.c.l.b16 %v263
    %v1053 = vunpack.c.h.b16 %v263
    %v1054 = vunpack.c.l.b16 %v264
    %v1055 = vunpack.c.h.b16 %v264
    %v1056 = vunpack.c.l.b16 %v265
    %v1057 = vunpack.c.h.b16 %v265
    %v1058 = vunpack.c.l.b16 %v266
    %v1059 = vunpack.c.h.b16 %v266
    %v1060 = vunpack.c.l.b16 %v267
    %v1061 = vunpack.c.h.b16 %v267
    %v1062 = vunpack.c.l.b16 %v268
    %v1063 = vunpack.c.h.b16 %v268
    %v1064 = vunpack.c.l.b16 %v269
    %v1065 = vunpack.c.h.b16 %v269
    %v1066 = vunpack.c.l.b16 %v270
    %v1067 = vunpack.c.h.b16 %v270
    %v1068 = vunpack.c.l.b16 %v271
    %v1069 = vunpack.c.h.b16 %v271
    %v1070 = vunpack.c.l.b16 %v272
    %v1071 = vunpack.c.h.b16 %v272
    %v1072 = vunpack.c.l.b16 %v273
    %v1073 = vunpack.c.h.b16 %v273
    %v1074 = vunpack.c.l.b16 %v274
    %v1075 = vunpack.c.h.b16 %v274
    %v1076 = vunpack.c.l.b16 %v275
    %v1077 = vunpack.c.h.b16 %v275
    %v1078 = vunpack.c.l.b16 %v276
    %v1079 = vunpack.c.h.b16 %v276
    %v1080 = vunpack.c.l.b16 %v277
    %v1081 = vunpack.c.h.b16 %v277
    %v1082 = vunpack.c.l.b16 %v278
    %v1083 = vunpack.c.h.b16 %v278
    %v1084 = vunpack.c.l.b16 %v279
    %v1085 = vunpack.c.h.b16 %v279
    %v1086 = vunpack.c.l.b16 %v280
    %v1087 = vunpack.c.h.b16 %v280
    %v1088 = vunpack.c.l.b16 %v281
    %v1089 = vunpack.c.h.b16 %v281
    %v1090 = vunpack.c.l.b16 %v282
    %v1091 = vunpack.c.h.b16 %v282
    %v1092 = vunpack.c.l.b16 %v283
    %v1093 = vunpack.c.h.b16 %v283
    %v1094 = vunpack.c.l.b16 %v284
    %v1095 = vunpack.c.h.b16 %v284
    %v1096 = vunpack.c.l.b16 %v285
    %v1097 = vunpack.c.h.b16 %v285
    %v1098 = vunpack.c.l.b16 %v286
    %v1099 = vunpack.c.h.b16 %v286
    %v1100 = vunpack.c.l.b16 %v287
    %v1101 = vunpack.c.h.b16 %v287
    %v1102 = vunpack.c.l.b16 %v288
    %v1103 = vunpack.c.h.b16 %v288
    %v1104 = vunpack.c.l.b16 %v289
    %v1105 = vunpack.c.h.b16 %v289
    %v1106 = vunpack.c.l.b16 %v290
    %v1107 = vunpack.c.h.b16 %v290
    %v1108 = vunpack.c.l.b16 %v291
    %v1109 = vunpack.c.h.b16 %v291
    %v1110 = vunpack.c.l.b16 %v292
    %v1111 = vunpack.c.h.b16 %v292
    %v1112 = vunpack.c.l.b16 %v293
    %v1113 = vunpack.c.h.b16 %v293
    %v1114 = vunpack.c.l.b16 %v294
    %v1115 = vunpack.c.h.b16 %v294
    %v1116 = vunpack.c.l.b16 %v295
    %v1117 = vunpack.c.h.b16 %v295
    %v1118 = vunpack.c.l.b16 %v296
    %v1119 = vunpack.c.h.b16 %v296
    %v1120 = vunpack.c.l.b16 %v297
    %v1121 = vunpack.c.h.b16 %v297
    %v1122 = vunpack.c.l.b16 %v298
    %v1123 = vunpack.c.h.b16 %v298
    %v1124 = vunpack.c.l.b16 %v299
    %v1125 = vunpack.c.h.b16 %v299
    %v1126 = vunpack.c.l.b16 %v300
    %v1127 = vunpack.c.h.b16 %v300
    %v1128 = vunpack.c.l.b16 %v301
    %v1129 = vunpack.c.h.b16 %v301
    %v1130 = vunpack.c.l.b16 %v302
    %v1131 = vunpack.c.h.b16 %v302
    %v1132 = vunpack.c.l.b16 %v303
    %v1133 = vunpack.c.h.b16 %v303
    %v1134 = vpack.c.b16 %v626, %v622
    %v1135 = vpack.c.b16 %v627, %v623
    %v1136 = vpack.c.b16 %v628, %v624
    %v1137 = vpack.c.b16 %v629, %v625
    %v1138 = vpack.c.b16 %v634, %v630
    %v1139 = vpack.c.b16 %v635, %v631
    %v1140 = vpack.c.b16 %v636, %v632
    %v1141 = vpack.c.b16 %v637, %v633
    %v1142 = vpack.c.b16 %v642, %v638
    %v1143 = vpack.c.b16 %v643, %v639
    %v1144 = vpack.c.b16 %v644, %v640
    %v1145 = vpack.c.b16 %v645, %v641
    %v1146 = vpack.c.b16 %v650, %v646
    %v1147 = vpack.c.b16 %v651, %v647
    %v1148 = vpack.c.b16 %v652, %v648
    %v1149 = vpack.c.b16 %v653, %v649
    %v1150 = vpack.c.b16 %v658, %v654
    %v1151 = vpack.c.b16 %v659, %v655
    %v1152 = vpack.c.b16 %v660, %v656
    %v1153 = vpack.c.b16 %v661, %v657
    %v1154 = vpack.c.b16 %v666, %v662
    %v1155 = vpack.c.b16 %v667, %v663
    %v1156 = vpack.c.b16 %v668, %v664
    %v1157 = vpack.c.b16 %v669, %v665
    %v1158 = vpack.c.b16 %v674, %v670
    %v1159 = vpack.c.b16 %v675, %v671
    %v1160 = vpack.c.b16 %v676, %v672
    %v1161 = vpack.c.b16 %v677, %v673
    %v1162 = vpack.c.b16 %v682, %v678
    %v1163 = vpack.c.b16 %v683, %v679
    %v1164 = vpack.c.b16 %v684, %v680
    %v1165 = vpack.c.b16 %v685, %v681
    %v1166 = vpack.c.b16 %v690, %v686
    %v1167 = vpack.c.b16 %v691, %v687
    %v1168 = vpack.c.b16 %v692, %v688
    %v1169 = vpack.c.b16 %v693, %v689
    %v1170 = vpack.c.b16 %v698, %v694
    %v1171 = vpack.c.b16 %v699, %v695
    %v1172 = vpack.c.b16 %v700, %v696
    %v1173 = vpack.c.b16 %v701, %v697
    %v1174 = vpack.c.b16 %v706, %v702
    %v1175 = vpack.c.b16 %v707, %v703
    %v1176 = vpack.c.b16 %v708, %v704
    %v1177 = vpack.c.b16 %v709, %v705
    %v1178 = vpack.c.b16 %v714, %v710
    %v1179 = vpack.c.b16 %v715, %v711
    %v1180 = vpack.c.b16 %v716, %v712
    %v1181 = vpack.c.b16 %v717, %v713
    %v1182 = vpack.c.b16 %v722, %v718
    %v1183 = vpack.c.b16 %v723, %v719
    %v1184 = vpack.c.b16 %v724, %v720
    %v1185 = vpack.c.b16 %v725, %v721
    %v1186 = vpack.c.b16 %v730, %v726
    %v1187 = vpack.c.b16 %v731, %v727
    %v1188 = vpack.c.b16 %v732, %v728
    %v1189 = vpack.c.b16 %v733, %v729
    %v1190 = vpack.c.b16 %v738, %v734
    %v1191 = vpack.c.b16 %v739, %v735
    %v1192 = vpack.c.b16 %v740, %v736
    %v1193 = vpack.c.b16 %v741, %v737
    %v1194 = vpack.c.b16 %v746, %v742
    %v1195 = vpack.c.b16 %v747, %v743
    %v1196 = vpack.c.b16 %v748, %v744
    %v1197 = vpack.c.b16 %v749, %v745
    %v1198 = vpack.c.b16 %v754, %v750
    %v1199 = vpack.c.b16 %v755, %v751
    %v1200 = vpack.c.b16 %v756, %v752
    %v1201 = vpack.c.b16 %v757, %v753
    %v1202 = vpack.c.b16 %v762, %v758
    %v1203 = vpack.c.b16 %v763, %v759
    %v1204 = vpack.c.b16 %v764, %v760
    %v1205 = vpack.c.b16 %v765, %v761
    %v1206 = vpack.c.b16 %v770, %v766
    %v1207 = vpack.c.b16 %v771, %v767
    %v1208 = vpack.c.b16 %v772, %v768
    %v1209 = vpack.c.b16 %v773, %v769
    %v1210 = vpack.c.b16 %v778, %v774
    %v1211 = vpack.c.b16 %v779, %v775
    %v1212 = vpack.c.b16 %v780, %v776
    %v1213 = vpack.c.b16 %v781, %v777
    %v1214 = vpack.c.b16 %v786, %v782
    %v1215 = vpack.c.b16 %v787, %v783
    %v1216 = vpack.c.b16 %v788, %v784
    %v1217 = vpack.c.b16 %v789, %v785
    %v1218 = vpack.c.b16 %v794, %v790
    %v1219 = vpack.c.b16 %v795, %v791
    %v1220 = vpack.c.b16 %v796, %v792
    %v1221 = vpack.c.b16 %v797, %v793
    %v1222 = vpack.c.b16 %v802, %v798
    %v1223 = vpack.c.b16 %v803, %v799
    %v1224 = vpack.c.b16 %v804, %v800
    %v1225 = vpack.c.b16 %v805, %v801
    %v1226 = vpack.c.b16 %v810, %v806
    %v1227 = vpack.c.b16 %v811, %v807
    %v1228 = vpack.c.b16 %v812, %v808
    %v1229 = vpack.c.b16 %v813, %v809
    %v1230 = vpack.c.b16 %v818, %v814
    %v1231 = vpack.c.b16 %v819, %v815
    %v1232 = vpack.c.b16 %v820, %v816
    %v1233 = vpack.c.b16 %v821, %v817
    %v1234 = vpack.c.b16 %v826, %v822
    %v1235 = vpack.c.b16 %v827, %v823
    %v1236 = vpack.c.b16 %v828, %v824
    %v1237 = vpack.c.b16 %v829, %v825
    %v1238 = vpack.c.b16 %v834, %v830
    %v1239 = vpack.c.b16 %v835, %v831
    %v1240 = vpack.c.b16 %v836, %v832
    %v1241 = vpack.c.b16 %v837, %v833
    %v1242 = vpack.c.b16 %v842, %v838
    %v1243 = vpack.c.b16 %v843, %v839
    %v1244 = vpack.c.b16 %v844, %v840
    %v1245 = vpack.c.b16 %v845, %v841
    %v1246 = vpack.c.b16 %v850, %v846
    %v1247 = vpack.c.b16 %v851, %v847
    %v1248 = vpack.c.b16 %v852, %v848
    %v1249 = vpack.c.b16 %v853, %v849
    %v1250 = vpack.c.b16 %v858, %v854
    %v1251 = vpack.c.b16 %v859, %v855
    %v1252 = vpack.c.b16 %v860, %v856
    %v1253 = vpack.c.b16 %v861, %v857
    %v1254 = vpack.c.b16 %v866, %v862
    %v1255 = vpack.c.b16 %v867, %v863
    %v1256 = vpack.c.b16 %v868, %v864
    %v1257 = vpack.c.b16 %v869, %v865
    %v1258 = vpack.c.b16 %v874, %v870
    %v1259 = vpack.c.b16 %v875, %v871
    %v1260 = vpack.c.b16 %v876, %v872
    %v1261 = vpack.c.b16 %v877, %v873
    %v1262 = vpack.c.b16 %v882, %v878
    %v1263 = vpack.c.b16 %v883, %v879
    %v1264 = vpack.c.b16 %v884, %v880
    %v1265 = vpack.c.b16 %v885, %v881
    %v1266 = vpack.c.b16 %v890, %v886
    %v1267 = vpack.c.b16 %v891, %v887
    %v1268 = vpack.c.b16 %v892, %v888
    %v1269 = vpack.c.b16 %v893, %v889
    %v1270 = vpack.c.b16 %v898, %v894
    %v1271 = vpack.c.b16 %v899, %v895
    %v1272 = vpack.c.b16 %v900, %v896
    %v1273 = vpack.c.b16 %v901, %v897
    %v1274 = vpack.c.b16 %v906, %v902
    %v1275 = vpack.c.b16 %v907, %v903
    %v1276 = vpack.c.b16 %v908, %v904
    %v1277 = vpack.c.b16 %v909, %v905
    %v1278 = vpack.c.b16 %v914, %v910
    %v1279 = vpack.c.b16 %v915, %v911
    %v1280 = vpack.c.b16 %v916, %v912
    %v1281 = vpack.c.b16 %v917, %v913
    %v1282 = vpack.c.b16 %v922, %v918
    %v1283 = vpack.c.b16 %v923, %v919
    %v1284 = vpack.c.b16 %v924, %v920
    %v1285 = vpack.c.b16 %v925, %v921
    %v1286 = vpack.c.b16 %v930, %v926
    %v1287 = vpack.c.b16 %v931, %v927
    %v1288 = vpack.c.b16 %v932, %v928
    %v1289 = vpack.c.b16 %v933, %v929
    %v1290 = vpack.c.b16 %v938, %v934
    %v1291 = vpack.c.b16 %v939, %v935
    %v1292 = vpack.c.b16 %v940, %v936
    %v1293 = vpack.c.b16 %v941, %v937
    %v1294 = vpack.c.b16 %v946, %v942
    %v1295 = vpack.c.b16 %v947, %v943
    %v1296 = vpack.c.b16 %v948, %v944
    %v1297 = vpack.c.b16 %v949, %v945
    %v1298 = vpack.c.b16 %v954, %v950
    %v1299 = vpack.c.b16 %v955, %v951
    %v1300 = vpack.c.b16 %v956, %v952
    %v1301 = vpack.c.b16 %v957, %v953
    %v1302 = vpack.c.b16 %v962, %v958
    %v1303 = vpack.c.b16 %v963, %v959
    %v1304 = vpack.c.b16 %v964, %v960
    %v1305 = vpack.c.b16 %v965, %v961
    %v1306 = vpack.c.b16 %v970, %v966
    %v1307 = vpack.c.b16 %v971, %v967
    %v1308 = vpack.c.b16 %v972, %v968
    %v1309 = vpack.c.b16 %v973, %v969
    %v1310 = vpack.c.b16 %v978, %v974
    %v1311 = vpack.c.b16 %v979, %v975
    %v1312 = vpack.c.b16 %v980, %v976
    %v1313 = vpack.c.b16 %v981, %v977
    %v1314 = vpack.c.b16 %v986, %v982
    %v1315 = vpack.c.b16 %v987, %v983
    %v1316 = vpack.c.b16 %v988, %v984
    %v1317 = vpack.c.b16 %v989, %v985
    %v1318 = vpack.c.b16 %v994, %v990
    %v1319 = vpack.c.b16 %v995, %v991
    %v1320 = vpack.c.b16 %v996, %v992
    %v1321 = vpack.c.b16 %v997, %v993
    %v1322 = vpack.c.b16 %v1002, %v998
    %v1323 = vpack.c.b16 %v1003, %v999
    %v1324 = vpack.c.b16 %v1004, %v1000
    %v1325 = vpack.c.b16 %v1005, %v1001
    %v1326 = vpack.c.b16 %v1010, %v1006
    %v1327 = vpack.c.b16 %v1011, %v1007
    %v1328 = vpack.c.b16 %v1012, %v1008
    %v1329 = vpack.c.b16 %v1013, %v1009
    %v1330 = vpack.c.b16 %v1018, %v1014
    %v1331 = vpack.c.b16 %v1019, %v1015
    %v1332 = vpack.c.b16 %v1020, %v1016
    %v1333 = vpack.c.b16 %v1021, %v1017
    %v1334 = vpack.c.b16 %v1026, %v1022
    %v1335 = vpack.c.b16 %v1027, %v1023
    %v1336 = vpack.c.b16 %v1028, %v1024
    %v1337 = vpack.c.b16 %v1029, %v1025
    %v1338 = vpack.c.b16 %v1034, %v1030
    %v1339 = vpack.c.b16 %v1035, %v1031
    %v1340 = vpack.c.b16 %v1036, %v1032
    %v1341 = vpack.c.b16 %v1037, %v1033
    %v1342 = vpack.c.b16 %v1042, %v1038
    %v1343 = vpack.c.b16 %v1043, %v1039
    %v1344 = vpack.c.b16 %v1044, %v1040
    %v1345 = vpack.c.b16 %v1045, %v1041
    %v1346 = vpack.c.b16 %v1050, %v1046
    %v1347 = vpack.c.b16 %v1051, %v1047
    %v1348 = vpack.c.b16 %v1052, %v1048
    %v1349 = vpack.c.b16 %v1053, %v1049
    %v1350 = vpack.c.b16 %v1058, %v1054
    %v1351 = vpack.c.b16 %v1059, %v1055
    %v1352 = vpack.c.b16 %v1060, %v1056
    %v1353 = vpack.c.b16 %v1061, %v1057
    %v1354 = vpack.c.b16 %v1066, %v1062
    %v1355 = vpack.c.b16 %v1067, %v1063
    %v1356 = vpack.c.b16 %v1068, %v1064
    %v1357 = vpack.c.b16 %v1069, %v1065
    %v1358 = vpack.c.b16 %v1074, %v1070
    %v1359 = vpack.c.b16 %v1075, %v1071
    %v1360 = vpack.c.b16 %v1076, %v1072
    %v1361 = vpack.c.b16 %v1077, %v1073
    %v1362 = vpack.c.b16 %v1082, %v1078
    %v1363 = vpack.c.b16 %v1083, %v1079
    %v1364 = vpack.c.b16 %v1084, %v1080
    %v1365 = vpack.c.b16 %v1085, %v1081
    %v1366 = vpack.c.b16 %v1090, %v1086
    %v1367 = vpack.c.b16 %v1091, %v1087
    %v1368 = vpack.c.b16 %v1092, %v1088
    %v1369 = vpack.c.b16 %v1093, %v1089
    %v1370 = vpack.c.b16 %v1098, %v1094
    %v1371 = vpack.c.b16 %v1099, %v1095
    %v1372 = vpack.c.b16 %v1100, %v1096
    %v1373 = vpack.c.b16 %v1101, %v1097
    %v1374 = vpack.c.b16 %v1106, %v1102
    %v1375 = vpack.c.b16 %v1107, %v1103
    %v1376 = vpack.c.b16 %v1108, %v1104
    %v1377 = vpack.c.b16 %v1109, %v1105
    %v1378 = vpack.c.b16 %v1114, %v1110
    %v1379 = vpack.c.b16 %v1115, %v1111
    %v1380 = vpack.c.b16 %v1116, %v1112
    %v1381 = vpack.c.b16 %v1117, %v1113
    %v1382 = vpack.c.b16 %v1122, %v1118
    %v1383 = vpack.c.b16 %v1123, %v1119
    %v1384 = vpack.c.b16 %v1124, %v1120
    %v1385 = vpack.c.b16 %v1125, %v1121
    %v1386 = vpack.c.b16 %v1130, %v1126
    %v1387 = vpack.c.b16 %v1131, %v1127
    %v1388 = vpack.c.b16 %v1132, %v1128
    %v1389 = vpack.c.b16 %v1133, %v1129
    %1646 = vmatprep.subr.bf16.mxu0 %v1163
    %1647 = vmatpush1.bf16.msra.mxu0 %v1162
    %1648 = vmatprep.subr.bf16.mxu0 %v1159
    %1649 = vmatpush1.bf16.msra.mxu0 %v1158
    %1650 = vmatprep.subr.bf16.mxu0 %v1155
    %1651 = vmatpush1.bf16.msra.mxu0 %v1154
    %1652 = vmatprep.subr.bf16.mxu0 %v1151
    %1653 = vmatpush1.bf16.msra.mxu0 %v1150
    %1654 = vmatprep.subr.bf16.mxu0 %v1147
    %1655 = vmatpush1.bf16.msra.mxu0 %v1146
    %1656 = vmatprep.subr.bf16.mxu0 %v1143
    %1657 = vmatpush1.bf16.msra.mxu0 %v1142
    %1658 = vmatprep.subr.bf16.mxu0 %v1139
    %1659 = vmatpush1.bf16.msra.mxu0 %v1138
    %1660 = vmatprep.subr.bf16.mxu0 %v1135
    %1661 = vmatpush1.bf16.msra.mxu0 %v1134
    %1662 = vmatprep.subr.bf16.mxu0 %v1195
    %1663 = vmatpush2.bf16.msra.mxu0 %v1194
    %1664 = vmatprep.subr.bf16.mxu0 %v1191
    %1665 = vmatpush2.bf16.msra.mxu0 %v1190
    %1666 = vmatprep.subr.bf16.mxu0 %v1187
    %1667 = vmatpush2.bf16.msra.mxu0 %v1186
    %1668 = vmatprep.subr.bf16.mxu0 %v1183
    %1669 = vmatpush2.bf16.msra.mxu0 %v1182
    %1670 = vmatprep.subr.bf16.mxu0 %v1179
    %1671 = vmatpush2.bf16.msra.mxu0 %v1178
    %1672 = vmatprep.subr.bf16.mxu0 %v1175
    %1673 = vmatpush2.bf16.msra.mxu0 %v1174
    %1674 = vmatprep.subr.bf16.mxu0 %v1171
    %1675 = vmatpush2.bf16.msra.mxu0 %v1170
    %1676 = vmatprep.subr.bf16.mxu0 %v1167
    %1677 = vmatpush2.bf16.msra.mxu0 %v1166
    %1678 = vmatprep.mubr.bf16.mxu0 %v351
    %1679 = vmatmul.mubr.bf16.gmra.mxu0 %v350
    %v1680 = vpop.f32.mrf.mxu0
    %v1681 = vadd.f32 %v309, %v1680
    %v1682 = vpop.f32.mrf.mxu0
    %v1683 = vadd.f32 %v313, %v1682
    %v1684 = vpop.f32.mrf.mxu0
    %v1685 = vadd.f32 %v309, %v1684
    %v1686 = vpop.f32.mrf.mxu0
    %v1687 = vadd.f32 %v313, %v1686
    %1688 = vdwg.mxu0
    %1689 = vmatprep.subr.bf16.mxu0 %v1227
    %1690 = vmatpush1.bf16.msra.mxu0 %v1226
    %1691 = vmatprep.subr.bf16.mxu0 %v1223
    %1692 = vmatpush1.bf16.msra.mxu0 %v1222
    %1693 = vmatprep.subr.bf16.mxu0 %v1219
    %1694 = vmatpush1.bf16.msra.mxu0 %v1218
    %1695 = vmatprep.subr.bf16.mxu0 %v1215
    %1696 = vmatpush1.bf16.msra.mxu0 %v1214
    %1697 = vmatprep.subr.bf16.mxu0 %v1211
    %1698 = vmatpush1.bf16.msra.mxu0 %v1210
    %1699 = vmatprep.subr.bf16.mxu0 %v1207
    %1700 = vmatpush1.bf16.msra.mxu0 %v1206
    %1701 = vmatprep.subr.bf16.mxu0 %v1203
    %1702 = vmatpush1.bf16.msra.mxu0 %v1202
    %1703 = vmatprep.subr.bf16.mxu0 %v1199
    %1704 = vmatpush1.bf16.msra.mxu0 %v1198
    %1705 = vmatprep.subr.bf16.mxu0 %v1259
    %1706 = vmatpush2.bf16.msra.mxu0 %v1258
    %1707 = vmatprep.subr.bf16.mxu0 %v1255
    %1708 = vmatpush2.bf16.msra.mxu0 %v1254
    %1709 = vmatprep.subr.bf16.mxu0 %v1251
    %1710 = vmatpush2.bf16.msra.mxu0 %v1250
    %1711 = vmatprep.subr.bf16.mxu0 %v1247
    %1712 = vmatpush2.bf16.msra.mxu0 %v1246
    %1713 = vmatprep.subr.bf16.mxu0 %v1243
    %1714 = vmatpush2.bf16.msra.mxu0 %v1242
    %1715 = vmatprep.subr.bf16.mxu0 %v1239
    %1716 = vmatpush2.bf16.msra.mxu0 %v1238
    %1717 = vmatprep.subr.bf16.mxu0 %v1235
    %1718 = vmatpush2.bf16.msra.mxu0 %v1234
    %1719 = vmatprep.subr.bf16.mxu0 %v1231
    %1720 = vmatpush2.bf16.msra.mxu0 %v1230
    %1721 = vmatprep.mubr.bf16.mxu0 %v353
    %1722 = vmatmul.mubr.bf16.gmra.mxu0 %v352
    %v1723 = vpop.f32.mrf.mxu0
    %v1724 = vadd.f32 %v1681, %v1723
    %v1725 = vpop.f32.mrf.mxu0
    %v1726 = vadd.f32 %v1683, %v1725
    %v1727 = vpop.f32.mrf.mxu0
    %v1728 = vadd.f32 %v1685, %v1727
    %v1729 = vpop.f32.mrf.mxu0
    %v1730 = vadd.f32 %v1687, %v1729
    %1731 = vdwg.mxu0
    %1732 = vmatprep.subr.bf16.mxu0 %v1291
    %1733 = vmatpush1.bf16.msra.mxu0 %v1290
    %1734 = vmatprep.subr.bf16.mxu0 %v1287
    %1735 = vmatpush1.bf16.msra.mxu0 %v1286
    %1736 = vmatprep.subr.bf16.mxu0 %v1283
    %1737 = vmatpush1.bf16.msra.mxu0 %v1282
    %1738 = vmatprep.subr.bf16.mxu0 %v1279
    %1739 = vmatpush1.bf16.msra.mxu0 %v1278
    %1740 = vmatprep.subr.bf16.mxu0 %v1275
    %1741 = vmatpush1.bf16.msra.mxu0 %v1274
    %1742 = vmatprep.subr.bf16.mxu0 %v1271
    %1743 = vmatpush1.bf16.msra.mxu0 %v1270
    %1744 = vmatprep.subr.bf16.mxu0 %v1267
    %1745 = vmatpush1.bf16.msra.mxu0 %v1266
    %1746 = vmatprep.subr.bf16.mxu0 %v1263
    %1747 = vmatpush1.bf16.msra.mxu0 %v1262
    %1748 = vmatprep.subr.bf16.mxu0 %v1323
    %1749 = vmatpush2.bf16.msra.mxu0 %v1322
    %1750 = vmatprep.subr.bf16.mxu0 %v1319
    %1751 = vmatpush2.bf16.msra.mxu0 %v1318
    %1752 = vmatprep.subr.bf16.mxu0 %v1315
    %1753 = vmatpush2.bf16.msra.mxu0 %v1314
    %1754 = vmatprep.subr.bf16.mxu0 %v1311
    %1755 = vmatpush2.bf16.msra.mxu0 %v1310
    %1756 = vmatprep.subr.bf16.mxu0 %v1307
    %1757 = vmatpush2.bf16.msra.mxu0 %v1306
    %1758 = vmatprep.subr.bf16.mxu0 %v1303
    %1759 = vmatpush2.bf16.msra.mxu0 %v1302
    %1760 = vmatprep.subr.bf16.mxu0 %v1299
    %1761 = vmatpush2.bf16.msra.mxu0 %v1298
    %1762 = vmatprep.subr.bf16.mxu0 %v1295
    %1763 = vmatpush2.bf16.msra.mxu0 %v1294
    %1764 = vmatprep.mubr.bf16.mxu0 %v355
    %1765 = vmatmul.mubr.bf16.gmra.mxu0 %v354
    %v1766 = vpop.f32.mrf.mxu0
    %v1767 = vadd.f32 %v1724, %v1766
    %v1768 = vpop.f32.mrf.mxu0
    %v1769 = vadd.f32 %v1726, %v1768
    %v1770 = vpop.f32.mrf.mxu0
    %v1771 = vadd.f32 %v1728, %v1770
    %v1772 = vpop.f32.mrf.mxu0
    %v1773 = vadd.f32 %v1730, %v1772
    %1774 = vdwg.mxu0
    %1775 = vmatprep.subr.bf16.mxu0 %v1355
    %1776 = vmatpush1.bf16.msra.mxu0 %v1354
    %1777 = vmatprep.subr.bf16.mxu0 %v1351
    %1778 = vmatpush1.bf16.msra.mxu0 %v1350
    %1779 = vmatprep.subr.bf16.mxu0 %v1347
    %1780 = vmatpush1.bf16.msra.mxu0 %v1346
    %1781 = vmatprep.subr.bf16.mxu0 %v1343
    %1782 = vmatpush1.bf16.msra.mxu0 %v1342
    %1783 = vmatprep.subr.bf16.mxu0 %v1339
    %1784 = vmatpush1.bf16.msra.mxu0 %v1338
    %1785 = vmatprep.subr.bf16.mxu0 %v1335
    %1786 = vmatpush1.bf16.msra.mxu0 %v1334
    %1787 = vmatprep.subr.bf16.mxu0 %v1331
    %1788 = vmatpush1.bf16.msra.mxu0 %v1330
    %1789 = vmatprep.subr.bf16.mxu0 %v1327
    %1790 = vmatpush1.bf16.msra.mxu0 %v1326
    %1791 = vmatprep.subr.bf16.mxu0 %v1387
    %1792 = vmatpush2.bf16.msra.mxu0 %v1386
    %1793 = vmatprep.subr.bf16.mxu0 %v1383
    %1794 = vmatpush2.bf16.msra.mxu0 %v1382
    %1795 = vmatprep.subr.bf16.mxu0 %v1379
    %1796 = vmatpush2.bf16.msra.mxu0 %v1378
    %1797 = vmatprep.subr.bf16.mxu0 %v1375
    %1798 = vmatpush2.bf16.msra.mxu0 %v1374
    %1799 = vmatprep.subr.bf16.mxu0 %v1371
    %1800 = vmatpush2.bf16.msra.mxu0 %v1370
    %1801 = vmatprep.subr.bf16.mxu0 %v1367
    %1802 = vmatpush2.bf16.msra.mxu0 %v1366
    %1803 = vmatprep.subr.bf16.mxu0 %v1363
    %1804 = vmatpush2.bf16.msra.mxu0 %v1362
    %1805 = vmatprep.subr.bf16.mxu0 %v1359
    %1806 = vmatpush2.bf16.msra.mxu0 %v1358
    %1807 = vmatprep.mubr.bf16.mxu0 %v357
    %1808 = vmatmul.mubr.bf16.gmra.mxu0 %v356
    %v1809 = vpop.f32.mrf.mxu0
    %v1810 = vadd.f32 %v1767, %v1809
    %v1811 = vpop.f32.mrf.mxu0
    %v1812 = vadd.f32 %v1769, %v1811
    %v1813 = vpop.f32.mrf.mxu0
    %v1814 = vadd.f32 %v1771, %v1813
    %v1815 = vpop.f32.mrf.mxu0
    %v1816 = vadd.f32 %v1773, %v1815
    %1817 = vdwg.mxu0
    %1818 = vmatprep.subr.bf16.mxu0 %v1165
    %1819 = vmatpush1.bf16.msra.mxu0 %v1164
    %1820 = vmatprep.subr.bf16.mxu0 %v1161
    %1821 = vmatpush1.bf16.msra.mxu0 %v1160
    %1822 = vmatprep.subr.bf16.mxu0 %v1157
    %1823 = vmatpush1.bf16.msra.mxu0 %v1156
    %1824 = vmatprep.subr.bf16.mxu0 %v1153
    %1825 = vmatpush1.bf16.msra.mxu0 %v1152
    %1826 = vmatprep.subr.bf16.mxu0 %v1149
    %1827 = vmatpush1.bf16.msra.mxu0 %v1148
    %1828 = vmatprep.subr.bf16.mxu0 %v1145
    %1829 = vmatpush1.bf16.msra.mxu0 %v1144
    %1830 = vmatprep.subr.bf16.mxu0 %v1141
    %1831 = vmatpush1.bf16.msra.mxu0 %v1140
    %1832 = vmatprep.subr.bf16.mxu0 %v1137
    %1833 = vmatpush1.bf16.msra.mxu0 %v1136
    %1834 = vmatprep.subr.bf16.mxu0 %v1197
    %1835 = vmatpush2.bf16.msra.mxu0 %v1196
    %1836 = vmatprep.subr.bf16.mxu0 %v1193
    %1837 = vmatpush2.bf16.msra.mxu0 %v1192
    %1838 = vmatprep.subr.bf16.mxu0 %v1189
    %1839 = vmatpush2.bf16.msra.mxu0 %v1188
    %1840 = vmatprep.subr.bf16.mxu0 %v1185
    %1841 = vmatpush2.bf16.msra.mxu0 %v1184
    %1842 = vmatprep.subr.bf16.mxu0 %v1181
    %1843 = vmatpush2.bf16.msra.mxu0 %v1180
    %1844 = vmatprep.subr.bf16.mxu0 %v1177
    %1845 = vmatpush2.bf16.msra.mxu0 %v1176
    %1846 = vmatprep.subr.bf16.mxu0 %v1173
    %1847 = vmatpush2.bf16.msra.mxu0 %v1172
    %1848 = vmatprep.subr.bf16.mxu0 %v1169
    %1849 = vmatpush2.bf16.msra.mxu0 %v1168
    %1850 = vmatprep.mubr.bf16.mxu0 %v351
    %1851 = vmatmul.mubr.bf16.gmra.mxu0 %v350
    %v1852 = vpop.f32.mrf.mxu0
    %v1853 = vadd.f32 %v317, %v1852
    %v1854 = vpop.f32.mrf.mxu0
    %v1855 = vadd.f32 %v321, %v1854
    %v1856 = vpop.f32.mrf.mxu0
    %v1857 = vadd.f32 %v317, %v1856
    %v1858 = vpop.f32.mrf.mxu0
    %v1859 = vadd.f32 %v321, %v1858
    %1860 = vdwg.mxu0
    %1861 = vmatprep.subr.bf16.mxu0 %v1229
    %1862 = vmatpush1.bf16.msra.mxu0 %v1228
    %1863 = vmatprep.subr.bf16.mxu0 %v1225
    %1864 = vmatpush1.bf16.msra.mxu0 %v1224
    %1865 = vmatprep.subr.bf16.mxu0 %v1221
    %1866 = vmatpush1.bf16.msra.mxu0 %v1220
    %1867 = vmatprep.subr.bf16.mxu0 %v1217
    %1868 = vmatpush1.bf16.msra.mxu0 %v1216
    %1869 = vmatprep.subr.bf16.mxu0 %v1213
    %1870 = vmatpush1.bf16.msra.mxu0 %v1212
    %1871 = vmatprep.subr.bf16.mxu0 %v1209
    %1872 = vmatpush1.bf16.msra.mxu0 %v1208
    %1873 = vmatprep.subr.bf16.mxu0 %v1205
    %1874 = vmatpush1.bf16.msra.mxu0 %v1204
    %1875 = vmatprep.subr.bf16.mxu0 %v1201
    %1876 = vmatpush1.bf16.msra.mxu0 %v1200
    %1877 = vmatprep.subr.bf16.mxu0 %v1261
    %1878 = vmatpush2.bf16.msra.mxu0 %v1260
    %1879 = vmatprep.subr.bf16.mxu0 %v1257
    %1880 = vmatpush2.bf16.msra.mxu0 %v1256
    %1881 = vmatprep.subr.bf16.mxu0 %v1253
    %1882 = vmatpush2.bf16.msra.mxu0 %v1252
    %1883 = vmatprep.subr.bf16.mxu0 %v1249
    %1884 = vmatpush2.bf16.msra.mxu0 %v1248
    %1885 = vmatprep.subr.bf16.mxu0 %v1245
    %1886 = vmatpush2.bf16.msra.mxu0 %v1244
    %1887 = vmatprep.subr.bf16.mxu0 %v1241
    %1888 = vmatpush2.bf16.msra.mxu0 %v1240
    %1889 = vmatprep.subr.bf16.mxu0 %v1237
    %1890 = vmatpush2.bf16.msra.mxu0 %v1236
    %1891 = vmatprep.subr.bf16.mxu0 %v1233
    %1892 = vmatpush2.bf16.msra.mxu0 %v1232
    %1893 = vmatprep.mubr.bf16.mxu0 %v353
    %1894 = vmatmul.mubr.bf16.gmra.mxu0 %v352
    %v1895 = vpop.f32.mrf.mxu0
    %v1896 = vadd.f32 %v1853, %v1895
    %v1897 = vpop.f32.mrf.mxu0
    %v1898 = vadd.f32 %v1855, %v1897
    %v1899 = vpop.f32.mrf.mxu0
    %v1900 = vadd.f32 %v1857, %v1899
    %v1901 = vpop.f32.mrf.mxu0
    %v1902 = vadd.f32 %v1859, %v1901
    %1903 = vdwg.mxu0
    %1904 = vmatprep.subr.bf16.mxu0 %v1293
    %1905 = vmatpush1.bf16.msra.mxu0 %v1292
    %1906 = vmatprep.subr.bf16.mxu0 %v1289
    %1907 = vmatpush1.bf16.msra.mxu0 %v1288
    %1908 = vmatprep.subr.bf16.mxu0 %v1285
    %1909 = vmatpush1.bf16.msra.mxu0 %v1284
    %1910 = vmatprep.subr.bf16.mxu0 %v1281
    %1911 = vmatpush1.bf16.msra.mxu0 %v1280
    %1912 = vmatprep.subr.bf16.mxu0 %v1277
    %1913 = vmatpush1.bf16.msra.mxu0 %v1276
    %1914 = vmatprep.subr.bf16.mxu0 %v1273
    %1915 = vmatpush1.bf16.msra.mxu0 %v1272
    %1916 = vmatprep.subr.bf16.mxu0 %v1269
    %1917 = vmatpush1.bf16.msra.mxu0 %v1268
    %1918 = vmatprep.subr.bf16.mxu0 %v1265
    %1919 = vmatpush1.bf16.msra.mxu0 %v1264
    %1920 = vmatprep.subr.bf16.mxu0 %v1325
    %1921 = vmatpush2.bf16.msra.mxu0 %v1324
    %1922 = vmatprep.subr.bf16.mxu0 %v1321
    %1923 = vmatpush2.bf16.msra.mxu0 %v1320
    %1924 = vmatprep.subr.bf16.mxu0 %v1317
    %1925 = vmatpush2.bf16.msra.mxu0 %v1316
    %1926 = vmatprep.subr.bf16.mxu0 %v1313
    %1927 = vmatpush2.bf16.msra.mxu0 %v1312
    %1928 = vmatprep.subr.bf16.mxu0 %v1309
    %1929 = vmatpush2.bf16.msra.mxu0 %v1308
    %1930 = vmatprep.subr.bf16.mxu0 %v1305
    %1931 = vmatpush2.bf16.msra.mxu0 %v1304
    %1932 = vmatprep.subr.bf16.mxu0 %v1301
    %1933 = vmatpush2.bf16.msra.mxu0 %v1300
    %1934 = vmatprep.subr.bf16.mxu0 %v1297
    %1935 = vmatpush2.bf16.msra.mxu0 %v1296
    %1936 = vmatprep.mubr.bf16.mxu0 %v355
    %1937 = vmatmul.mubr.bf16.gmra.mxu0 %v354
    %v1938 = vpop.f32.mrf.mxu0
    %v1939 = vadd.f32 %v1896, %v1938
    %v1940 = vpop.f32.mrf.mxu0
    %v1941 = vadd.f32 %v1898, %v1940
    %v1942 = vpop.f32.mrf.mxu0
    %v1943 = vadd.f32 %v1900, %v1942
    %v1944 = vpop.f32.mrf.mxu0
    %v1945 = vadd.f32 %v1902, %v1944
    %1946 = vdwg.mxu0
    %1947 = vmatprep.subr.bf16.mxu0 %v1357
    %1948 = vmatpush1.bf16.msra.mxu0 %v1356
    %1949 = vmatprep.subr.bf16.mxu0 %v1353
    %1950 = vmatpush1.bf16.msra.mxu0 %v1352
    %1951 = vmatprep.subr.bf16.mxu0 %v1349
    %1952 = vmatpush1.bf16.msra.mxu0 %v1348
    %1953 = vmatprep.subr.bf16.mxu0 %v1345
    %1954 = vmatpush1.bf16.msra.mxu0 %v1344
    %1955 = vmatprep.subr.bf16.mxu0 %v1341
    %1956 = vmatpush1.bf16.msra.mxu0 %v1340
    %1957 = vmatprep.subr.bf16.mxu0 %v1337
    %1958 = vmatpush1.bf16.msra.mxu0 %v1336
    %1959 = vmatprep.subr.bf16.mxu0 %v1333
    %1960 = vmatpush1.bf16.msra.mxu0 %v1332
    %1961 = vmatprep.subr.bf16.mxu0 %v1329
    %1962 = vmatpush1.bf16.msra.mxu0 %v1328
    %1963 = vmatprep.subr.bf16.mxu0 %v1389
    %1964 = vmatpush2.bf16.msra.mxu0 %v1388
    %1965 = vmatprep.subr.bf16.mxu0 %v1385
    %1966 = vmatpush2.bf16.msra.mxu0 %v1384
    %1967 = vmatprep.subr.bf16.mxu0 %v1381
    %1968 = vmatpush2.bf16.msra.mxu0 %v1380
    %1969 = vmatprep.subr.bf16.mxu0 %v1377
    %1970 = vmatpush2.bf16.msra.mxu0 %v1376
    %1971 = vmatprep.subr.bf16.mxu0 %v1373
    %1972 = vmatpush2.bf16.msra.mxu0 %v1372
    %1973 = vmatprep.subr.bf16.mxu0 %v1369
    %1974 = vmatpush2.bf16.msra.mxu0 %v1368
    %1975 = vmatprep.subr.bf16.mxu0 %v1365
    %1976 = vmatpush2.bf16.msra.mxu0 %v1364
    %1977 = vmatprep.subr.bf16.mxu0 %v1361
    %1978 = vmatpush2.bf16.msra.mxu0 %v1360
    %1979 = vmatprep.mubr.bf16.mxu0 %v357
    %1980 = vmatmul.mubr.bf16.gmra.mxu0 %v356
    %v1981 = vpop.f32.mrf.mxu0
    %v1982 = vadd.f32 %v1939, %v1981
    %v1983 = vpop.f32.mrf.mxu0
    %v1984 = vadd.f32 %v1941, %v1983
    %v1985 = vpop.f32.mrf.mxu0
    %v1986 = vadd.f32 %v1943, %v1985
    %v1987 = vpop.f32.mrf.mxu0
    %v1988 = vadd.f32 %v1945, %v1987
    %1989 = vdwg.mxu0
    %v1990 = vmax.f32 %v1810, 0.0
    %v1991 = vmax.f32 %v1812, 0.0
    %v1992 = vmax.f32 %v1982, 0.0
    %v1993 = vmax.f32 %v1984, 0.0
    %v1994 = vmax.f32 %v1814, 0.0
    %v1995 = vmax.f32 %v1816, 0.0
    %v1996 = vmax.f32 %v1986, 0.0
    %v1997 = vmax.f32 %v1988, 0.0
    %v1998 = vpack.c.bf16 %v1994, %v1990
    %v1999 = vpack.c.bf16 %v1995, %v1991
    %v2000 = vpack.c.bf16 %v1996, %v1992
    %v2001 = vpack.c.bf16 %v1997, %v1993
    %v2006 = vunpack.c.l.b16 %v1998
    %v2007 = vunpack.c.l.b16 %v1999
    %v2008 = vunpack.c.l.b16 %v2000
    %v2009 = vunpack.c.l.b16 %v2001
    %v2010 = vunpack.c.h.b16 %v1998
    %v2011 = vunpack.c.h.b16 %v1999
    %v2012 = vunpack.c.h.b16 %v2000
    %v2013 = vunpack.c.h.b16 %v2001
    %v2014 = vpack.c.b16 %v2007, %v2006
    %v2015 = vpack.c.b16 %v2009, %v2008
    %v2016 = vpack.c.b16 %v2011, %v2010
    %v2017 = vpack.c.b16 %v2013, %v2012
    %2022 = vst [vmem:[%s3] sm:$0xff] %v2014
    %2023 = vst [vmem:[%s3 + $0x8] sm:$0xff] %v2015
    %2024 = vst [vmem:[%s3 + $0x10] sm:$0xff] %v2016
    %2025 = vst [vmem:[%s3 + $0x18] sm:$0xff] %v2017
    // Predicated region
    $region22: #{generator_forward.6} parent=1 // pred_check
      _
    $region23: #{generator_forward.6} parent=1 // pred_check_branch
      %2027 = sbr.rel (0) target = $region25
    $region24: #{generator_forward.6} parent=1 // pred_region
      _
    $region25: #{generator_forward.6} parent=1 // pred_fallthru
      _
    // Predicated region
    $region26: #{generator_forward.6} parent=1 // pred_check
      _
    $region27: #{generator_forward.6} parent=1 // pred_check_branch
      %2029 = sbr.rel (0) target = $region29
    $region28: #{generator_forward.6} parent=1 // pred_region
      _
    $region29: #{generator_forward.6} parent=1 // pred_fallthru
      _
    %2030 = vsyncpa [#allocation3], 1
    %2031 = vsyncpa [#allocation5], 1

// kernel: generator_forward.8
$region0: #{generator_forward.8}
  #allocation0 [shape = 'u32[]', space=smem, size = 0x4, offset = 0x4, fixed_abs, tag = 'smem constant byte address 0x4 - core index']
  #allocation1 [shape = 'u32[144,128]{1,0:T(1,128)}', space=vmem, size = 0x12000, scoped, tag = 'internal scratch']
  %s0 = inlined_call_operand.vmem [shape: bf16[176,256], index: 0, kind: input, shape index: {}]
  %s1 = inlined_call_operand.vmem [shape: bf16[256,128], index: 1, kind: input, shape index: {}]
  %s2 = inlined_call_operand.vmem [shape: f32[1,128], index: 2, kind: input, shape index: {}]
  %s3 = inlined_call_operand.vmem [shape: bf16[176,128], index: 3, kind: output, shape index: {}]
  %s4 = sld [smem:[#allocation0]]
  $region22: #{generator_forward.8} parent=0
    _
  %s6 = ssub.s32 1, %s4
  %s7 = scalar_select 0, %s6, %s4
  // Predicated region
  $region2: #{generator_forward.8} parent=0 // pred_check
    _
  $region3: #{generator_forward.8} parent=0 // pred_check_branch
    %9 = sbr.rel (0) target = $region5
  $region4: #{generator_forward.8} parent=0 // pred_region
    _
  $region5: #{generator_forward.8} parent=0 // pred_fallthru
    _
  // Predicated region
  $region6: #{generator_forward.8} parent=0 // pred_check
    _
  $region7: #{generator_forward.8} parent=0 // pred_check_branch
    %11 = sbr.rel (0) target = $region9
  $region8: #{generator_forward.8} parent=0 // pred_region
    _
  $region9: #{generator_forward.8} parent=0 // pred_fallthru
    _
  // Predicated region
  $region10: #{generator_forward.8} parent=0 // pred_check
    _
  $region11: #{generator_forward.8} parent=0 // pred_check_branch
    %13 = sbr.rel (0) target = $region13
  $region12: #{generator_forward.8} parent=0 // pred_region
    _
  $region13: #{generator_forward.8} parent=0 // pred_fallthru
    _
  %v15 = vld [vmem:[%s0] sm:$0xff]
  %v16 = vld [vmem:[%s0 + $0x8] sm:$0xff]
  %v17 = vld [vmem:[%s0 + $0x10] sm:$0xff]
  %v18 = vld [vmem:[%s0 + $0x18] sm:$0xff]
  %v19 = vld [vmem:[%s0 + $0x20] sm:$0xff]
  %v20 = vld [vmem:[%s0 + $0x28] sm:$0xff]
  %v21 = vld [vmem:[%s0 + $0x30] sm:$0xff]
  %v22 = vld [vmem:[%s0 + $0x38] sm:$0xff]
  %v23 = vld [vmem:[%s0 + $0x40] sm:$0xff]
  %v24 = vld [vmem:[%s0 + $0x48] sm:$0xff]
  %v25 = vld [vmem:[%s0 + $0x50] sm:$0xff]
  %v26 = vld [vmem:[%s0 + $0x58] sm:$0xff]
  %v27 = vld [vmem:[%s0 + $0x60] sm:$0xff]
  %v28 = vld [vmem:[%s0 + $0x68] sm:$0xff]
  %v29 = vld [vmem:[%s0 + $0x70] sm:$0xff]
  %v30 = vld [vmem:[%s0 + $0x78] sm:$0xff]
  %v31 = vld [vmem:[%s0 + $0x80] sm:$0xff]
  %v32 = vld [vmem:[%s0 + $0x88] sm:$0xff]
  %v33 = vld [vmem:[%s0 + $0x90] sm:$0xff]
  %v34 = vld [vmem:[%s0 + $0x98] sm:$0xff]
  %v35 = vld [vmem:[%s0 + $0xa0] sm:$0xff]
  %v36 = vld [vmem:[%s0 + $0xa8] sm:$0xff]
  %v37 = vld [vmem:[%s1] sm:$0xf]
  %v38 = vld [vmem:[%s1 + $0x4] sm:$0xf]
  %v39 = vld [vmem:[%s1 + $0x8] sm:$0xf]
  %v40 = vld [vmem:[%s1 + $0xc] sm:$0xf]
  %v41 = vld [vmem:[%s1 + $0x10] sm:$0xf]
  %v42 = vld [vmem:[%s1 + $0x14] sm:$0xf]
  %v43 = vld [vmem:[%s1 + $0x18] sm:$0xf]
  %v44 = vld [vmem:[%s1 + $0x1c] sm:$0xf]
  %v45 = vld [vmem:[%s1 + $0x20] sm:$0xf]
  %v46 = vld [vmem:[%s1 + $0x24] sm:$0xf]
  %v47 = vld [vmem:[%s1 + $0x28] sm:$0xf]
  %v48 = vld [vmem:[%s1 + $0x2c] sm:$0xf]
  %v49 = vld [vmem:[%s1 + $0x30] sm:$0xf]
  %v50 = vld [vmem:[%s1 + $0x34] sm:$0xf]
  %v51 = vld [vmem:[%s1 + $0x38] sm:$0xf]
  %v52 = vld [vmem:[%s1 + $0x3c] sm:$0xf]
  %v53 = vld [vmem:[%s1 + $0x40] sm:$0xf]
  %v54 = vld [vmem:[%s1 + $0x44] sm:$0xf]
  %v55 = vld [vmem:[%s1 + $0x48] sm:$0xf]
  %v56 = vld [vmem:[%s1 + $0x4c] sm:$0xf]
  %v57 = vld [vmem:[%s1 + $0x50] sm:$0xf]
  %v58 = vld [vmem:[%s1 + $0x54] sm:$0xf]
  %v59 = vld [vmem:[%s1 + $0x58] sm:$0xf]
  %v60 = vld [vmem:[%s1 + $0x5c] sm:$0xf]
  %v61 = vld [vmem:[%s1 + $0x60] sm:$0xf]
  %v62 = vld [vmem:[%s1 + $0x64] sm:$0xf]
  %v63 = vld [vmem:[%s1 + $0x68] sm:$0xf]
  %v64 = vld [vmem:[%s1 + $0x6c] sm:$0xf]
  %v65 = vld [vmem:[%s1 + $0x70] sm:$0xf]
  %v66 = vld [vmem:[%s1 + $0x74] sm:$0xf]
  %v67 = vld [vmem:[%s1 + $0x78] sm:$0xf]
  %v68 = vld [vmem:[%s1 + $0x7c] sm:$0xf]
  %v69 = vld [vmem:[%s2] sm:$0x1]
  %v71 = vlaneseq
  %v72 = vshrl.u32 %v71, 7
  %v73 = vsub.s32 0, %v72
  %v74 = vrot.slane %v69, %v73
  %v98 = vunpack.c.l.b16 %v15
  %v99 = vunpack.c.h.b16 %v15
  %v100 = vunpack.c.l.b16 %v16
  %v101 = vunpack.c.h.b16 %v16
  %v102 = vunpack.c.l.b16 %v17
  %v103 = vunpack.c.h.b16 %v17
  %v104 = vunpack.c.l.b16 %v18
  %v105 = vunpack.c.h.b16 %v18
  %v106 = vunpack.c.l.b16 %v19
  %v107 = vunpack.c.h.b16 %v19
  %v108 = vunpack.c.l.b16 %v20
  %v109 = vunpack.c.h.b16 %v20
  %v110 = vunpack.c.l.b16 %v21
  %v111 = vunpack.c.h.b16 %v21
  %v112 = vunpack.c.l.b16 %v22
  %v113 = vunpack.c.h.b16 %v22
  %v114 = vunpack.c.l.b16 %v23
  %v115 = vunpack.c.h.b16 %v23
  %v116 = vunpack.c.l.b16 %v24
  %v117 = vunpack.c.h.b16 %v24
  %v118 = vunpack.c.l.b16 %v25
  %v119 = vunpack.c.h.b16 %v25
  %v120 = vunpack.c.l.b16 %v26
  %v121 = vunpack.c.h.b16 %v26
  %v122 = vunpack.c.l.b16 %v27
  %v123 = vunpack.c.h.b16 %v27
  %v124 = vunpack.c.l.b16 %v28
  %v125 = vunpack.c.h.b16 %v28
  %v126 = vunpack.c.l.b16 %v29
  %v127 = vunpack.c.h.b16 %v29
  %v128 = vunpack.c.l.b16 %v30
  %v129 = vunpack.c.h.b16 %v30
  %v130 = vunpack.c.l.b16 %v31
  %v131 = vunpack.c.h.b16 %v31
  %v132 = vunpack.c.l.b16 %v32
  %v133 = vunpack.c.h.b16 %v32
  %v134 = vunpack.c.l.b16 %v33
  %v135 = vunpack.c.h.b16 %v33
  %v136 = vunpack.c.l.b16 %v34
  %v137 = vunpack.c.h.b16 %v34
  %v138 = vunpack.c.l.b16 %v35
  %v139 = vunpack.c.h.b16 %v35
  %v140 = vunpack.c.l.b16 %v36
  %v141 = vunpack.c.h.b16 %v36
  %v142 = vpack.c.b16 %v100, %v98
  %v143 = vpack.c.b16 %v101, %v99
  %v144 = vpack.c.b16 %v104, %v102
  %v145 = vpack.c.b16 %v105, %v103
  %v146 = vpack.c.b16 %v108, %v106
  %v147 = vpack.c.b16 %v109, %v107
  %v148 = vpack.c.b16 %v112, %v110
  %v149 = vpack.c.b16 %v113, %v111
  %v150 = vpack.c.b16 %v116, %v114
  %v151 = vpack.c.b16 %v117, %v115
  %v152 = vpack.c.b16 %v120, %v118
  %v153 = vpack.c.b16 %v121, %v119
  %v154 = vpack.c.b16 %v124, %v122
  %v155 = vpack.c.b16 %v125, %v123
  %v156 = vpack.c.b16 %v128, %v126
  %v157 = vpack.c.b16 %v129, %v127
  %v158 = vpack.c.b16 %v132, %v130
  %v159 = vpack.c.b16 %v133, %v131
  %v160 = vpack.c.b16 %v136, %v134
  %v161 = vpack.c.b16 %v137, %v135
  %v162 = vpack.c.b16 %v140, %v138
  %v163 = vpack.c.b16 %v141, %v139
  %v218 = vunpack.c.l.b16 %v37
  %v219 = vunpack.c.l.b16 %v38
  %v220 = vunpack.c.l.b16 %v39
  %v221 = vunpack.c.l.b16 %v40
  %v222 = vunpack.c.l.b16 %v41
  %v223 = vunpack.c.l.b16 %v42
  %v224 = vunpack.c.l.b16 %v43
  %v225 = vunpack.c.l.b16 %v44
  %v226 = vunpack.c.l.b16 %v45
  %v227 = vunpack.c.l.b16 %v46
  %v228 = vunpack.c.l.b16 %v47
  %v229 = vunpack.c.l.b16 %v48
  %v230 = vunpack.c.l.b16 %v49
  %v231 = vunpack.c.l.b16 %v50
  %v232 = vunpack.c.l.b16 %v51
  %v233 = vunpack.c.l.b16 %v52
  %v234 = vunpack.c.l.b16 %v53
  %v235 = vunpack.c.l.b16 %v54
  %v236 = vunpack.c.l.b16 %v55
  %v237 = vunpack.c.l.b16 %v56
  %v238 = vunpack.c.l.b16 %v57
  %v239 = vunpack.c.l.b16 %v58
  %v240 = vunpack.c.l.b16 %v59
  %v241 = vunpack.c.l.b16 %v60
  %v242 = vunpack.c.l.b16 %v61
  %v243 = vunpack.c.l.b16 %v62
  %v244 = vunpack.c.l.b16 %v63
  %v245 = vunpack.c.l.b16 %v64
  %v246 = vunpack.c.l.b16 %v65
  %v247 = vunpack.c.l.b16 %v66
  %v248 = vunpack.c.l.b16 %v67
  %v249 = vunpack.c.l.b16 %v68
  %v250 = vpack.c.b16 %v219, %v218
  %v251 = vpack.c.b16 %v221, %v220
  %v252 = vpack.c.b16 %v223, %v222
  %v253 = vpack.c.b16 %v225, %v224
  %v254 = vpack.c.b16 %v227, %v226
  %v255 = vpack.c.b16 %v229, %v228
  %v256 = vpack.c.b16 %v231, %v230
  %v257 = vpack.c.b16 %v233, %v232
  %v258 = vpack.c.b16 %v235, %v234
  %v259 = vpack.c.b16 %v237, %v236
  %v260 = vpack.c.b16 %v239, %v238
  %v261 = vpack.c.b16 %v241, %v240
  %v262 = vpack.c.b16 %v243, %v242
  %v263 = vpack.c.b16 %v245, %v244
  %v264 = vpack.c.b16 %v247, %v246
  %v265 = vpack.c.b16 %v249, %v248
  %282 = vmatprep.subr.bf16.mxu0 0
  %283 = vmatpush1.bf16.msra.mxu0 %v257
  %284 = vmatprep.subr.bf16.mxu0 0
  %285 = vmatpush1.bf16.msra.mxu0 %v256
  %286 = vmatprep.subr.bf16.mxu0 0
  %287 = vmatpush1.bf16.msra.mxu0 %v255
  %288 = vmatprep.subr.bf16.mxu0 0
  %289 = vmatpush1.bf16.msra.mxu0 %v254
  %290 = vmatprep.subr.bf16.mxu0 0
  %291 = vmatpush1.bf16.msra.mxu0 %v253
  %292 = vmatprep.subr.bf16.mxu0 0
  %293 = vmatpush1.bf16.msra.mxu0 %v252
  %294 = vmatprep.subr.bf16.mxu0 0
  %295 = vmatpush1.bf16.msra.mxu0 %v251
  %296 = vmatprep.subr.bf16.mxu0 0
  %297 = vmatpush1.bf16.msra.mxu0 %v250
  %298 = vmatprep.subr.bf16.mxu0 0
  %299 = vmatpush2.bf16.msra.mxu0 %v265
  %300 = vmatprep.subr.bf16.mxu0 0
  %301 = vmatpush2.bf16.msra.mxu0 %v264
  %302 = vmatprep.subr.bf16.mxu0 0
  %303 = vmatpush2.bf16.msra.mxu0 %v263
  %304 = vmatprep.subr.bf16.mxu0 0
  %305 = vmatpush2.bf16.msra.mxu0 %v262
  %306 = vmatprep.subr.bf16.mxu0 0
  %307 = vmatpush2.bf16.msra.mxu0 %v261
  %308 = vmatprep.subr.bf16.mxu0 0
  %309 = vmatpush2.bf16.msra.mxu0 %v260
  %310 = vmatprep.subr.bf16.mxu0 0
  %311 = vmatpush2.bf16.msra.mxu0 %v259
  %312 = vmatprep.subr.bf16.mxu0 0
  %313 = vmatpush2.bf16.msra.mxu0 %v258
  %314 = vmatprep.mubr.bf16.mxu0 %v143
  %315 = vmatmul.mubr.bf16.gmra.mxu0 %v142
  %v316 = vpop.f32.mrf.mxu0
  %v317 = vadd.f32 %v74, %v316
  %v318 = vpop.f32.mrf.mxu0
  %v319 = vpop.f32.mrf.mxu0
  %v320 = vadd.f32 %v74, %v319
  %v321 = vpop.f32.mrf.mxu0
  %322 = vmatprep.mubr.bf16.mxu0 %v145
  %323 = vmatmul.mubr.bf16.gmra.mxu0 %v144
  %v324 = vpop.f32.mrf.mxu0
  %v325 = vadd.f32 %v74, %v324
  %v326 = vpop.f32.mrf.mxu0
  %v327 = vpop.f32.mrf.mxu0
  %v328 = vadd.f32 %v74, %v327
  %v329 = vpop.f32.mrf.mxu0
  %330 = vmatprep.mubr.bf16.mxu0 %v147
  %331 = vmatmul.mubr.bf16.gmra.mxu0 %v146
  %v332 = vpop.f32.mrf.mxu0
  %v333 = vadd.f32 %v74, %v332
  %v334 = vpop.f32.mrf.mxu0
  %v335 = vpop.f32.mrf.mxu0
  %v336 = vadd.f32 %v74, %v335
  %v337 = vpop.f32.mrf.mxu0
  %338 = vmatprep.mubr.bf16.mxu0 %v149
  %339 = vmatmul.mubr.bf16.gmra.mxu0 %v148
  %v340 = vpop.f32.mrf.mxu0
  %v341 = vadd.f32 %v74, %v340
  %v342 = vpop.f32.mrf.mxu0
  %v343 = vpop.f32.mrf.mxu0
  %v344 = vadd.f32 %v74, %v343
  %v345 = vpop.f32.mrf.mxu0
  %346 = vmatprep.mubr.bf16.mxu0 %v151
  %347 = vmatmul.mubr.bf16.gmra.mxu0 %v150
  %v348 = vpop.f32.mrf.mxu0
  %v349 = vadd.f32 %v74, %v348
  %v350 = vpop.f32.mrf.mxu0
  %v351 = vpop.f32.mrf.mxu0
  %v352 = vadd.f32 %v74, %v351
  %v353 = vpop.f32.mrf.mxu0
  %354 = vmatprep.mubr.bf16.mxu0 %v153
  %355 = vmatmul.mubr.bf16.gmra.mxu0 %v152
  %v356 = vpop.f32.mrf.mxu0
  %v357 = vadd.f32 %v74, %v356
  %v358 = vpop.f32.mrf.mxu0
  %v359 = vpop.f32.mrf.mxu0
  %v360 = vadd.f32 %v74, %v359
  %v361 = vpop.f32.mrf.mxu0
  %362 = vmatprep.mubr.bf16.mxu0 %v155
  %363 = vmatmul.mubr.bf16.gmra.mxu0 %v154
  %v364 = vpop.f32.mrf.mxu0
  %v365 = vadd.f32 %v74, %v364
  %v366 = vpop.f32.mrf.mxu0
  %v367 = vpop.f32.mrf.mxu0
  %v368 = vadd.f32 %v74, %v367
  %v369 = vpop.f32.mrf.mxu0
  %370 = vmatprep.mubr.bf16.mxu0 %v157
  %371 = vmatmul.mubr.bf16.gmra.mxu0 %v156
  %v372 = vpop.f32.mrf.mxu0
  %v373 = vadd.f32 %v74, %v372
  %v374 = vpop.f32.mrf.mxu0
  %v375 = vpop.f32.mrf.mxu0
  %v376 = vadd.f32 %v74, %v375
  %v377 = vpop.f32.mrf.mxu0
  %378 = vmatprep.mubr.bf16.mxu0 %v159
  %379 = vmatmul.mubr.bf16.gmra.mxu0 %v158
  %v380 = vpop.f32.mrf.mxu0
  %v381 = vadd.f32 %v74, %v380
  %v382 = vpop.f32.mrf.mxu0
  %v383 = vpop.f32.mrf.mxu0
  %v384 = vadd.f32 %v74, %v383
  %v385 = vpop.f32.mrf.mxu0
  %386 = vmatprep.mubr.bf16.mxu0 %v161
  %387 = vmatmul.mubr.bf16.gmra.mxu0 %v160
  %v388 = vpop.f32.mrf.mxu0
  %v389 = vadd.f32 %v74, %v388
  %v390 = vpop.f32.mrf.mxu0
  %v391 = vpop.f32.mrf.mxu0
  %v392 = vadd.f32 %v74, %v391
  %v393 = vpop.f32.mrf.mxu0
  %394 = vmatprep.mubr.bf16.mxu0 %v163
  %395 = vmatmul.mubr.bf16.gmra.mxu0 %v162
  %v396 = vpop.f32.mrf.mxu0
  %v397 = vadd.f32 %v74, %v396
  %v398 = vpop.f32.mrf.mxu0
  %v399 = vpop.f32.mrf.mxu0
  %v400 = vadd.f32 %v74, %v399
  %v401 = vpop.f32.mrf.mxu0
  %402 = vdwg.mxu0
  %v403 = vmax.f32 %v317, 0.0
  %v404 = vmax.f32 %v320, 0.0
  %v405 = vmax.f32 %v325, 0.0
  %v406 = vmax.f32 %v328, 0.0
  %v407 = vmax.f32 %v333, 0.0
  %v408 = vmax.f32 %v336, 0.0
  %v409 = vmax.f32 %v341, 0.0
  %v410 = vmax.f32 %v344, 0.0
  %v411 = vmax.f32 %v349, 0.0
  %v412 = vmax.f32 %v352, 0.0
  %v413 = vmax.f32 %v357, 0.0
  %v414 = vmax.f32 %v360, 0.0
  %v415 = vmax.f32 %v365, 0.0
  %v416 = vmax.f32 %v368, 0.0
  %v417 = vmax.f32 %v373, 0.0
  %v418 = vmax.f32 %v376, 0.0
  %v419 = vmax.f32 %v381, 0.0
  %v420 = vmax.f32 %v384, 0.0
  %v421 = vmax.f32 %v389, 0.0
  %v422 = vmax.f32 %v392, 0.0
  %v423 = vmax.f32 %v397, 0.0
  %v424 = vmax.f32 %v400, 0.0
  %v425 = vpack.c.bf16 %v404, %v403
  %v426 = vpack.c.bf16 %v406, %v405
  %v427 = vpack.c.bf16 %v408, %v407
  %v428 = vpack.c.bf16 %v410, %v409
  %v429 = vpack.c.bf16 %v412, %v411
  %v430 = vpack.c.bf16 %v414, %v413
  %v431 = vpack.c.bf16 %v416, %v415
  %v432 = vpack.c.bf16 %v418, %v417
  %v433 = vpack.c.bf16 %v420, %v419
  %v434 = vpack.c.bf16 %v422, %v421
  %v435 = vpack.c.bf16 %v424, %v423
  %v447 = vunpack.c.l.b16 %v425
  %v448 = vunpack.c.h.b16 %v425
  %v449 = vunpack.c.l.b16 %v426
  %v450 = vunpack.c.h.b16 %v426
  %v451 = vunpack.c.l.b16 %v427
  %v452 = vunpack.c.h.b16 %v427
  %v453 = vunpack.c.l.b16 %v428
  %v454 = vunpack.c.h.b16 %v428
  %v455 = vunpack.c.l.b16 %v429
  %v456 = vunpack.c.h.b16 %v429
  %v457 = vunpack.c.l.b16 %v430
  %v458 = vunpack.c.h.b16 %v430
  %v459 = vunpack.c.l.b16 %v431
  %v460 = vunpack.c.h.b16 %v431
  %v461 = vunpack.c.l.b16 %v432
  %v462 = vunpack.c.h.b16 %v432
  %v463 = vunpack.c.l.b16 %v433
  %v464 = vunpack.c.h.b16 %v433
  %v465 = vunpack.c.l.b16 %v434
  %v466 = vunpack.c.h.b16 %v434
  %v467 = vunpack.c.l.b16 %v435
  %v468 = vunpack.c.h.b16 %v435
  %v469 = vpack.c.b16 %v447, %v447
  %v470 = vpack.c.b16 %v448, %v448
  %v471 = vpack.c.b16 %v449, %v449
  %v472 = vpack.c.b16 %v450, %v450
  %v473 = vpack.c.b16 %v451, %v451
  %v474 = vpack.c.b16 %v452, %v452
  %v475 = vpack.c.b16 %v453, %v453
  %v476 = vpack.c.b16 %v454, %v454
  %v477 = vpack.c.b16 %v455, %v455
  %v478 = vpack.c.b16 %v456, %v456
  %v479 = vpack.c.b16 %v457, %v457
  %v480 = vpack.c.b16 %v458, %v458
  %v481 = vpack.c.b16 %v459, %v459
  %v482 = vpack.c.b16 %v460, %v460
  %v483 = vpack.c.b16 %v461, %v461
  %v484 = vpack.c.b16 %v462, %v462
  %v485 = vpack.c.b16 %v463, %v463
  %v486 = vpack.c.b16 %v464, %v464
  %v487 = vpack.c.b16 %v465, %v465
  %v488 = vpack.c.b16 %v466, %v466
  %v489 = vpack.c.b16 %v467, %v467
  %v490 = vpack.c.b16 %v468, %v468
  %513 = vst [vmem:[%s3] sm:$0xf] %v469
  %514 = vst [vmem:[%s3 + $0x4] sm:$0xf] %v470
  %515 = vst [vmem:[%s3 + $0x8] sm:$0xf] %v471
  %516 = vst [vmem:[%s3 + $0xc] sm:$0xf] %v472
  %517 = vst [vmem:[%s3 + $0x10] sm:$0xf] %v473
  %518 = vst [vmem:[%s3 + $0x14] sm:$0xf] %v474
  %519 = vst [vmem:[%s3 + $0x18] sm:$0xf] %v475
  %520 = vst [vmem:[%s3 + $0x1c] sm:$0xf] %v476
  %521 = vst [vmem:[%s3 + $0x20] sm:$0xf] %v477
  %522 = vst [vmem:[%s3 + $0x24] sm:$0xf] %v478
  %523 = vst [vmem:[%s3 + $0x28] sm:$0xf] %v479
  %524 = vst [vmem:[%s3 + $0x2c] sm:$0xf] %v480
  %525 = vst [vmem:[%s3 + $0x30] sm:$0xf] %v481
  %526 = vst [vmem:[%s3 + $0x34] sm:$0xf] %v482
  %527 = vst [vmem:[%s3 + $0x38] sm:$0xf] %v483
  %528 = vst [vmem:[%s3 + $0x3c] sm:$0xf] %v484
  %529 = vst [vmem:[%s3 + $0x40] sm:$0xf] %v485
  %530 = vst [vmem:[%s3 + $0x44] sm:$0xf] %v486
  %531 = vst [vmem:[%s3 + $0x48] sm:$0xf] %v487
  %532 = vst [vmem:[%s3 + $0x4c] sm:$0xf] %v488
  %533 = vst [vmem:[%s3 + $0x50] sm:$0xf] %v489
  %534 = vst [vmem:[%s3 + $0x54] sm:$0xf] %v490
  // Predicated region
  $region14: #{generator_forward.8} parent=0 // pred_check
    _
  $region15: #{generator_forward.8} parent=0 // pred_check_branch
    %536 = sbr.rel (0) target = $region17
  $region16: #{generator_forward.8} parent=0 // pred_region
    _
  $region17: #{generator_forward.8} parent=0 // pred_fallthru
    _
  // Predicated region
  $region18: #{generator_forward.8} parent=0 // pred_check
    _
  $region19: #{generator_forward.8} parent=0 // pred_check_branch
    %538 = sbr.rel (0) target = $region21
  $region20: #{generator_forward.8} parent=0 // pred_region
    _
  $region21: #{generator_forward.8} parent=0 // pred_fallthru
    _

// kernel: generator_forward.9
$region0: #{generator_forward.9}
  #allocation0 [shape = 'u32[]', space=smem, size = 0x4, offset = 0x4, fixed_abs, tag = 'smem constant byte address 0x4 - core index']
  #allocation1 [shape = 'u32[144,128]{1,0:T(1,128)}', space=vmem, size = 0x12000, scoped, tag = 'internal scratch']
  %s0 = inlined_call_operand.vmem [shape: bf16[736,128], index: 0, kind: input, shape index: {}]
  %s1 = inlined_call_operand.vmem [shape: bf16[128,128], index: 1, kind: input, shape index: {}]
  %s2 = inlined_call_operand.vmem [shape: f32[1,128], index: 2, kind: input, shape index: {}]
  %s3 = inlined_call_operand.vmem [shape: f32[736,128], index: 3, kind: output, shape index: {}]
  %s4 = sld [smem:[#allocation0]]
  $region22: #{generator_forward.9} parent=0
    _
  %s6 = ssub.s32 1, %s4
  %s7 = scalar_select 0, %s6, %s4
  // Predicated region
  $region2: #{generator_forward.9} parent=0 // pred_check
    _
  $region3: #{generator_forward.9} parent=0 // pred_check_branch
    %9 = sbr.rel (0) target = $region5
  $region4: #{generator_forward.9} parent=0 // pred_region
    _
  $region5: #{generator_forward.9} parent=0 // pred_fallthru
    _
  // Predicated region
  $region6: #{generator_forward.9} parent=0 // pred_check
    _
  $region7: #{generator_forward.9} parent=0 // pred_check_branch
    %11 = sbr.rel (0) target = $region9
  $region8: #{generator_forward.9} parent=0 // pred_region
    _
  $region9: #{generator_forward.9} parent=0 // pred_fallthru
    _
  // Predicated region
  $region10: #{generator_forward.9} parent=0 // pred_check
    _
  $region11: #{generator_forward.9} parent=0 // pred_check_branch
    %13 = sbr.rel (0) target = $region13
  $region12: #{generator_forward.9} parent=0 // pred_region
    _
  $region13: #{generator_forward.9} parent=0 // pred_fallthru
    _
  %v15 = vld [vmem:[%s0] sm:$0xf]
  %v16 = vld [vmem:[%s0 + $0x4] sm:$0xf]
  %v17 = vld [vmem:[%s0 + $0x8] sm:$0xf]
  %v18 = vld [vmem:[%s0 + $0xc] sm:$0xf]
  %v19 = vld [vmem:[%s0 + $0x10] sm:$0xf]
  %v20 = vld [vmem:[%s0 + $0x14] sm:$0xf]
  %v21 = vld [vmem:[%s0 + $0x18] sm:$0xf]
  %v22 = vld [vmem:[%s0 + $0x1c] sm:$0xf]
  %v23 = vld [vmem:[%s0 + $0x20] sm:$0xf]
  %v24 = vld [vmem:[%s0 + $0x24] sm:$0xf]
  %v25 = vld [vmem:[%s0 + $0x28] sm:$0xf]
  %v26 = vld [vmem:[%s0 + $0x2c] sm:$0xf]
  %v27 = vld [vmem:[%s0 + $0x30] sm:$0xf]
  %v28 = vld [vmem:[%s0 + $0x34] sm:$0xf]
  %v29 = vld [vmem:[%s0 + $0x38] sm:$0xf]
  %v30 = vld [vmem:[%s0 + $0x3c] sm:$0xf]
  %v31 = vld [vmem:[%s0 + $0x40] sm:$0xf]
  %v32 = vld [vmem:[%s0 + $0x44] sm:$0xf]
  %v33 = vld [vmem:[%s0 + $0x48] sm:$0xf]
  %v34 = vld [vmem:[%s0 + $0x4c] sm:$0xf]
  %v35 = vld [vmem:[%s0 + $0x50] sm:$0xf]
  %v36 = vld [vmem:[%s0 + $0x54] sm:$0xf]
  %v37 = vld [vmem:[%s0 + $0x58] sm:$0xf]
  %v38 = vld [vmem:[%s0 + $0x5c] sm:$0xf]
  %v39 = vld [vmem:[%s0 + $0x60] sm:$0xf]
  %v40 = vld [vmem:[%s0 + $0x64] sm:$0xf]
  %v41 = vld [vmem:[%s0 + $0x68] sm:$0xf]
  %v42 = vld [vmem:[%s0 + $0x6c] sm:$0xf]
  %v43 = vld [vmem:[%s0 + $0x70] sm:$0xf]
  %v44 = vld [vmem:[%s0 + $0x74] sm:$0xf]
  %v45 = vld [vmem:[%s0 + $0x78] sm:$0xf]
  %v46 = vld [vmem:[%s0 + $0x7c] sm:$0xf]
  %v47 = vld [vmem:[%s0 + $0x80] sm:$0xf]
  %v48 = vld [vmem:[%s0 + $0x84] sm:$0xf]
  %v49 = vld [vmem:[%s0 + $0x88] sm:$0xf]
  %v50 = vld [vmem:[%s0 + $0x8c] sm:$0xf]
  %v51 = vld [vmem:[%s0 + $0x90] sm:$0xf]
  %v52 = vld [vmem:[%s0 + $0x94] sm:$0xf]
  %v53 = vld [vmem:[%s0 + $0x98] sm:$0xf]
  %v54 = vld [vmem:[%s0 + $0x9c] sm:$0xf]
  %v55 = vld [vmem:[%s0 + $0xa0] sm:$0xf]
  %v56 = vld [vmem:[%s0 + $0xa4] sm:$0xf]
  %v57 = vld [vmem:[%s0 + $0xa8] sm:$0xf]
  %v58 = vld [vmem:[%s0 + $0xac] sm:$0xf]
  %v59 = vld [vmem:[%s0 + $0xb0] sm:$0xf]
  %v60 = vld [vmem:[%s0 + $0xb4] sm:$0xf]
  %v61 = vld [vmem:[%s0 + $0xb8] sm:$0xf]
  %v62 = vld [vmem:[%s0 + $0xbc] sm:$0xf]
  %v63 = vld [vmem:[%s0 + $0xc0] sm:$0xf]
  %v64 = vld [vmem:[%s0 + $0xc4] sm:$0xf]
  %v65 = vld [vmem:[%s0 + $0xc8] sm:$0xf]
  %v66 = vld [vmem:[%s0 + $0xcc] sm:$0xf]
  %v67 = vld [vmem:[%s0 + $0xd0] sm:$0xf]
  %v68 = vld [vmem:[%s0 + $0xd4] sm:$0xf]
  %v69 = vld [vmem:[%s0 + $0xd8] sm:$0xf]
  %v70 = vld [vmem:[%s0 + $0xdc] sm:$0xf]
  %v71 = vld [vmem:[%s0 + $0xe0] sm:$0xf]
  %v72 = vld [vmem:[%s0 + $0xe4] sm:$0xf]
  %v73 = vld [vmem:[%s0 + $0xe8] sm:$0xf]
  %v74 = vld [vmem:[%s0 + $0xec] sm:$0xf]
  %v75 = vld [vmem:[%s0 + $0xf0] sm:$0xf]
  %v76 = vld [vmem:[%s0 + $0xf4] sm:$0xf]
  %v77 = vld [vmem:[%s0 + $0xf8] sm:$0xf]
  %v78 = vld [vmem:[%s0 + $0xfc] sm:$0xf]
  %v79 = vld [vmem:[%s0 + $0x100] sm:$0xf]
  %v80 = vld [vmem:[%s0 + $0x104] sm:$0xf]
  %v81 = vld [vmem:[%s0 + $0x108] sm:$0xf]
  %v82 = vld [vmem:[%s0 + $0x10c] sm:$0xf]
  %v83 = vld [vmem:[%s0 + $0x110] sm:$0xf]
  %v84 = vld [vmem:[%s0 + $0x114] sm:$0xf]
  %v85 = vld [vmem:[%s0 + $0x118] sm:$0xf]
  %v86 = vld [vmem:[%s0 + $0x11c] sm:$0xf]
  %v87 = vld [vmem:[%s0 + $0x120] sm:$0xf]
  %v88 = vld [vmem:[%s0 + $0x124] sm:$0xf]
  %v89 = vld [vmem:[%s0 + $0x128] sm:$0xf]
  %v90 = vld [vmem:[%s0 + $0x12c] sm:$0xf]
  %v91 = vld [vmem:[%s0 + $0x130] sm:$0xf]
  %v92 = vld [vmem:[%s0 + $0x134] sm:$0xf]
  %v93 = vld [vmem:[%s0 + $0x138] sm:$0xf]
  %v94 = vld [vmem:[%s0 + $0x13c] sm:$0xf]
  %v95 = vld [vmem:[%s0 + $0x140] sm:$0xf]
  %v96 = vld [vmem:[%s0 + $0x144] sm:$0xf]
  %v97 = vld [vmem:[%s0 + $0x148] sm:$0xf]
  %v98 = vld [vmem:[%s0 + $0x14c] sm:$0xf]
  %v99 = vld [vmem:[%s0 + $0x150] sm:$0xf]
  %v100 = vld [vmem:[%s0 + $0x154] sm:$0xf]
  %v101 = vld [vmem:[%s0 + $0x158] sm:$0xf]
  %v102 = vld [vmem:[%s0 + $0x15c] sm:$0xf]
  %v103 = vld [vmem:[%s0 + $0x160] sm:$0xf]
  %v104 = vld [vmem:[%s0 + $0x164] sm:$0xf]
  %v105 = vld [vmem:[%s0 + $0x168] sm:$0xf]
  %v106 = vld [vmem:[%s0 + $0x16c] sm:$0xf]
  %v107 = vld [vmem:[%s1] sm:$0xf]
  %v108 = vld [vmem:[%s1 + $0x4] sm:$0xf]
  %v109 = vld [vmem:[%s1 + $0x8] sm:$0xf]
  %v110 = vld [vmem:[%s1 + $0xc] sm:$0xf]
  %v111 = vld [vmem:[%s1 + $0x10] sm:$0xf]
  %v112 = vld [vmem:[%s1 + $0x14] sm:$0xf]
  %v113 = vld [vmem:[%s1 + $0x18] sm:$0xf]
  %v114 = vld [vmem:[%s1 + $0x1c] sm:$0xf]
  %v115 = vld [vmem:[%s1 + $0x20] sm:$0xf]
  %v116 = vld [vmem:[%s1 + $0x24] sm:$0xf]
  %v117 = vld [vmem:[%s1 + $0x28] sm:$0xf]
  %v118 = vld [vmem:[%s1 + $0x2c] sm:$0xf]
  %v119 = vld [vmem:[%s1 + $0x30] sm:$0xf]
  %v120 = vld [vmem:[%s1 + $0x34] sm:$0xf]
  %v121 = vld [vmem:[%s1 + $0x38] sm:$0xf]
  %v122 = vld [vmem:[%s1 + $0x3c] sm:$0xf]
  %v123 = vld [vmem:[%s2] sm:$0x1]
  %v125 = vlaneseq
  %v126 = vshrl.u32 %v125, 7
  %v127 = vsub.s32 0, %v126
  %v128 = vrot.slane %v123, %v127
  %v222 = vunpack.c.l.b16 %v15
  %v223 = vunpack.c.l.b16 %v16
  %v224 = vunpack.c.l.b16 %v17
  %v225 = vunpack.c.l.b16 %v18
  %v226 = vunpack.c.l.b16 %v19
  %v227 = vunpack.c.l.b16 %v20
  %v228 = vunpack.c.l.b16 %v21
  %v229 = vunpack.c.l.b16 %v22
  %v230 = vunpack.c.l.b16 %v23
  %v231 = vunpack.c.l.b16 %v24
  %v232 = vunpack.c.l.b16 %v25
  %v233 = vunpack.c.l.b16 %v26
  %v234 = vunpack.c.l.b16 %v27
  %v235 = vunpack.c.l.b16 %v28
  %v236 = vunpack.c.l.b16 %v29
  %v237 = vunpack.c.l.b16 %v30
  %v238 = vunpack.c.l.b16 %v31
  %v239 = vunpack.c.l.b16 %v32
  %v240 = vunpack.c.l.b16 %v33
  %v241 = vunpack.c.l.b16 %v34
  %v242 = vunpack.c.l.b16 %v35
  %v243 = vunpack.c.l.b16 %v36
  %v244 = vunpack.c.l.b16 %v37
  %v245 = vunpack.c.l.b16 %v38
  %v246 = vunpack.c.l.b16 %v39
  %v247 = vunpack.c.l.b16 %v40
  %v248 = vunpack.c.l.b16 %v41
  %v249 = vunpack.c.l.b16 %v42
  %v250 = vunpack.c.l.b16 %v43
  %v251 = vunpack.c.l.b16 %v44
  %v252 = vunpack.c.l.b16 %v45
  %v253 = vunpack.c.l.b16 %v46
  %v254 = vunpack.c.l.b16 %v47
  %v255 = vunpack.c.l.b16 %v48
  %v256 = vunpack.c.l.b16 %v49
  %v257 = vunpack.c.l.b16 %v50
  %v258 = vunpack.c.l.b16 %v51
  %v259 = vunpack.c.l.b16 %v52
  %v260 = vunpack.c.l.b16 %v53
  %v261 = vunpack.c.l.b16 %v54
  %v262 = vunpack.c.l.b16 %v55
  %v263 = vunpack.c.l.b16 %v56
  %v264 = vunpack.c.l.b16 %v57
  %v265 = vunpack.c.l.b16 %v58
  %v266 = vunpack.c.l.b16 %v59
  %v267 = vunpack.c.l.b16 %v60
  %v268 = vunpack.c.l.b16 %v61
  %v269 = vunpack.c.l.b16 %v62
  %v270 = vunpack.c.l.b16 %v63
  %v271 = vunpack.c.l.b16 %v64
  %v272 = vunpack.c.l.b16 %v65
  %v273 = vunpack.c.l.b16 %v66
  %v274 = vunpack.c.l.b16 %v67
  %v275 = vunpack.c.l.b16 %v68
  %v276 = vunpack.c.l.b16 %v69
  %v277 = vunpack.c.l.b16 %v70
  %v278 = vunpack.c.l.b16 %v71
  %v279 = vunpack.c.l.b16 %v72
  %v280 = vunpack.c.l.b16 %v73
  %v281 = vunpack.c.l.b16 %v74
  %v282 = vunpack.c.l.b16 %v75
  %v283 = vunpack.c.l.b16 %v76
  %v284 = vunpack.c.l.b16 %v77
  %v285 = vunpack.c.l.b16 %v78
  %v286 = vunpack.c.l.b16 %v79
  %v287 = vunpack.c.l.b16 %v80
  %v288 = vunpack.c.l.b16 %v81
  %v289 = vunpack.c.l.b16 %v82
  %v290 = vunpack.c.l.b16 %v83
  %v291 = vunpack.c.l.b16 %v84
  %v292 = vunpack.c.l.b16 %v85
  %v293 = vunpack.c.l.b16 %v86
  %v294 = vunpack.c.l.b16 %v87
  %v295 = vunpack.c.l.b16 %v88
  %v296 = vunpack.c.l.b16 %v89
  %v297 = vunpack.c.l.b16 %v90
  %v298 = vunpack.c.l.b16 %v91
  %v299 = vunpack.c.l.b16 %v92
  %v300 = vunpack.c.l.b16 %v93
  %v301 = vunpack.c.l.b16 %v94
  %v302 = vunpack.c.l.b16 %v95
  %v303 = vunpack.c.l.b16 %v96
  %v304 = vunpack.c.l.b16 %v97
  %v305 = vunpack.c.l.b16 %v98
  %v306 = vunpack.c.l.b16 %v99
  %v307 = vunpack.c.l.b16 %v100
  %v308 = vunpack.c.l.b16 %v101
  %v309 = vunpack.c.l.b16 %v102
  %v310 = vunpack.c.l.b16 %v103
  %v311 = vunpack.c.l.b16 %v104
  %v312 = vunpack.c.l.b16 %v105
  %v313 = vunpack.c.l.b16 %v106
  %v314 = vpack.c.b16 %v223, %v222
  %v315 = vpack.c.b16 %v225, %v224
  %v316 = vpack.c.b16 %v227, %v226
  %v317 = vpack.c.b16 %v229, %v228
  %v318 = vpack.c.b16 %v231, %v230
  %v319 = vpack.c.b16 %v233, %v232
  %v320 = vpack.c.b16 %v235, %v234
  %v321 = vpack.c.b16 %v237, %v236
  %v322 = vpack.c.b16 %v239, %v238
  %v323 = vpack.c.b16 %v241, %v240
  %v324 = vpack.c.b16 %v243, %v242
  %v325 = vpack.c.b16 %v245, %v244
  %v326 = vpack.c.b16 %v247, %v246
  %v327 = vpack.c.b16 %v249, %v248
  %v328 = vpack.c.b16 %v251, %v250
  %v329 = vpack.c.b16 %v253, %v252
  %v330 = vpack.c.b16 %v255, %v254
  %v331 = vpack.c.b16 %v257, %v256
  %v332 = vpack.c.b16 %v259, %v258
  %v333 = vpack.c.b16 %v261, %v260
  %v334 = vpack.c.b16 %v263, %v262
  %v335 = vpack.c.b16 %v265, %v264
  %v336 = vpack.c.b16 %v267, %v266
  %v337 = vpack.c.b16 %v269, %v268
  %v338 = vpack.c.b16 %v271, %v270
  %v339 = vpack.c.b16 %v273, %v272
  %v340 = vpack.c.b16 %v275, %v274
  %v341 = vpack.c.b16 %v277, %v276
  %v342 = vpack.c.b16 %v279, %v278
  %v343 = vpack.c.b16 %v281, %v280
  %v344 = vpack.c.b16 %v283, %v282
  %v345 = vpack.c.b16 %v285, %v284
  %v346 = vpack.c.b16 %v287, %v286
  %v347 = vpack.c.b16 %v289, %v288
  %v348 = vpack.c.b16 %v291, %v290
  %v349 = vpack.c.b16 %v293, %v292
  %v350 = vpack.c.b16 %v295, %v294
  %v351 = vpack.c.b16 %v297, %v296
  %v352 = vpack.c.b16 %v299, %v298
  %v353 = vpack.c.b16 %v301, %v300
  %v354 = vpack.c.b16 %v303, %v302
  %v355 = vpack.c.b16 %v305, %v304
  %v356 = vpack.c.b16 %v307, %v306
  %v357 = vpack.c.b16 %v309, %v308
  %v358 = vpack.c.b16 %v311, %v310
  %v359 = vpack.c.b16 %v313, %v312
  %v422 = vunpack.c.l.b16 %v107
  %v423 = vunpack.c.l.b16 %v108
  %v424 = vunpack.c.l.b16 %v109
  %v425 = vunpack.c.l.b16 %v110
  %v426 = vunpack.c.l.b16 %v111
  %v427 = vunpack.c.l.b16 %v112
  %v428 = vunpack.c.l.b16 %v113
  %v429 = vunpack.c.l.b16 %v114
  %v430 = vunpack.c.l.b16 %v115
  %v431 = vunpack.c.l.b16 %v116
  %v432 = vunpack.c.l.b16 %v117
  %v433 = vunpack.c.l.b16 %v118
  %v434 = vunpack.c.l.b16 %v119
  %v435 = vunpack.c.l.b16 %v120
  %v436 = vunpack.c.l.b16 %v121
  %v437 = vunpack.c.l.b16 %v122
  %v438 = vpack.c.b16 %v423, %v422
  %v439 = vpack.c.b16 %v425, %v424
  %v440 = vpack.c.b16 %v427, %v426
  %v441 = vpack.c.b16 %v429, %v428
  %v442 = vpack.c.b16 %v431, %v430
  %v443 = vpack.c.b16 %v433, %v432
  %v444 = vpack.c.b16 %v435, %v434
  %v445 = vpack.c.b16 %v437, %v436
  %454 = vmatprep.subr.bf16.mxu0 0
  %455 = vmatpush1.bf16.msra.mxu0 %v445
  %456 = vmatprep.subr.bf16.mxu0 0
  %457 = vmatpush1.bf16.msra.mxu0 %v444
  %458 = vmatprep.subr.bf16.mxu0 0
  %459 = vmatpush1.bf16.msra.mxu0 %v443
  %460 = vmatprep.subr.bf16.mxu0 0
  %461 = vmatpush1.bf16.msra.mxu0 %v442
  %462 = vmatprep.subr.bf16.mxu0 0
  %463 = vmatpush1.bf16.msra.mxu0 %v441
  %464 = vmatprep.subr.bf16.mxu0 0
  %465 = vmatpush1.bf16.msra.mxu0 %v440
  %466 = vmatprep.subr.bf16.mxu0 0
  %467 = vmatpush1.bf16.msra.mxu0 %v439
  %468 = vmatprep.subr.bf16.mxu0 0
  %469 = vmatpush1.bf16.msra.mxu0 %v438
  %470 = vmatprep.subr.bf16.mxu0 0
  %471 = vmatpush2.bf16.msra.mxu0 0
  %472 = vmatprep.subr.bf16.mxu0 0
  %473 = vmatpush2.bf16.msra.mxu0 0
  %474 = vmatprep.subr.bf16.mxu0 0
  %475 = vmatpush2.bf16.msra.mxu0 0
  %476 = vmatprep.subr.bf16.mxu0 0
  %477 = vmatpush2.bf16.msra.mxu0 0
  %478 = vmatprep.subr.bf16.mxu0 0
  %479 = vmatpush2.bf16.msra.mxu0 0
  %480 = vmatprep.subr.bf16.mxu0 0
  %481 = vmatpush2.bf16.msra.mxu0 0
  %482 = vmatprep.subr.bf16.mxu0 0
  %483 = vmatpush2.bf16.msra.mxu0 0
  %484 = vmatprep.subr.bf16.mxu0 0
  %485 = vmatpush2.bf16.msra.mxu0 0
  %486 = vmatprep.mubr.bf16.mxu0 0
  %487 = vmatmul.mubr.bf16.gmra.mxu0 %v314
  %v488 = vpop.f32.mrf.mxu0
  %v489 = vadd.f32 %v128, %v488
  %v490 = vpop.f32.mrf.mxu0
  %v491 = vpop.f32.mrf.mxu0
  %v492 = vadd.f32 %v128, %v491
  %v493 = vpop.f32.mrf.mxu0
  %494 = vmatprep.mubr.bf16.mxu0 0
  %495 = vmatmul.mubr.bf16.gmra.mxu0 %v315
  %v496 = vpop.f32.mrf.mxu0
  %v497 = vadd.f32 %v128, %v496
  %v498 = vpop.f32.mrf.mxu0
  %v499 = vpop.f32.mrf.mxu0
  %v500 = vadd.f32 %v128, %v499
  %v501 = vpop.f32.mrf.mxu0
  %502 = vmatprep.mubr.bf16.mxu0 0
  %503 = vmatmul.mubr.bf16.gmra.mxu0 %v316
  %v504 = vpop.f32.mrf.mxu0
  %v505 = vadd.f32 %v128, %v504
  %v506 = vpop.f32.mrf.mxu0
  %v507 = vpop.f32.mrf.mxu0
  %v508 = vadd.f32 %v128, %v507
  %v509 = vpop.f32.mrf.mxu0
  %510 = vmatprep.mubr.bf16.mxu0 0
  %511 = vmatmul.mubr.bf16.gmra.mxu0 %v317
  %v512 = vpop.f32.mrf.mxu0
  %v513 = vadd.f32 %v128, %v512
  %v514 = vpop.f32.mrf.mxu0
  %v515 = vpop.f32.mrf.mxu0
  %v516 = vadd.f32 %v128, %v515
  %v517 = vpop.f32.mrf.mxu0
  %518 = vmatprep.mubr.bf16.mxu0 0
  %519 = vmatmul.mubr.bf16.gmra.mxu0 %v318
  %v520 = vpop.f32.mrf.mxu0
  %v521 = vadd.f32 %v128, %v520
  %v522 = vpop.f32.mrf.mxu0
  %v523 = vpop.f32.mrf.mxu0
  %v524 = vadd.f32 %v128, %v523
  %v525 = vpop.f32.mrf.mxu0
  %526 = vmatprep.mubr.bf16.mxu0 0
  %527 = vmatmul.mubr.bf16.gmra.mxu0 %v319
  %v528 = vpop.f32.mrf.mxu0
  %v529 = vadd.f32 %v128, %v528
  %v530 = vpop.f32.mrf.mxu0
  %v531 = vpop.f32.mrf.mxu0
  %v532 = vadd.f32 %v128, %v531
  %v533 = vpop.f32.mrf.mxu0
  %534 = vmatprep.mubr.bf16.mxu0 0
  %535 = vmatmul.mubr.bf16.gmra.mxu0 %v320
  %v536 = vpop.f32.mrf.mxu0
  %v537 = vadd.f32 %v128, %v536
  %v538 = vpop.f32.mrf.mxu0
  %v539 = vpop.f32.mrf.mxu0
  %v540 = vadd.f32 %v128, %v539
  %v541 = vpop.f32.mrf.mxu0
  %542 = vmatprep.mubr.bf16.mxu0 0
  %543 = vmatmul.mubr.bf16.gmra.mxu0 %v321
  %v544 = vpop.f32.mrf.mxu0
  %v545 = vadd.f32 %v128, %v544
  %v546 = vpop.f32.mrf.mxu0
  %v547 = vpop.f32.mrf.mxu0
  %v548 = vadd.f32 %v128, %v547
  %v549 = vpop.f32.mrf.mxu0
  %550 = vmatprep.mubr.bf16.mxu0 0
  %551 = vmatmul.mubr.bf16.gmra.mxu0 %v322
  %v552 = vpop.f32.mrf.mxu0
  %v553 = vadd.f32 %v128, %v552
  %v554 = vpop.f32.mrf.mxu0
  %v555 = vpop.f32.mrf.mxu0
  %v556 = vadd.f32 %v128, %v555
  %v557 = vpop.f32.mrf.mxu0
  %558 = vmatprep.mubr.bf16.mxu0 0
  %559 = vmatmul.mubr.bf16.gmra.mxu0 %v323
  %v560 = vpop.f32.mrf.mxu0
  %v561 = vadd.f32 %v128, %v560
  %v562 = vpop.f32.mrf.mxu0
  %v563 = vpop.f32.mrf.mxu0
  %v564 = vadd.f32 %v128, %v563
  %v565 = vpop.f32.mrf.mxu0
  %566 = vmatprep.mubr.bf16.mxu0 0
  %567 = vmatmul.mubr.bf16.gmra.mxu0 %v324
  %v568 = vpop.f32.mrf.mxu0
  %v569 = vadd.f32 %v128, %v568
  %v570 = vpop.f32.mrf.mxu0
  %v571 = vpop.f32.mrf.mxu0
  %v572 = vadd.f32 %v128, %v571
  %v573 = vpop.f32.mrf.mxu0
  %574 = vmatprep.mubr.bf16.mxu0 0
  %575 = vmatmul.mubr.bf16.gmra.mxu0 %v325
  %v576 = vpop.f32.mrf.mxu0
  %v577 = vadd.f32 %v128, %v576
  %v578 = vpop.f32.mrf.mxu0
  %v579 = vpop.f32.mrf.mxu0
  %v580 = vadd.f32 %v128, %v579
  %v581 = vpop.f32.mrf.mxu0
  %582 = vmatprep.mubr.bf16.mxu0 0
  %583 = vmatmul.mubr.bf16.gmra.mxu0 %v326
  %v584 = vpop.f32.mrf.mxu0
  %v585 = vadd.f32 %v128, %v584
  %v586 = vpop.f32.mrf.mxu0
  %v587 = vpop.f32.mrf.mxu0
  %v588 = vadd.f32 %v128, %v587
  %v589 = vpop.f32.mrf.mxu0
  %590 = vmatprep.mubr.bf16.mxu0 0
  %591 = vmatmul.mubr.bf16.gmra.mxu0 %v327
  %v592 = vpop.f32.mrf.mxu0
  %v593 = vadd.f32 %v128, %v592
  %v594 = vpop.f32.mrf.mxu0
  %v595 = vpop.f32.mrf.mxu0
  %v596 = vadd.f32 %v128, %v595
  %v597 = vpop.f32.mrf.mxu0
  %598 = vmatprep.mubr.bf16.mxu0 0
  %599 = vmatmul.mubr.bf16.gmra.mxu0 %v328
  %v600 = vpop.f32.mrf.mxu0
  %v601 = vadd.f32 %v128, %v600
  %v602 = vpop.f32.mrf.mxu0
  %v603 = vpop.f32.mrf.mxu0
  %v604 = vadd.f32 %v128, %v603
  %v605 = vpop.f32.mrf.mxu0
  %606 = vmatprep.mubr.bf16.mxu0 0
  %607 = vmatmul.mubr.bf16.gmra.mxu0 %v329
  %v608 = vpop.f32.mrf.mxu0
  %v609 = vadd.f32 %v128, %v608
  %v610 = vpop.f32.mrf.mxu0
  %v611 = vpop.f32.mrf.mxu0
  %v612 = vadd.f32 %v128, %v611
  %v613 = vpop.f32.mrf.mxu0
  %614 = vmatprep.mubr.bf16.mxu0 0
  %615 = vmatmul.mubr.bf16.gmra.mxu0 %v330
  %v616 = vpop.f32.mrf.mxu0
  %v617 = vadd.f32 %v128, %v616
  %v618 = vpop.f32.mrf.mxu0
  %v619 = vpop.f32.mrf.mxu0
  %v620 = vadd.f32 %v128, %v619
  %v621 = vpop.f32.mrf.mxu0
  %622 = vmatprep.mubr.bf16.mxu0 0
  %623 = vmatmul.mubr.bf16.gmra.mxu0 %v331
  %v624 = vpop.f32.mrf.mxu0
  %v625 = vadd.f32 %v128, %v624
  %v626 = vpop.f32.mrf.mxu0
  %v627 = vpop.f32.mrf.mxu0
  %v628 = vadd.f32 %v128, %v627
  %v629 = vpop.f32.mrf.mxu0
  %630 = vmatprep.mubr.bf16.mxu0 0
  %631 = vmatmul.mubr.bf16.gmra.mxu0 %v332
  %v632 = vpop.f32.mrf.mxu0
  %v633 = vadd.f32 %v128, %v632
  %v634 = vpop.f32.mrf.mxu0
  %v635 = vpop.f32.mrf.mxu0
  %v636 = vadd.f32 %v128, %v635
  %v637 = vpop.f32.mrf.mxu0
  %638 = vmatprep.mubr.bf16.mxu0 0
  %639 = vmatmul.mubr.bf16.gmra.mxu0 %v333
  %v640 = vpop.f32.mrf.mxu0
  %v641 = vadd.f32 %v128, %v640
  %v642 = vpop.f32.mrf.mxu0
  %v643 = vpop.f32.mrf.mxu0
  %v644 = vadd.f32 %v128, %v643
  %v645 = vpop.f32.mrf.mxu0
  %646 = vmatprep.mubr.bf16.mxu0 0
  %647 = vmatmul.mubr.bf16.gmra.mxu0 %v334
  %v648 = vpop.f32.mrf.mxu0
  %v649 = vadd.f32 %v128, %v648
  %v650 = vpop.f32.mrf.mxu0
  %v651 = vpop.f32.mrf.mxu0
  %v652 = vadd.f32 %v128, %v651
  %v653 = vpop.f32.mrf.mxu0
  %654 = vmatprep.mubr.bf16.mxu0 0
  %655 = vmatmul.mubr.bf16.gmra.mxu0 %v335
  %v656 = vpop.f32.mrf.mxu0
  %v657 = vadd.f32 %v128, %v656
  %v658 = vpop.f32.mrf.mxu0
  %v659 = vpop.f32.mrf.mxu0
  %v660 = vadd.f32 %v128, %v659
  %v661 = vpop.f32.mrf.mxu0
  %662 = vmatprep.mubr.bf16.mxu0 0
  %663 = vmatmul.mubr.bf16.gmra.mxu0 %v336
  %v664 = vpop.f32.mrf.mxu0
  %v665 = vadd.f32 %v128, %v664
  %v666 = vpop.f32.mrf.mxu0
  %v667 = vpop.f32.mrf.mxu0
  %v668 = vadd.f32 %v128, %v667
  %v669 = vpop.f32.mrf.mxu0
  %670 = vmatprep.mubr.bf16.mxu0 0
  %671 = vmatmul.mubr.bf16.gmra.mxu0 %v337
  %v672 = vpop.f32.mrf.mxu0
  %v673 = vadd.f32 %v128, %v672
  %v674 = vpop.f32.mrf.mxu0
  %v675 = vpop.f32.mrf.mxu0
  %v676 = vadd.f32 %v128, %v675
  %v677 = vpop.f32.mrf.mxu0
  %678 = vmatprep.mubr.bf16.mxu0 0
  %679 = vmatmul.mubr.bf16.gmra.mxu0 %v338
  %v680 = vpop.f32.mrf.mxu0
  %v681 = vadd.f32 %v128, %v680
  %v682 = vpop.f32.mrf.mxu0
  %v683 = vpop.f32.mrf.mxu0
  %v684 = vadd.f32 %v128, %v683
  %v685 = vpop.f32.mrf.mxu0
  %686 = vmatprep.mubr.bf16.mxu0 0
  %687 = vmatmul.mubr.bf16.gmra.mxu0 %v339
  %v688 = vpop.f32.mrf.mxu0
  %v689 = vadd.f32 %v128, %v688
  %v690 = vpop.f32.mrf.mxu0
  %v691 = vpop.f32.mrf.mxu0
  %v692 = vadd.f32 %v128, %v691
  %v693 = vpop.f32.mrf.mxu0
  %694 = vmatprep.mubr.bf16.mxu0 0
  %695 = vmatmul.mubr.bf16.gmra.mxu0 %v340
  %v696 = vpop.f32.mrf.mxu0
  %v697 = vadd.f32 %v128, %v696
  %v698 = vpop.f32.mrf.mxu0
  %v699 = vpop.f32.mrf.mxu0
  %v700 = vadd.f32 %v128, %v699
  %v701 = vpop.f32.mrf.mxu0
  %702 = vmatprep.mubr.bf16.mxu0 0
  %703 = vmatmul.mubr.bf16.gmra.mxu0 %v341
  %v704 = vpop.f32.mrf.mxu0
  %v705 = vadd.f32 %v128, %v704
  %v706 = vpop.f32.mrf.mxu0
  %v707 = vpop.f32.mrf.mxu0
  %v708 = vadd.f32 %v128, %v707
  %v709 = vpop.f32.mrf.mxu0
  %710 = vmatprep.mubr.bf16.mxu0 0
  %711 = vmatmul.mubr.bf16.gmra.mxu0 %v342
  %v712 = vpop.f32.mrf.mxu0
  %v713 = vadd.f32 %v128, %v712
  %v714 = vpop.f32.mrf.mxu0
  %v715 = vpop.f32.mrf.mxu0
  %v716 = vadd.f32 %v128, %v715
  %v717 = vpop.f32.mrf.mxu0
  %718 = vmatprep.mubr.bf16.mxu0 0
  %719 = vmatmul.mubr.bf16.gmra.mxu0 %v343
  %v720 = vpop.f32.mrf.mxu0
  %v721 = vadd.f32 %v128, %v720
  %v722 = vpop.f32.mrf.mxu0
  %v723 = vpop.f32.mrf.mxu0
  %v724 = vadd.f32 %v128, %v723
  %v725 = vpop.f32.mrf.mxu0
  %726 = vmatprep.mubr.bf16.mxu0 0
  %727 = vmatmul.mubr.bf16.gmra.mxu0 %v344
  %v728 = vpop.f32.mrf.mxu0
  %v729 = vadd.f32 %v128, %v728
  %v730 = vpop.f32.mrf.mxu0
  %v731 = vpop.f32.mrf.mxu0
  %v732 = vadd.f32 %v128, %v731
  %v733 = vpop.f32.mrf.mxu0
  %734 = vmatprep.mubr.bf16.mxu0 0
  %735 = vmatmul.mubr.bf16.gmra.mxu0 %v345
  %v736 = vpop.f32.mrf.mxu0
  %v737 = vadd.f32 %v128, %v736
  %v738 = vpop.f32.mrf.mxu0
  %v739 = vpop.f32.mrf.mxu0
  %v740 = vadd.f32 %v128, %v739
  %v741 = vpop.f32.mrf.mxu0
  %742 = vmatprep.mubr.bf16.mxu0 0
  %743 = vmatmul.mubr.bf16.gmra.mxu0 %v346
  %v744 = vpop.f32.mrf.mxu0
  %v745 = vadd.f32 %v128, %v744
  %v746 = vpop.f32.mrf.mxu0
  %v747 = vpop.f32.mrf.mxu0
  %v748 = vadd.f32 %v128, %v747
  %v749 = vpop.f32.mrf.mxu0
  %750 = vmatprep.mubr.bf16.mxu0 0
  %751 = vmatmul.mubr.bf16.gmra.mxu0 %v347
  %v752 = vpop.f32.mrf.mxu0
  %v753 = vadd.f32 %v128, %v752
  %v754 = vpop.f32.mrf.mxu0
  %v755 = vpop.f32.mrf.mxu0
  %v756 = vadd.f32 %v128, %v755
  %v757 = vpop.f32.mrf.mxu0
  %758 = vmatprep.mubr.bf16.mxu0 0
  %759 = vmatmul.mubr.bf16.gmra.mxu0 %v348
  %v760 = vpop.f32.mrf.mxu0
  %v761 = vadd.f32 %v128, %v760
  %v762 = vpop.f32.mrf.mxu0
  %v763 = vpop.f32.mrf.mxu0
  %v764 = vadd.f32 %v128, %v763
  %v765 = vpop.f32.mrf.mxu0
  %766 = vmatprep.mubr.bf16.mxu0 0
  %767 = vmatmul.mubr.bf16.gmra.mxu0 %v349
  %v768 = vpop.f32.mrf.mxu0
  %v769 = vadd.f32 %v128, %v768
  %v770 = vpop.f32.mrf.mxu0
  %v771 = vpop.f32.mrf.mxu0
  %v772 = vadd.f32 %v128, %v771
  %v773 = vpop.f32.mrf.mxu0
  %774 = vmatprep.mubr.bf16.mxu0 0
  %775 = vmatmul.mubr.bf16.gmra.mxu0 %v350
  %v776 = vpop.f32.mrf.mxu0
  %v777 = vadd.f32 %v128, %v776
  %v778 = vpop.f32.mrf.mxu0
  %v779 = vpop.f32.mrf.mxu0
  %v780 = vadd.f32 %v128, %v779
  %v781 = vpop.f32.mrf.mxu0
  %782 = vmatprep.mubr.bf16.mxu0 0
  %783 = vmatmul.mubr.bf16.gmra.mxu0 %v351
  %v784 = vpop.f32.mrf.mxu0
  %v785 = vadd.f32 %v128, %v784
  %v786 = vpop.f32.mrf.mxu0
  %v787 = vpop.f32.mrf.mxu0
  %v788 = vadd.f32 %v128, %v787
  %v789 = vpop.f32.mrf.mxu0
  %790 = vmatprep.mubr.bf16.mxu0 0
  %791 = vmatmul.mubr.bf16.gmra.mxu0 %v352
  %v792 = vpop.f32.mrf.mxu0
  %v793 = vadd.f32 %v128, %v792
  %v794 = vpop.f32.mrf.mxu0
  %v795 = vpop.f32.mrf.mxu0
  %v796 = vadd.f32 %v128, %v795
  %v797 = vpop.f32.mrf.mxu0
  %798 = vmatprep.mubr.bf16.mxu0 0
  %799 = vmatmul.mubr.bf16.gmra.mxu0 %v353
  %v800 = vpop.f32.mrf.mxu0
  %v801 = vadd.f32 %v128, %v800
  %v802 = vpop.f32.mrf.mxu0
  %v803 = vpop.f32.mrf.mxu0
  %v804 = vadd.f32 %v128, %v803
  %v805 = vpop.f32.mrf.mxu0
  %806 = vmatprep.mubr.bf16.mxu0 0
  %807 = vmatmul.mubr.bf16.gmra.mxu0 %v354
  %v808 = vpop.f32.mrf.mxu0
  %v809 = vadd.f32 %v128, %v808
  %v810 = vpop.f32.mrf.mxu0
  %v811 = vpop.f32.mrf.mxu0
  %v812 = vadd.f32 %v128, %v811
  %v813 = vpop.f32.mrf.mxu0
  %814 = vmatprep.mubr.bf16.mxu0 0
  %815 = vmatmul.mubr.bf16.gmra.mxu0 %v355
  %v816 = vpop.f32.mrf.mxu0
  %v817 = vadd.f32 %v128, %v816
  %v818 = vpop.f32.mrf.mxu0
  %v819 = vpop.f32.mrf.mxu0
  %v820 = vadd.f32 %v128, %v819
  %v821 = vpop.f32.mrf.mxu0
  %822 = vmatprep.mubr.bf16.mxu0 0
  %823 = vmatmul.mubr.bf16.gmra.mxu0 %v356
  %v824 = vpop.f32.mrf.mxu0
  %v825 = vadd.f32 %v128, %v824
  %v826 = vpop.f32.mrf.mxu0
  %v827 = vpop.f32.mrf.mxu0
  %v828 = vadd.f32 %v128, %v827
  %v829 = vpop.f32.mrf.mxu0
  %830 = vmatprep.mubr.bf16.mxu0 0
  %831 = vmatmul.mubr.bf16.gmra.mxu0 %v357
  %v832 = vpop.f32.mrf.mxu0
  %v833 = vadd.f32 %v128, %v832
  %v834 = vpop.f32.mrf.mxu0
  %v835 = vpop.f32.mrf.mxu0
  %v836 = vadd.f32 %v128, %v835
  %v837 = vpop.f32.mrf.mxu0
  %838 = vmatprep.mubr.bf16.mxu0 0
  %839 = vmatmul.mubr.bf16.gmra.mxu0 %v358
  %v840 = vpop.f32.mrf.mxu0
  %v841 = vadd.f32 %v128, %v840
  %v842 = vpop.f32.mrf.mxu0
  %v843 = vpop.f32.mrf.mxu0
  %v844 = vadd.f32 %v128, %v843
  %v845 = vpop.f32.mrf.mxu0
  %846 = vmatprep.mubr.bf16.mxu0 0
  %847 = vmatmul.mubr.bf16.gmra.mxu0 %v359
  %v848 = vpop.f32.mrf.mxu0
  %v849 = vadd.f32 %v128, %v848
  %v850 = vpop.f32.mrf.mxu0
  %v851 = vpop.f32.mrf.mxu0
  %v852 = vadd.f32 %v128, %v851
  %v853 = vpop.f32.mrf.mxu0
  %854 = vdwg.mxu0
  %v855 = vtanh.pop %v489
  %v856 = vtanh.pop %v492
  %v857 = vtanh.pop %v497
  %v858 = vtanh.pop %v500
  %v859 = vtanh.pop %v505
  %v860 = vtanh.pop %v508
  %v861 = vtanh.pop %v513
  %v862 = vtanh.pop %v516
  %v863 = vtanh.pop %v521
  %v864 = vtanh.pop %v524
  %v865 = vtanh.pop %v529
  %v866 = vtanh.pop %v532
  %v867 = vtanh.pop %v537
  %v868 = vtanh.pop %v540
  %v869 = vtanh.pop %v545
  %v870 = vtanh.pop %v548
  %v871 = vtanh.pop %v553
  %v872 = vtanh.pop %v556
  %v873 = vtanh.pop %v561
  %v874 = vtanh.pop %v564
  %v875 = vtanh.pop %v569
  %v876 = vtanh.pop %v572
  %v877 = vtanh.pop %v577
  %v878 = vtanh.pop %v580
  %v879 = vtanh.pop %v585
  %v880 = vtanh.pop %v588
  %v881 = vtanh.pop %v593
  %v882 = vtanh.pop %v596
  %v883 = vtanh.pop %v601
  %v884 = vtanh.pop %v604
  %v885 = vtanh.pop %v609
  %v886 = vtanh.pop %v612
  %v887 = vtanh.pop %v617
  %v888 = vtanh.pop %v620
  %v889 = vtanh.pop %v625
  %v890 = vtanh.pop %v628
  %v891 = vtanh.pop %v633
  %v892 = vtanh.pop %v636
  %v893 = vtanh.pop %v641
  %v894 = vtanh.pop %v644
  %v895 = vtanh.pop %v649
  %v896 = vtanh.pop %v652
  %v897 = vtanh.pop %v657
  %v898 = vtanh.pop %v660
  %v899 = vtanh.pop %v665
  %v900 = vtanh.pop %v668
  %v901 = vtanh.pop %v673
  %v902 = vtanh.pop %v676
  %v903 = vtanh.pop %v681
  %v904 = vtanh.pop %v684
  %v905 = vtanh.pop %v689
  %v906 = vtanh.pop %v692
  %v907 = vtanh.pop %v697
  %v908 = vtanh.pop %v700
  %v909 = vtanh.pop %v705
  %v910 = vtanh.pop %v708
  %v911 = vtanh.pop %v713
  %v912 = vtanh.pop %v716
  %v913 = vtanh.pop %v721
  %v914 = vtanh.pop %v724
  %v915 = vtanh.pop %v729
  %v916 = vtanh.pop %v732
  %v917 = vtanh.pop %v737
  %v918 = vtanh.pop %v740
  %v919 = vtanh.pop %v745
  %v920 = vtanh.pop %v748
  %v921 = vtanh.pop %v753
  %v922 = vtanh.pop %v756
  %v923 = vtanh.pop %v761
  %v924 = vtanh.pop %v764
  %v925 = vtanh.pop %v769
  %v926 = vtanh.pop %v772
  %v927 = vtanh.pop %v777
  %v928 = vtanh.pop %v780
  %v929 = vtanh.pop %v785
  %v930 = vtanh.pop %v788
  %v931 = vtanh.pop %v793
  %v932 = vtanh.pop %v796
  %v933 = vtanh.pop %v801
  %v934 = vtanh.pop %v804
  %v935 = vtanh.pop %v809
  %v936 = vtanh.pop %v812
  %v937 = vtanh.pop %v817
  %v938 = vtanh.pop %v820
  %v939 = vtanh.pop %v825
  %v940 = vtanh.pop %v828
  %v941 = vtanh.pop %v833
  %v942 = vtanh.pop %v836
  %v943 = vtanh.pop %v841
  %v944 = vtanh.pop %v844
  %v945 = vtanh.pop %v849
  %v946 = vtanh.pop %v852
  %947 = vst [vmem:[%s3] sm:$0xff] %v855
  %948 = vst [vmem:[%s3 + $0x8] sm:$0xff] %v856
  %949 = vst [vmem:[%s3 + $0x10] sm:$0xff] %v857
  %950 = vst [vmem:[%s3 + $0x18] sm:$0xff] %v858
  %951 = vst [vmem:[%s3 + $0x20] sm:$0xff] %v859
  %952 = vst [vmem:[%s3 + $0x28] sm:$0xff] %v860
  %953 = vst [vmem:[%s3 + $0x30] sm:$0xff] %v861
  %954 = vst [vmem:[%s3 + $0x38] sm:$0xff] %v862
  %955 = vst [vmem:[%s3 + $0x40] sm:$0xff] %v863
  %956 = vst [vmem:[%s3 + $0x48] sm:$0xff] %v864
  %957 = vst [vmem:[%s3 + $0x50] sm:$0xff] %v865
  %958 = vst [vmem:[%s3 + $0x58] sm:$0xff] %v866
  %959 = vst [vmem:[%s3 + $0x60] sm:$0xff] %v867
  %960 = vst [vmem:[%s3 + $0x68] sm:$0xff] %v868
  %961 = vst [vmem:[%s3 + $0x70] sm:$0xff] %v869
  %962 = vst [vmem:[%s3 + $0x78] sm:$0xff] %v870
  %963 = vst [vmem:[%s3 + $0x80] sm:$0xff] %v871
  %964 = vst [vmem:[%s3 + $0x88] sm:$0xff] %v872
  %965 = vst [vmem:[%s3 + $0x90] sm:$0xff] %v873
  %966 = vst [vmem:[%s3 + $0x98] sm:$0xff] %v874
  %967 = vst [vmem:[%s3 + $0xa0] sm:$0xff] %v875
  %968 = vst [vmem:[%s3 + $0xa8] sm:$0xff] %v876
  %969 = vst [vmem:[%s3 + $0xb0] sm:$0xff] %v877
  %970 = vst [vmem:[%s3 + $0xb8] sm:$0xff] %v878
  %971 = vst [vmem:[%s3 + $0xc0] sm:$0xff] %v879
  %972 = vst [vmem:[%s3 + $0xc8] sm:$0xff] %v880
  %973 = vst [vmem:[%s3 + $0xd0] sm:$0xff] %v881
  %974 = vst [vmem:[%s3 + $0xd8] sm:$0xff] %v882
  %975 = vst [vmem:[%s3 + $0xe0] sm:$0xff] %v883
  %976 = vst [vmem:[%s3 + $0xe8] sm:$0xff] %v884
  %977 = vst [vmem:[%s3 + $0xf0] sm:$0xff] %v885
  %978 = vst [vmem:[%s3 + $0xf8] sm:$0xff] %v886
  %979 = vst [vmem:[%s3 + $0x100] sm:$0xff] %v887
  %980 = vst [vmem:[%s3 + $0x108] sm:$0xff] %v888
  %981 = vst [vmem:[%s3 + $0x110] sm:$0xff] %v889
  %982 = vst [vmem:[%s3 + $0x118] sm:$0xff] %v890
  %983 = vst [vmem:[%s3 + $0x120] sm:$0xff] %v891
  %984 = vst [vmem:[%s3 + $0x128] sm:$0xff] %v892
  %985 = vst [vmem:[%s3 + $0x130] sm:$0xff] %v893
  %986 = vst [vmem:[%s3 + $0x138] sm:$0xff] %v894
  %987 = vst [vmem:[%s3 + $0x140] sm:$0xff] %v895
  %988 = vst [vmem:[%s3 + $0x148] sm:$0xff] %v896
  %989 = vst [vmem:[%s3 + $0x150] sm:$0xff] %v897
  %990 = vst [vmem:[%s3 + $0x158] sm:$0xff] %v898
  %991 = vst [vmem:[%s3 + $0x160] sm:$0xff] %v899
  %992 = vst [vmem:[%s3 + $0x168] sm:$0xff] %v900
  %993 = vst [vmem:[%s3 + $0x170] sm:$0xff] %v901
  %994 = vst [vmem:[%s3 + $0x178] sm:$0xff] %v902
  %995 = vst [vmem:[%s3 + $0x180] sm:$0xff] %v903
  %996 = vst [vmem:[%s3 + $0x188] sm:$0xff] %v904
  %997 = vst [vmem:[%s3 + $0x190] sm:$0xff] %v905
  %998 = vst [vmem:[%s3 + $0x198] sm:$0xff] %v906
  %999 = vst [vmem:[%s3 + $0x1a0] sm:$0xff] %v907
  %1000 = vst [vmem:[%s3 + $0x1a8] sm:$0xff] %v908
  %1001 = vst [vmem:[%s3 + $0x1b0] sm:$0xff] %v909
  %1002 = vst [vmem:[%s3 + $0x1b8] sm:$0xff] %v910
  %1003 = vst [vmem:[%s3 + $0x1c0] sm:$0xff] %v911
  %1004 = vst [vmem:[%s3 + $0x1c8] sm:$0xff] %v912
  %1005 = vst [vmem:[%s3 + $0x1d0] sm:$0xff] %v913
  %1006 = vst [vmem:[%s3 + $0x1d8] sm:$0xff] %v914
  %1007 = vst [vmem:[%s3 + $0x1e0] sm:$0xff] %v915
  %1008 = vst [vmem:[%s3 + $0x1e8] sm:$0xff] %v916
  %1009 = vst [vmem:[%s3 + $0x1f0] sm:$0xff] %v917
  %1010 = vst [vmem:[%s3 + $0x1f8] sm:$0xff] %v918
  %1011 = vst [vmem:[%s3 + $0x200] sm:$0xff] %v919
  %1012 = vst [vmem:[%s3 + $0x208] sm:$0xff] %v920
  %1013 = vst [vmem:[%s3 + $0x210] sm:$0xff] %v921
  %1014 = vst [vmem:[%s3 + $0x218] sm:$0xff] %v922
  %1015 = vst [vmem:[%s3 + $0x220] sm:$0xff] %v923
  %1016 = vst [vmem:[%s3 + $0x228] sm:$0xff] %v924
  %1017 = vst [vmem:[%s3 + $0x230] sm:$0xff] %v925
  %1018 = vst [vmem:[%s3 + $0x238] sm:$0xff] %v926
  %1019 = vst [vmem:[%s3 + $0x240] sm:$0xff] %v927
  %1020 = vst [vmem:[%s3 + $0x248] sm:$0xff] %v928
  %1021 = vst [vmem:[%s3 + $0x250] sm:$0xff] %v929
  %1022 = vst [vmem:[%s3 + $0x258] sm:$0xff] %v930
  %1023 = vst [vmem:[%s3 + $0x260] sm:$0xff] %v931
  %1024 = vst [vmem:[%s3 + $0x268] sm:$0xff] %v932
  %1025 = vst [vmem:[%s3 + $0x270] sm:$0xff] %v933
  %1026 = vst [vmem:[%s3 + $0x278] sm:$0xff] %v934
  %1027 = vst [vmem:[%s3 + $0x280] sm:$0xff] %v935
  %1028 = vst [vmem:[%s3 + $0x288] sm:$0xff] %v936
  %1029 = vst [vmem:[%s3 + $0x290] sm:$0xff] %v937
  %1030 = vst [vmem:[%s3 + $0x298] sm:$0xff] %v938
  %1031 = vst [vmem:[%s3 + $0x2a0] sm:$0xff] %v939
  %1032 = vst [vmem:[%s3 + $0x2a8] sm:$0xff] %v940
  %1033 = vst [vmem:[%s3 + $0x2b0] sm:$0xff] %v941
  %1034 = vst [vmem:[%s3 + $0x2b8] sm:$0xff] %v942
  %1035 = vst [vmem:[%s3 + $0x2c0] sm:$0xff] %v943
  %1036 = vst [vmem:[%s3 + $0x2c8] sm:$0xff] %v944
  %1037 = vst [vmem:[%s3 + $0x2d0] sm:$0xff] %v945
  %1038 = vst [vmem:[%s3 + $0x2d8] sm:$0xff] %v946
  // Predicated region
  $region14: #{generator_forward.9} parent=0 // pred_check
    _
  $region15: #{generator_forward.9} parent=0 // pred_check_branch
    %1040 = sbr.rel (0) target = $region17
  $region16: #{generator_forward.9} parent=0 // pred_region
    _
  $region17: #{generator_forward.9} parent=0 // pred_fallthru
    _
  // Predicated region
  $region18: #{generator_forward.9} parent=0 // pred_check
    _
  $region19: #{generator_forward.9} parent=0 // pred_check_branch
    %1042 = sbr.rel (0) target = $region21
  $region20: #{generator_forward.9} parent=0 // pred_region
    _
  $region21: #{generator_forward.9} parent=0 // pred_fallthru
    _

</llo_original>
